<compile_context>
chip_gen: v7x
topology: tpu7x:2x2x1
jax: 0.10.0
libtpu: 0.0.40
codegen_flags: <defaults>
</compile_context>

<pallas_src>
import functools

import jax
import jax.numpy as jnp
from jax.experimental import pallas as pl
from jax.experimental.pallas import tpu as pltpu

LANE = 128  # TPU lane width; n_filters is padded up to a multiple of this


def _resnet1d_kernel(x_ref, w0_ref, w1_ref, w2_ref, vec_ref, o_ref,
                     xe_ref, slab_ref, *, B, L, Cin, Fp, KS0,
                     use_bn_res, compute_dtype):
    M = B * L
    TAIL = xe_ref.shape[0] - M

    # Zero the scratch tail once per grid step: these rows supply the implicit
    # zeros that every layer's boundary-crossing conv window reads.  (Do NOT
    # guard this with pl.when(program_id==0): under v7x megacore sharding the
    # second core never executes step 0 and would see stale scratch.)
    xe_ref[M:, :] = jnp.zeros((TAIL, Fp), xe_ref.dtype)

    # Position of each flattened row within its batch element, for the
    # right-zero-pad mask (== ConstantPad1d((0, l_diff), 0)).  L is static;
    # `% L` folds to a bitwise AND when L is a power of two.
    pos = jax.lax.broadcasted_iota(jnp.int32, (M, 1), 0) % L

    def cast(v):
        return v if v.dtype == compute_dtype else v.astype(compute_dtype)

    # ---- layer 0: im2col slab -> ONE (M, KS0*Cin) x (KS0*Cin, Fp) MXU dot ----
    # (KS0 separate K=Cin dots would each cost a full MXU weight-load+pass; one
    #  K=KS0*Cin dot lets the MXU accumulate internally.)
    xe_ref[:M, :Cin] = x_ref[...].reshape(M, Cin).astype(xe_ref.dtype)
    for k in range(KS0):                                    # static, unrolled
        slab_ref[:, k * Cin:(k + 1) * Cin] = cast(xe_ref[k:k + M, :Cin])
    acc = jnp.dot(slab_ref[...], cast(w0_ref[...]),
                  preferred_element_type=jnp.float32)
    y = jnp.where(pos < (L - KS0 + 1),
                  jnp.maximum(acc + vec_ref[0:1, :], 0.0), 0.0)
    # Stage for layer 1; also caps vreg pressure (only `acc`/`y` stay live).
    xe_ref[:M, :] = y.astype(xe_ref.dtype)

    # ---- layers 1 & 2: per-tap dots (K = Fp already feeds the MXU well) ----
    def conv_bn_relu_pad(w_ref, bias):
        ks = w_ref.shape[0]
        # Initialize acc from tap 0's dot (no zeros materialization + add).
        acc = jnp.dot(cast(xe_ref[0:M, :]), cast(w_ref[0]),
                      preferred_element_type=jnp.float32)
        for k in range(1, ks):                              # static, unrolled
            acc += jnp.dot(cast(xe_ref[k:k + M, :]), cast(w_ref[k]),
                           preferred_element_type=jnp.float32)
        y = jnp.maximum(acc + bias, 0.0)                    # folded bias+BN, ReLU
        return jnp.where(pos < (L - ks + 1), y, 0.0)        # right zero-pad to L

    xe_ref[:M, :] = conv_bn_relu_pad(w1_ref, vec_ref[1:2, :]).astype(xe_ref.dtype)
    out = conv_bn_relu_pad(w2_ref, vec_ref[2:3, :])         # last layer: f32 value

    if use_bn_res:
        # Reference bug reproduced: res = bn_res(out) (expand conv is dead code).
        # relu(out + bn_res(out)) is folded host-side to relu(out*(1+s) + t)
        # (vec rows 3/4) -> single FMA + ReLU epilogue, no extra live value.
        final = jnp.maximum(out * vec_ref[3:4, :] + vec_ref[4:5, :], 0.0)
    else:
        # Only reachable when in_channels == n_filters (shape-valid residual).
        res = x_ref[...].reshape(M, Cin).astype(jnp.float32)
        final = jnp.maximum(out + jnp.pad(res, ((0, 0), (0, Fp - Cin))), 0.0)
    o_ref[...] = final.reshape(B, L, Fp)


def _pick_batch_block(N, L, *, m_target=256, m_cap=512):
    """Rows-per-step heuristic: feed the MXU first, then the cores.

    - One big step by default (v5e/v6e have a single TensorCore; the grid is a
      serial loop there, so extra steps only add ~0.35us each and shrink M).
    - Split into 2+ parallel steps (v7x: both TensorCores) only while each step
      still has >= m_target rows for the 128/256-row MXU passes.
    - Cap rows/step (~m_cap) so the f32 accumulator / epilogue values do not
      blow the 64-entry vreg file (layer outputs are already staged through the
      VMEM scratch, so the cap only has to cover `acc` + the epilogue).
    """
    B = N
    if N % 2 == 0 and (N // 2) * L >= m_target:
        B = N // 2
    while B % 2 == 0 and B * L > m_cap and (B // 2) * L >= m_target:
        B //= 2
    return B


def resnet1d_block(x_nlc, kernel_params, *, in_channels, n_filters,
                   batch_block=None, compute_dtype=jnp.bfloat16,
                   staging_dtype=jnp.float32, trim_channels=False):
    N, L, Cin = x_nlc.shape
    assert Cin == in_channels
    w0, w1, w2, vecs = kernel_params
    Fp = vecs.shape[1]
    KS0 = w0.shape[0] // in_channels
    use_bn_res = (in_channels != n_filters)

    if batch_block is None:
        B = _pick_batch_block(N, L)
    else:
        B = min(batch_block, N)
        while N % B:
            B -= 1
    M = B * L

    full = lambda a: pl.BlockSpec(a.shape, lambda n: (0,) * a.ndim)
    kernel = functools.partial(
        _resnet1d_kernel, B=B, L=L, Cin=Cin, Fp=Fp, KS0=KS0,
        use_bn_res=use_bn_res, compute_dtype=compute_dtype)

    # NOTE: weights/vecs have constant index_maps; single-buffering them
    # (pipeline_mode=pl.Buffered(1)) would reclaim ~0.5 MiB VMEM on v7x — left
    # at the default here since total VMEM/step is < 1 MiB at these sizes.
    out = pl.pallas_call(
        kernel,
        out_shape=jax.ShapeDtypeStruct((N, L, Fp), jnp.float32),
        grid=(N // B,),
        in_specs=[pl.BlockSpec((B, L, Cin), lambda n: (n, 0, 0)),
                  full(w0), full(w1), full(w2), full(vecs)],
        out_specs=pl.BlockSpec((B, L, Fp), lambda n: (n, 0, 0)),
        scratch_shapes=[pltpu.VMEM((M + 8, Fp), staging_dtype),       # zero-tailed staging
                        pltpu.VMEM((M, KS0 * Cin), compute_dtype)],   # layer-0 im2col slab
        compiler_params=pltpu.CompilerParams(
            dimension_semantics=("parallel",)),
    )(x_nlc, w0, w1, w2, vecs)

    if trim_channels:
        # Extra full-output HBM round trip; prefer consuming the Fp-padded layout.
        return out[:, :, :n_filters]
    return out


def _fold_bn(gamma, beta, mean, var, eps=1e-5):
    scale = gamma / jnp.sqrt(var + eps)
    bias = beta - mean * scale
    return scale, bias


def make_params(key, in_channels, n_filters, *, compute_dtype=jnp.bfloat16):
    """Builds folded/packed kernel params plus a plain set for the reference."""
    F = n_filters
    Fp = ((F + LANE - 1) // LANE) * LANE
    ks_list = [8, 5, 3]
    cins = [in_channels, F, F]
    cins_pad = [in_channels, Fp, Fp]
    keys = jax.random.split(key, 32)
    ki = iter(range(32))

    kernel_ws, biases, ref_layers = [], [], []
    for li, (ks, cin, cin_p) in enumerate(zip(ks_list, cins, cins_pad)):
        w = jax.random.normal(keys[next(ki)], (F, cin, ks), jnp.float32) * 0.1
        b = jax.random.normal(keys[next(ki)], (F,), jnp.float32) * 0.1
        gamma = 1.0 + 0.1 * jax.random.normal(keys[next(ki)], (F,), jnp.float32)
        beta = 0.1 * jax.random.normal(keys[next(ki)], (F,), jnp.float32)
        mean = 0.1 * jax.random.normal(keys[next(ki)], (F,), jnp.float32)
        var = 1.0 + 0.1 * jax.random.uniform(keys[next(ki)], (F,), jnp.float32)
        s, t = _fold_bn(gamma, beta, mean, var)
        # Fold conv bias + eval-mode BN:  (conv + b)*s + t == conv(w*s) + (b*s + t)
        wf = (w * s[:, None, None]).astype(compute_dtype)    # (F, cin, ks) OIH
        bf = b * s + t                                       # (F,) f32
        ref_layers.append((wf, bf))
        # Kernel layout (ks, cin_pad, Fp), zero-padded for lane-dense 128 outputs.
        wk = jnp.transpose(wf, (2, 1, 0))                    # (ks, cin, F)
        wk = jnp.pad(wk, ((0, 0), (0, cin_p - cin), (0, Fp - F)))
        if li == 0:
            wk = wk.reshape(ks * cin_p, Fp)                  # im2col weight (K, Fp)
        kernel_ws.append(wk)
        biases.append(jnp.pad(bf, (0, Fp - F)))

    # bn_res (applied to `out` per the reference forward; fresh running stats).
    gamma = 1.0 + 0.1 * jax.random.normal(keys[next(ki)], (F,), jnp.float32)
    beta = 0.1 * jax.random.normal(keys[next(ki)], (F,), jnp.float32)
    sr, tr = _fold_bn(gamma, beta, jnp.zeros((F,)), jnp.ones((F,)))
    # NOTE: expand_res_channels conv weights are dead code in the reference
    # forward (its output is overwritten by bn_res(out)), so they are not built.

    # Pack all small per-channel vectors into one lane-dense (8, Fp) operand.
    # relu(out + bn_res(out)) == relu(out*(1+s) + t): fold the "+1" host-side.
    vecs = jnp.zeros((8, Fp), jnp.float32)
    vecs = vecs.at[0].set(biases[0]).at[1].set(biases[1]).at[2].set(biases[2])
    vecs = vecs.at[3, :F].set(1.0 + sr).at[4, :F].set(tr)

    kernel_params = (kernel_ws[0], kernel_ws[1], kernel_ws[2], vecs)
    ref_params = (ref_layers, sr, tr)
    return kernel_params, ref_params


def reference_forward(x_ncl, ref_params, *, in_channels, n_filters,
                      compute_dtype=jnp.bfloat16):
    """Pure-JAX mirror of the PyTorch forward (eval-mode BN folded; same bf16
    matmul operands as the kernel so the comparison is tight)."""
    layers, sr, tr = ref_params
    L = x_ncl.shape[2]
    out = x_ncl
    for wf, bf in layers:
        y = jax.lax.conv_general_dilated(
            out.astype(compute_dtype), wf, (1,), 'VALID',
            dimension_numbers=('NCH', 'OIH', 'NCH'),
            preferred_element_type=jnp.float32)
        y = jnp.maximum(y + bf.reshape(1, -1, 1), 0.0)
        out = jnp.pad(y, ((0, 0), (0, 0), (0, L - y.shape[2])))
    if in_channels != n_filters:
        res = out * sr.reshape(1, -1, 1) + tr.reshape(1, -1, 1)
    else:
        res = x_ncl
    # dropout(out) result is discarded in the reference forward -> no-op.
    return jnp.maximum(out + res, 0.0)


if __name__ == "__main__":
    IN_CHANNELS, N_FILTERS = 4, 64
    N, L = 8, 16

    key = jax.random.PRNGKey(0)
    kx, kp = jax.random.split(key)
    x_ncl = jax.random.normal(kx, (N, IN_CHANNELS, L), jnp.float32)   # PyTorch NCL
    kernel_params, ref_params = make_params(kp, IN_CHANNELS, N_FILTERS)

    x_nlc = jnp.transpose(x_ncl, (0, 2, 1))                           # -> NLC
    out_nlf = resnet1d_block(x_nlc, kernel_params,
                             in_channels=IN_CHANNELS, n_filters=N_FILTERS)
    out_nlf = jax.block_until_ready(out_nlf)

    ref_ncl = reference_forward(x_ncl, ref_params,
                                in_channels=IN_CHANNELS, n_filters=N_FILTERS)
    # Test-only view: padded channels must be exactly zero; then drop the lane
    # padding and go back to NCL for the comparison against the reference.
    assert bool(jnp.all(out_nlf[:, :, N_FILTERS:] == 0.0))
    out_ncl = jnp.transpose(out_nlf[:, :, :N_FILTERS], (0, 2, 1))
    assert out_ncl.shape == (N, N_FILTERS, L)
    assert jnp.allclose(out_ncl, ref_ncl, atol=2e-3, rtol=2e-3), (
        float(jnp.max(jnp.abs(out_ncl - ref_ncl))))

    print("KERNEL_OK")
</pallas_src>

<mosaic_0001>
module attributes {stable_mosaic.version = 11 : i64} {
  func.func @_resnet1d_kernel(%arg0: i32, %arg1: memref<8x16x4xf32, #tpu.memory_space<vmem>>, %arg2: memref<32x128xbf16, #tpu.memory_space<vmem>>, %arg3: memref<5x128x128xbf16, #tpu.memory_space<vmem>>, %arg4: memref<3x128x128xbf16, #tpu.memory_space<vmem>>, %arg5: memref<8x128xf32, #tpu.memory_space<vmem>>, %arg6: memref<8x16x128xf32, #tpu.memory_space<vmem>>, %arg7: memref<136x128xf32, #tpu.memory_space<vmem>>, %arg8: memref<128x32xbf16, #tpu.memory_space<vmem>>) attributes {dimension_semantics = [#tpu.dimension_semantics<parallel>], iteration_bounds = array<i64: 1>, scalar_prefetch = 0 : i64, scratch_operands = 2 : i64, tpu.core_type = #tpu.core_type<tc>, window_params = [{transform_indices = @transform_0, window_bounds = array<i64: 8, 16, 4>}, {pipeline_mode = #tpu.pipeline_mode<synchronous>, transform_indices = @transform_1, window_bounds = array<i64: 32, 128>}, {pipeline_mode = #tpu.pipeline_mode<synchronous>, transform_indices = @transform_2, window_bounds = array<i64: 5, 128, 128>}, {pipeline_mode = #tpu.pipeline_mode<synchronous>, transform_indices = @transform_3, window_bounds = array<i64: 3, 128, 128>}, {pipeline_mode = #tpu.pipeline_mode<synchronous>, transform_indices = @transform_4, window_bounds = array<i64: 8, 128>}, {transform_indices = @transform_5, window_bounds = array<i64: 8, 16, 128>}]} {
    %cst = arith.constant 0.000000e+00 : f32
    %0 = vector.broadcast %cst : f32 to vector<8x128xf32>
    %c128 = arith.constant 128 : index
    %c0 = arith.constant 0 : index
    %1 = vector.load %arg7[%c128, %c0] : memref<136x128xf32, #tpu.memory_space<vmem>>, vector<8x128xf32>
    tpu.vector_store %arg7[%c128, %c0], %0 {strides = array<i32>} : memref<136x128xf32, #tpu.memory_space<vmem>>, vector<8x128xf32>,
    %2 = tpu.iota {dimensions = array<i32: 0>} : vector<128x1xi32>
    %c16_i32 = arith.constant 16 : i32
    %c0_i32 = arith.constant 0 : i32
    %3 = arith.cmpi eq, %c16_i32, %c0_i32 : i32
    %c1_i32 = arith.constant 1 : i32
    %4 = arith.select %3, %c1_i32, %c16_i32 : i32
    %5 = vector.broadcast %4 : i32 to vector<128x1xi32>
    %6 = arith.remsi %2, %5 : vector<128x1xi32>
    %c0_i32_0 = arith.constant 0 : i32
    %7 = vector.broadcast %c0_i32_0 : i32 to vector<128x1xi32>
    %8 = arith.cmpi ne, %6, %7 : vector<128x1xi32>
    %c0_i32_1 = arith.constant 0 : i32
    %9 = vector.broadcast %c0_i32_1 : i32 to vector<128x1xi32>
    %10 = arith.cmpi slt, %6, %9 : vector<128x1xi32>
    %c0_i32_2 = arith.constant 0 : i32
    %11 = arith.cmpi slt, %4, %c0_i32_2 : i32
    %12 = vector.broadcast %11 : i1 to vector<128x1xi1>
    %13 = vector.broadcast %12 : vector<128x1xi1> to vector<128x1xi1>
    %14 = arith.xori %10, %13 : vector<128x1xi1>
    %15 = arith.andi %14, %8 : vector<128x1xi1>
    %16 = vector.broadcast %4 : i32 to vector<128x1xi32>
    %17 = arith.addi %6, %16 : vector<128x1xi32>
    %18 = arith.select %15, %17, %6 : vector<128x1xi1>, vector<128x1xi32>
    %c0_3 = arith.constant 0 : index
    %c0_4 = arith.constant 0 : index
    %c0_5 = arith.constant 0 : index
    %19 = vector.load %arg1[%c0_3, %c0_4, %c0_5] : memref<8x16x4xf32, #tpu.memory_space<vmem>>, vector<8x16x4xf32>
    %20 = vector.shape_cast %19 : vector<8x16x4xf32> to vector<128x4xf32>
    %c0_6 = arith.constant 0 : index
    %c0_7 = arith.constant 0 : index
    %21 = vector.load %arg7[%c0_6, %c0_7] : memref<136x128xf32, #tpu.memory_space<vmem>>, vector<128x4xf32>
    tpu.vector_store %arg7[%c0_6, %c0_7], %20 {strides = array<i32>} : memref<136x128xf32, #tpu.memory_space<vmem>>, vector<128x4xf32>,
    %c0_8 = arith.constant 0 : index
    %c0_9 = arith.constant 0 : index
    %22 = vector.load %arg7[%c0_8, %c0_9] : memref<136x128xf32, #tpu.memory_space<vmem>>, vector<128x4xf32>
    %23 = arith.truncf %22 : vector<128x4xf32> to vector<128x4xbf16>
    %c0_10 = arith.constant 0 : index
    %c0_11 = arith.constant 0 : index
    %24 = vector.load %arg8[%c0_10, %c0_11] : memref<128x32xbf16, #tpu.memory_space<vmem>>, vector<128x4xbf16>
    tpu.vector_store %arg8[%c0_10, %c0_11], %23 {strides = array<i32>} : memref<128x32xbf16, #tpu.memory_space<vmem>>, vector<128x4xbf16>,
    %c1 = arith.constant 1 : index
    %c0_12 = arith.constant 0 : index
    %25 = vector.load %arg7[%c1, %c0_12] : memref<136x128xf32, #tpu.memory_space<vmem>>, vector<128x4xf32>
    %26 = arith.truncf %25 : vector<128x4xf32> to vector<128x4xbf16>
    %c0_13 = arith.constant 0 : index
    %c4 = arith.constant 4 : index
    %27 = vector.load %arg8[%c0_13, %c4] : memref<128x32xbf16, #tpu.memory_space<vmem>>, vector<128x4xbf16>
    tpu.vector_store %arg8[%c0_13, %c4], %26 {strides = array<i32>} : memref<128x32xbf16, #tpu.memory_space<vmem>>, vector<128x4xbf16>,
    %c2 = arith.constant 2 : index
    %c0_14 = arith.constant 0 : index
    %28 = vector.load %arg7[%c2, %c0_14] : memref<136x128xf32, #tpu.memory_space<vmem>>, vector<128x4xf32>
    %29 = arith.truncf %28 : vector<128x4xf32> to vector<128x4xbf16>
    %c0_15 = arith.constant 0 : index
    %c8 = arith.constant 8 : index
    %30 = vector.load %arg8[%c0_15, %c8] : memref<128x32xbf16, #tpu.memory_space<vmem>>, vector<128x4xbf16>
    tpu.vector_store %arg8[%c0_15, %c8], %29 {strides = array<i32>} : memref<128x32xbf16, #tpu.memory_space<vmem>>, vector<128x4xbf16>,
    %c3 = arith.constant 3 : index
    %c0_16 = arith.constant 0 : index
    %31 = vector.load %arg7[%c3, %c0_16] : memref<136x128xf32, #tpu.memory_space<vmem>>, vector<128x4xf32>
    %32 = arith.truncf %31 : vector<128x4xf32> to vector<128x4xbf16>
    %c0_17 = arith.constant 0 : index
    %c12 = arith.constant 12 : index
    %33 = vector.load %arg8[%c0_17, %c12] : memref<128x32xbf16, #tpu.memory_space<vmem>>, vector<128x4xbf16>
    tpu.vector_store %arg8[%c0_17, %c12], %32 {strides = array<i32>} : memref<128x32xbf16, #tpu.memory_space<vmem>>, vector<128x4xbf16>,
    %c4_18 = arith.constant 4 : index
    %c0_19 = arith.constant 0 : index
    %34 = vector.load %arg7[%c4_18, %c0_19] : memref<136x128xf32, #tpu.memory_space<vmem>>, vector<128x4xf32>
    %35 = arith.truncf %34 : vector<128x4xf32> to vector<128x4xbf16>
    %c0_20 = arith.constant 0 : index
    %c16 = arith.constant 16 : index
    %36 = vector.load %arg8[%c0_20, %c16] : memref<128x32xbf16, #tpu.memory_space<vmem>>, vector<128x4xbf16>
    tpu.vector_store %arg8[%c0_20, %c16], %35 {strides = array<i32>} : memref<128x32xbf16, #tpu.memory_space<vmem>>, vector<128x4xbf16>,
    %c5 = arith.constant 5 : index
    %c0_21 = arith.constant 0 : index
    %37 = vector.load %arg7[%c5, %c0_21] : memref<136x128xf32, #tpu.memory_space<vmem>>, vector<128x4xf32>
    %38 = arith.truncf %37 : vector<128x4xf32> to vector<128x4xbf16>
    %c0_22 = arith.constant 0 : index
    %c20 = arith.constant 20 : index
    %39 = vector.load %arg8[%c0_22, %c20] : memref<128x32xbf16, #tpu.memory_space<vmem>>, vector<128x4xbf16>
    tpu.vector_store %arg8[%c0_22, %c20], %38 {strides = array<i32>} : memref<128x32xbf16, #tpu.memory_space<vmem>>, vector<128x4xbf16>,
    %c6 = arith.constant 6 : index
    %c0_23 = arith.constant 0 : index
    %40 = vector.load %arg7[%c6, %c0_23] : memref<136x128xf32, #tpu.memory_space<vmem>>, vector<128x4xf32>
    %41 = arith.truncf %40 : vector<128x4xf32> to vector<128x4xbf16>
    %c0_24 = arith.constant 0 : index
    %c24 = arith.constant 24 : index
    %42 = vector.load %arg8[%c0_24, %c24] : memref<128x32xbf16, #tpu.memory_space<vmem>>, vector<128x4xbf16>
    tpu.vector_store %arg8[%c0_24, %c24], %41 {strides = array<i32>} : memref<128x32xbf16, #tpu.memory_space<vmem>>, vector<128x4xbf16>,
    %c7 = arith.constant 7 : index
    %c0_25 = arith.constant 0 : index
    %43 = vector.load %arg7[%c7, %c0_25] : memref<136x128xf32, #tpu.memory_space<vmem>>, vector<128x4xf32>
    %44 = arith.truncf %43 : vector<128x4xf32> to vector<128x4xbf16>
    %c0_26 = arith.constant 0 : index
    %c28 = arith.constant 28 : index
    %45 = vector.load %arg8[%c0_26, %c28] : memref<128x32xbf16, #tpu.memory_space<vmem>>, vector<128x4xbf16>
    tpu.vector_store %arg8[%c0_26, %c28], %44 {strides = array<i32>} : memref<128x32xbf16, #tpu.memory_space<vmem>>, vector<128x4xbf16>,
    %c0_27 = arith.constant 0 : index
    %c0_28 = arith.constant 0 : index
    %46 = vector.load %arg8[%c0_27, %c0_28] : memref<128x32xbf16, #tpu.memory_space<vmem>>, vector<128x32xbf16>
    %c0_29 = arith.constant 0 : index
    %c0_30 = arith.constant 0 : index
    %47 = vector.load %arg2[%c0_29, %c0_30] : memref<32x128xbf16, #tpu.memory_space<vmem>>, vector<32x128xbf16>
    %cst_31 = arith.constant dense<0.000000e+00> : vector<128x128xf32>
    %48 = tpu.matmul %46, %47, %cst_31 {dimension_numbers = #tpu.dot_dimension_numbers<[1], [0], [0], [1], [0, 0, 1, 1], [], []>} : vector<128x32xbf16>, vector<32x128xbf16>, vector<128x128xf32> -> vector<128x128xf32>
    %c9_i32 = arith.constant 9 : i32
    %49 = vector.broadcast %c9_i32 : i32 to vector<128x1xi32>
    %50 = arith.cmpi slt, %18, %49 : vector<128x1xi32>
    %c0_32 = arith.constant 0 : index
    %c0_33 = arith.constant 0 : index
    %51 = vector.load %arg5[%c0_32, %c0_33] : memref<8x128xf32, #tpu.memory_space<vmem>>, vector<1x128xf32>
    %52 = vector.broadcast %51 : vector<1x128xf32> to vector<128x128xf32>
    %53 = arith.addf %48, %52 : vector<128x128xf32>
    %cst_34 = arith.constant 0.000000e+00 : f32
    %54 = vector.broadcast %cst_34 : f32 to vector<128x128xf32>
    %55 = arith.maximumf %53, %54 : vector<128x128xf32>
    %cst_35 = arith.constant 0.000000e+00 : f32
    %56 = vector.shape_cast %50 : vector<128x1xi1> to vector<128x1xi1>
    %57 = vector.broadcast %56 : vector<128x1xi1> to vector<128x128xi1>
    %58 = vector.broadcast %cst_35 : f32 to vector<128x128xf32>
    %59 = arith.select %57, %55, %58 : vector<128x128xi1>, vector<128x128xf32>
    %c0_36 = arith.constant 0 : index
    %c0_37 = arith.constant 0 : index
    %60 = vector.load %arg7[%c0_36, %c0_37] : memref<136x128xf32, #tpu.memory_space<vmem>>, vector<128x128xf32>
    tpu.vector_store %arg7[%c0_36, %c0_37], %59 {strides = array<i32>} : memref<136x128xf32, #tpu.memory_space<vmem>>, vector<128x128xf32>,
    %c1_38 = arith.constant 1 : index
    %c0_39 = arith.constant 0 : index
    %61 = vector.load %arg5[%c1_38, %c0_39] : memref<8x128xf32, #tpu.memory_space<vmem>>, vector<1x128xf32>
    %c0_40 = arith.constant 0 : index
    %c0_41 = arith.constant 0 : index
    %62 = vector.load %arg7[%c0_40, %c0_41] : memref<136x128xf32, #tpu.memory_space<vmem>>, vector<128x128xf32>
    %63 = arith.truncf %62 : vector<128x128xf32> to vector<128x128xbf16>
    %c0_42 = arith.constant 0 : index
    %c0_43 = arith.constant 0 : index
    %c0_44 = arith.constant 0 : index
    %64 = vector.load %arg3[%c0_42, %c0_43, %c0_44] : memref<5x128x128xbf16, #tpu.memory_space<vmem>>, vector<1x128x128xbf16>
    %65 = vector.shape_cast %64 : vector<1x128x128xbf16> to vector<128x128xbf16>
    %cst_45 = arith.constant dense<0.000000e+00> : vector<128x128xf32>
    %66 = tpu.matmul %63, %65, %cst_45 {dimension_numbers = #tpu.dot_dimension_numbers<[1], [0], [0], [1], [0, 0, 1, 1], [], []>} : vector<128x128xbf16>, vector<128x128xbf16>, vector<128x128xf32> -> vector<128x128xf32>
    %c1_46 = arith.constant 1 : index
    %c0_47 = arith.constant 0 : index
    %67 = vector.load %arg7[%c1_46, %c0_47] : memref<136x128xf32, #tpu.memory_space<vmem>>, vector<128x128xf32>
    %68 = arith.truncf %67 : vector<128x128xf32> to vector<128x128xbf16>
    %c1_48 = arith.constant 1 : index
    %c0_49 = arith.constant 0 : index
    %c0_50 = arith.constant 0 : index
    %69 = vector.load %arg3[%c1_48, %c0_49, %c0_50] : memref<5x128x128xbf16, #tpu.memory_space<vmem>>, vector<1x128x128xbf16>
    %70 = vector.shape_cast %69 : vector<1x128x128xbf16> to vector<128x128xbf16>
    %cst_51 = arith.constant dense<0.000000e+00> : vector<128x128xf32>
    %71 = tpu.matmul %68, %70, %cst_51 {dimension_numbers = #tpu.dot_dimension_numbers<[1], [0], [0], [1], [0, 0, 1, 1], [], []>} : vector<128x128xbf16>, vector<128x128xbf16>, vector<128x128xf32> -> vector<128x128xf32>
    %72 = arith.addf %66, %71 : vector<128x128xf32>
    %c2_52 = arith.constant 2 : index
    %c0_53 = arith.constant 0 : index
    %73 = vector.load %arg7[%c2_52, %c0_53] : memref<136x128xf32, #tpu.memory_space<vmem>>, vector<128x128xf32>
    %74 = arith.truncf %73 : vector<128x128xf32> to vector<128x128xbf16>
    %c2_54 = arith.constant 2 : index
    %c0_55 = arith.constant 0 : index
    %c0_56 = arith.constant 0 : index
    %75 = vector.load %arg3[%c2_54, %c0_55, %c0_56] : memref<5x128x128xbf16, #tpu.memory_space<vmem>>, vector<1x128x128xbf16>
    %76 = vector.shape_cast %75 : vector<1x128x128xbf16> to vector<128x128xbf16>
    %cst_57 = arith.constant dense<0.000000e+00> : vector<128x128xf32>
    %77 = tpu.matmul %74, %76, %cst_57 {dimension_numbers = #tpu.dot_dimension_numbers<[1], [0], [0], [1], [0, 0, 1, 1], [], []>} : vector<128x128xbf16>, vector<128x128xbf16>, vector<128x128xf32> -> vector<128x128xf32>
    %78 = arith.addf %72, %77 : vector<128x128xf32>
    %c3_58 = arith.constant 3 : index
    %c0_59 = arith.constant 0 : index
    %79 = vector.load %arg7[%c3_58, %c0_59] : memref<136x128xf32, #tpu.memory_space<vmem>>, vector<128x128xf32>
    %80 = arith.truncf %79 : vector<128x128xf32> to vector<128x128xbf16>
    %c3_60 = arith.constant 3 : index
    %c0_61 = arith.constant 0 : index
    %c0_62 = arith.constant 0 : index
    %81 = vector.load %arg3[%c3_60, %c0_61, %c0_62] : memref<5x128x128xbf16, #tpu.memory_space<vmem>>, vector<1x128x128xbf16>
    %82 = vector.shape_cast %81 : vector<1x128x128xbf16> to vector<128x128xbf16>
    %cst_63 = arith.constant dense<0.000000e+00> : vector<128x128xf32>
    %83 = tpu.matmul %80, %82, %cst_63 {dimension_numbers = #tpu.dot_dimension_numbers<[1], [0], [0], [1], [0, 0, 1, 1], [], []>} : vector<128x128xbf16>, vector<128x128xbf16>, vector<128x128xf32> -> vector<128x128xf32>
    %84 = arith.addf %78, %83 : vector<128x128xf32>
    %c4_64 = arith.constant 4 : index
    %c0_65 = arith.constant 0 : index
    %85 = vector.load %arg7[%c4_64, %c0_65] : memref<136x128xf32, #tpu.memory_space<vmem>>, vector<128x128xf32>
    %86 = arith.truncf %85 : vector<128x128xf32> to vector<128x128xbf16>
    %c4_66 = arith.constant 4 : index
    %c0_67 = arith.constant 0 : index
    %c0_68 = arith.constant 0 : index
    %87 = vector.load %arg3[%c4_66, %c0_67, %c0_68] : memref<5x128x128xbf16, #tpu.memory_space<vmem>>, vector<1x128x128xbf16>
    %88 = vector.shape_cast %87 : vector<1x128x128xbf16> to vector<128x128xbf16>
    %cst_69 = arith.constant dense<0.000000e+00> : vector<128x128xf32>
    %89 = tpu.matmul %86, %88, %cst_69 {dimension_numbers = #tpu.dot_dimension_numbers<[1], [0], [0], [1], [0, 0, 1, 1], [], []>} : vector<128x128xbf16>, vector<128x128xbf16>, vector<128x128xf32> -> vector<128x128xf32>
    %90 = arith.addf %84, %89 : vector<128x128xf32>
    %91 = vector.broadcast %61 : vector<1x128xf32> to vector<128x128xf32>
    %92 = arith.addf %90, %91 : vector<128x128xf32>
    %cst_70 = arith.constant 0.000000e+00 : f32
    %93 = vector.broadcast %cst_70 : f32 to vector<128x128xf32>
    %94 = arith.maximumf %92, %93 : vector<128x128xf32>
    %c12_i32 = arith.constant 12 : i32
    %95 = vector.broadcast %c12_i32 : i32 to vector<128x1xi32>
    %96 = arith.cmpi slt, %18, %95 : vector<128x1xi32>
    %cst_71 = arith.constant 0.000000e+00 : f32
    %97 = vector.shape_cast %96 : vector<128x1xi1> to vector<128x1xi1>
    %98 = vector.broadcast %97 : vector<128x1xi1> to vector<128x128xi1>
    %99 = vector.broadcast %cst_71 : f32 to vector<128x128xf32>
    %100 = arith.select %98, %94, %99 : vector<128x128xi1>, vector<128x128xf32>
    %c0_72 = arith.constant 0 : index
    %c0_73 = arith.constant 0 : index
    %101 = vector.load %arg7[%c0_72, %c0_73] : memref<136x128xf32, #tpu.memory_space<vmem>>, vector<128x128xf32>
    tpu.vector_store %arg7[%c0_72, %c0_73], %100 {strides = array<i32>} : memref<136x128xf32, #tpu.memory_space<vmem>>, vector<128x128xf32>,
    %c2_74 = arith.constant 2 : index
    %c0_75 = arith.constant 0 : index
    %102 = vector.load %arg5[%c2_74, %c0_75] : memref<8x128xf32, #tpu.memory_space<vmem>>, vector<1x128xf32>
    %c0_76 = arith.constant 0 : index
    %c0_77 = arith.constant 0 : index
    %103 = vector.load %arg7[%c0_76, %c0_77] : memref<136x128xf32, #tpu.memory_space<vmem>>, vector<128x128xf32>
    %104 = arith.truncf %103 : vector<128x128xf32> to vector<128x128xbf16>
    %c0_78 = arith.constant 0 : index
    %c0_79 = arith.constant 0 : index
    %c0_80 = arith.constant 0 : index
    %105 = vector.load %arg4[%c0_78, %c0_79, %c0_80] : memref<3x128x128xbf16, #tpu.memory_space<vmem>>, vector<1x128x128xbf16>
    %106 = vector.shape_cast %105 : vector<1x128x128xbf16> to vector<128x128xbf16>
    %cst_81 = arith.constant dense<0.000000e+00> : vector<128x128xf32>
    %107 = tpu.matmul %104, %106, %cst_81 {dimension_numbers = #tpu.dot_dimension_numbers<[1], [0], [0], [1], [0, 0, 1, 1], [], []>} : vector<128x128xbf16>, vector<128x128xbf16>, vector<128x128xf32> -> vector<128x128xf32>
    %c1_82 = arith.constant 1 : index
    %c0_83 = arith.constant 0 : index
    %108 = vector.load %arg7[%c1_82, %c0_83] : memref<136x128xf32, #tpu.memory_space<vmem>>, vector<128x128xf32>
    %109 = arith.truncf %108 : vector<128x128xf32> to vector<128x128xbf16>
    %c1_84 = arith.constant 1 : index
    %c0_85 = arith.constant 0 : index
    %c0_86 = arith.constant 0 : index
    %110 = vector.load %arg4[%c1_84, %c0_85, %c0_86] : memref<3x128x128xbf16, #tpu.memory_space<vmem>>, vector<1x128x128xbf16>
    %111 = vector.shape_cast %110 : vector<1x128x128xbf16> to vector<128x128xbf16>
    %cst_87 = arith.constant dense<0.000000e+00> : vector<128x128xf32>
    %112 = tpu.matmul %109, %111, %cst_87 {dimension_numbers = #tpu.dot_dimension_numbers<[1], [0], [0], [1], [0, 0, 1, 1], [], []>} : vector<128x128xbf16>, vector<128x128xbf16>, vector<128x128xf32> -> vector<128x128xf32>
    %113 = arith.addf %107, %112 : vector<128x128xf32>
    %c2_88 = arith.constant 2 : index
    %c0_89 = arith.constant 0 : index
    %114 = vector.load %arg7[%c2_88, %c0_89] : memref<136x128xf32, #tpu.memory_space<vmem>>, vector<128x128xf32>
    %115 = arith.truncf %114 : vector<128x128xf32> to vector<128x128xbf16>
    %c2_90 = arith.constant 2 : index
    %c0_91 = arith.constant 0 : index
    %c0_92 = arith.constant 0 : index
    %116 = vector.load %arg4[%c2_90, %c0_91, %c0_92] : memref<3x128x128xbf16, #tpu.memory_space<vmem>>, vector<1x128x128xbf16>
    %117 = vector.shape_cast %116 : vector<1x128x128xbf16> to vector<128x128xbf16>
    %cst_93 = arith.constant dense<0.000000e+00> : vector<128x128xf32>
    %118 = tpu.matmul %115, %117, %cst_93 {dimension_numbers = #tpu.dot_dimension_numbers<[1], [0], [0], [1], [0, 0, 1, 1], [], []>} : vector<128x128xbf16>, vector<128x128xbf16>, vector<128x128xf32> -> vector<128x128xf32>
    %119 = arith.addf %113, %118 : vector<128x128xf32>
    %120 = vector.broadcast %102 : vector<1x128xf32> to vector<128x128xf32>
    %121 = arith.addf %119, %120 : vector<128x128xf32>
    %cst_94 = arith.constant 0.000000e+00 : f32
    %122 = vector.broadcast %cst_94 : f32 to vector<128x128xf32>
    %123 = arith.maximumf %121, %122 : vector<128x128xf32>
    %c14_i32 = arith.constant 14 : i32
    %124 = vector.broadcast %c14_i32 : i32 to vector<128x1xi32>
    %125 = arith.cmpi slt, %18, %124 : vector<128x1xi32>
    %cst_95 = arith.constant 0.000000e+00 : f32
    %126 = vector.shape_cast %125 : vector<128x1xi1> to vector<128x1xi1>
    %127 = vector.broadcast %126 : vector<128x1xi1> to vector<128x128xi1>
    %128 = vector.broadcast %cst_95 : f32 to vector<128x128xf32>
    %129 = arith.select %127, %123, %128 : vector<128x128xi1>, vector<128x128xf32>
    %c3_96 = arith.constant 3 : index
    %c0_97 = arith.constant 0 : index
    %130 = vector.load %arg5[%c3_96, %c0_97] : memref<8x128xf32, #tpu.memory_space<vmem>>, vector<1x128xf32>
    %131 = vector.broadcast %130 : vector<1x128xf32> to vector<128x128xf32>
    %132 = arith.mulf %129, %131 : vector<128x128xf32>
    %c4_98 = arith.constant 4 : index
    %c0_99 = arith.constant 0 : index
    %133 = vector.load %arg5[%c4_98, %c0_99] : memref<8x128xf32, #tpu.memory_space<vmem>>, vector<1x128xf32>
    %134 = vector.broadcast %133 : vector<1x128xf32> to vector<128x128xf32>
    %135 = arith.addf %132, %134 : vector<128x128xf32>
    %cst_100 = arith.constant 0.000000e+00 : f32
    %136 = vector.broadcast %cst_100 : f32 to vector<128x128xf32>
    %137 = arith.maximumf %135, %136 : vector<128x128xf32>
    %138 = vector.shape_cast %137 : vector<128x128xf32> to vector<8x16x128xf32>
    %c0_101 = arith.constant 0 : index
    %c0_102 = arith.constant 0 : index
    %c0_103 = arith.constant 0 : index
    %139 = vector.load %arg6[%c0_101, %c0_102, %c0_103] : memref<8x16x128xf32, #tpu.memory_space<vmem>>, vector<8x16x128xf32>
    tpu.vector_store %arg6[%c0_101, %c0_102, %c0_103], %138 {strides = array<i32>} : memref<8x16x128xf32, #tpu.memory_space<vmem>>, vector<8x16x128xf32>,
    return
  }
  func.func @transform_0(%arg0: i32) -> (i32, i32, i32) {
    %c0_i32 = arith.constant 0 : i32
    %c0_i32_0 = arith.constant 0 : i32
    %c0_i32_1 = arith.constant 0 : i32
    return %arg0, %c0_i32, %c0_i32_0 : i32, i32, i32
  }
  func.func @transform_1(%arg0: i32) -> (i32, i32) {
    %c0_i32 = arith.constant 0 : i32
    %c0_i32_0 = arith.constant 0 : i32
    %c0_i32_1 = arith.constant 0 : i32
    return %c0_i32, %c0_i32_0 : i32, i32
  }
  func.func @transform_2(%arg0: i32) -> (i32, i32, i32) {
    %c0_i32 = arith.constant 0 : i32
    %c0_i32_0 = arith.constant 0 : i32
    %c0_i32_1 = arith.constant 0 : i32
    %c0_i32_2 = arith.constant 0 : i32
    return %c0_i32, %c0_i32_0, %c0_i32_1 : i32, i32, i32
  }
  func.func @transform_3(%arg0: i32) -> (i32, i32, i32) {
    %c0_i32 = arith.constant 0 : i32
    %c0_i32_0 = arith.constant 0 : i32
    %c0_i32_1 = arith.constant 0 : i32
    %c0_i32_2 = arith.constant 0 : i32
    return %c0_i32, %c0_i32_0, %c0_i32_1 : i32, i32, i32
  }
  func.func @transform_4(%arg0: i32) -> (i32, i32) {
    %c0_i32 = arith.constant 0 : i32
    %c0_i32_0 = arith.constant 0 : i32
    %c0_i32_1 = arith.constant 0 : i32
    return %c0_i32, %c0_i32_0 : i32, i32
  }
  func.func @transform_5(%arg0: i32) -> (i32, i32, i32) {
    %c0_i32 = arith.constant 0 : i32
    %c0_i32_0 = arith.constant 0 : i32
    %c0_i32_1 = arith.constant 0 : i32
    return %arg0, %c0_i32, %c0_i32_0 : i32, i32, i32
  }
}

</mosaic_0001>

<llo_original>
// kernel: tpu_custom_call.1
$region0: #{tpu_custom_call.1}
  #allocation0 [shape = 'u32[]', space=smem, size = 0x4, offset = 0x4, fixed_abs, tag = 'smem constant byte address 0x4 - core index']
  #allocation1 [shape = 'u32[144,128]{1,0:T(1,128)}', space=vmem, size = 0x12000, scoped, tag = 'internal scratch']
  #allocation2 [shape = 'f32[136,128]{1,0:T(8,128)}', space=vmem, size = 0x11000, scoped, tag = 'scratch operand']
  #allocation3 [shape = 'bf16[128,32]{1,0:T(16,128)(2,1)}', space=vmem, size = 0x8000, scoped, tag = 'scratch operand']
  %s0 = inlined_call_operand.vmem [shape: f32[8,16,4], index: 0, kind: input, shape index: {}]
  %s1 = inlined_call_operand.vmem [shape: bf16[32,128], index: 1, kind: input, shape index: {}]
  %s2 = inlined_call_operand.hbm [shape: bf16[5,128,128], index: 2, kind: input, shape index: {}]
  %s3 = inlined_call_operand.hbm [shape: bf16[3,128,128], index: 3, kind: input, shape index: {}]
  %s4 = inlined_call_operand.vmem [shape: f32[8,128], index: 4, kind: input, shape index: {}]
  %s5 = inlined_call_operand.hbm [shape: f32[8,16,128], index: 5, kind: output, shape index: {}]
  %s6 = sld [smem:[#allocation0]]
  $region38: #{tpu_custom_call.1} parent=0
    _
  %s8 = ssub.s32 1, %s6
  %s9 = scalar_select 0, %s8, %s6
  $region1: #{tpu_custom_call.1} parent=0
    #allocation4 [shape = 'u8[163840]{0}', space=vmem, size = 0x28000, scoped, tag = 'input window, operand 2, single buffered']
    #allocation5 [shape = 's32[1]{0}', space=sflag, size = 0x4, scoped, tag = 'scoped memory for tpu_custom_call.1']
    #allocation6 [shape = 's32[1]{0}', space=sflag, size = 0x4, scoped, tag = 'scoped memory for tpu_custom_call.1']
    #allocation7 [shape = 'u8[98304]{0}', space=vmem, size = 0x18000, scoped, tag = 'input window, operand 3, single buffered']
    #allocation8 [shape = 's32[1]{0}', space=sflag, size = 0x4, scoped, tag = 'scoped memory for tpu_custom_call.1']
    #allocation9 [shape = 'u8[65536]{0}', space=vmem, size = 0x10000, scoped, tag = 'output window, operand 0, single buffered']
    %10 = vsyncpa [#allocation5], 0
    %11 = vsyncpa [#allocation8], 0
    %12 = vsyncpa [#allocation6], 0
    // Predicated region
    $region2: #{tpu_custom_call.1} parent=1 // pred_check
      _
    $region3: #{tpu_custom_call.1} parent=1 // pred_check_branch
      %14 = sbr.rel (0) target = $region5
    $region4: #{tpu_custom_call.1} parent=1 // pred_region
      _
    $region5: #{tpu_custom_call.1} parent=1 // pred_fallthru
      _
    // Predicated region
    $region6: #{tpu_custom_call.1} parent=1 // pred_check
      _
    $region7: #{tpu_custom_call.1} parent=1 // pred_check_branch
      %16 = sbr.rel (0) target = $region9
    $region8: #{tpu_custom_call.1} parent=1 // pred_region
      _
    $region9: #{tpu_custom_call.1} parent=1 // pred_fallthru
      _
    // Predicated region
    $region10: #{tpu_custom_call.1} parent=1 // pred_check
      _
    $region11: #{tpu_custom_call.1} parent=1 // pred_check_branch
      %18 = sbr.rel (0) target = $region13
    $region12: #{tpu_custom_call.1} parent=1 // pred_region
      %s20 = ssub.s32 5120, 5120
      %21 = vsyncadd [#allocation5], %s20
      %s22 = sshll.u32 [#allocation4], 4
      %s23 = int_to_ptr.vmem [resolvable:$true] %s22
      %28 = dma.hbm_to_vmem [thread:$0]  %s2, 5120, %s23, [#allocation5], 64, 64, 4
    $region13: #{tpu_custom_call.1} parent=1 // pred_fallthru
      _
    // Predicated region
    $region14: #{tpu_custom_call.1} parent=1 // pred_check
      _
    $region15: #{tpu_custom_call.1} parent=1 // pred_check_branch
      %30 = sbr.rel (0) target = $region17
    $region16: #{tpu_custom_call.1} parent=1 // pred_region
      %s32 = ssub.s32 3072, 3072
      %33 = vsyncadd [#allocation8], %s32
      %s34 = sshll.u32 [#allocation7], 4
      %s35 = int_to_ptr.vmem [resolvable:$true] %s34
      %40 = dma.hbm_to_vmem [thread:$0]  %s3, 3072, %s35, [#allocation8], 64, 64, 4
    $region17: #{tpu_custom_call.1} parent=1 // pred_fallthru
      _
    // Predicated region
    $region18: #{tpu_custom_call.1} parent=1 // pred_check
      _
    $region19: #{tpu_custom_call.1} parent=1 // pred_check_branch
      %42 = sbr.rel (0) target = $region21
    $region20: #{tpu_custom_call.1} parent=1 // pred_region
      _
    $region21: #{tpu_custom_call.1} parent=1 // pred_fallthru
      _
    // Predicated region
    $region22: #{tpu_custom_call.1} parent=1 // pred_check
      _
    $region23: #{tpu_custom_call.1} parent=1 // pred_check_branch
      %44 = sbr.rel (0) target = $region25
    $region24: #{tpu_custom_call.1} parent=1 // pred_region
      %45 = dma.done [#allocation5], 5120
    $region25: #{tpu_custom_call.1} parent=1 // pred_fallthru
      _
    // Predicated region
    $region26: #{tpu_custom_call.1} parent=1 // pred_check
      _
    $region27: #{tpu_custom_call.1} parent=1 // pred_check_branch
      %47 = sbr.rel (0) target = $region29
    $region28: #{tpu_custom_call.1} parent=1 // pred_region
      %48 = dma.done [#allocation8], 3072
    $region29: #{tpu_custom_call.1} parent=1 // pred_fallthru
      _
    %50 = vst [vmem:[#allocation2 + $0x80] sm:$0xff] 0.0
    %v51 = vlaneseq
    %v52 = vshrl.u32 %v51, 7
    %v53 = vadd.s32 %v52, 8
    %v54 = vadd.s32 %v52, 16
    %v55 = vadd.s32 %v52, 24
    %v56 = vadd.s32 %v52, 32
    %v57 = vadd.s32 %v52, 40
    %v58 = vadd.s32 %v52, 48
    %v59 = vadd.s32 %v52, 56
    %v60 = vadd.s32 %v52, 64
    %v61 = vadd.s32 %v52, 72
    %v62 = vadd.s32 %v52, 80
    %v63 = vadd.s32 %v52, 88
    %v64 = vadd.s32 %v52, 96
    %v65 = vadd.s32 %v52, 104
    %v66 = vadd.s32 %v52, 112
    %v67 = vadd.s32 %v52, 120
    %vm68 = vcmp.lt.s32.totalorder %v52, 0
    %v69 = vsub.s32 0, %v52
    %v70 = vsel %vm68, %v69, %v52
    %v71 = vshrl.u32 %v70, 4
    %v72 = vand.u32 %v70, 15
    %v73 = vsub.s32 0, %v72
    %v74 = vsel %vm68, %v73, %v72
    %vm75 = vcmp.lt.s32.totalorder %v53, 0
    %v76 = vsub.s32 0, %v53
    %v77 = vsel %vm75, %v76, %v53
    %v78 = vshrl.u32 %v77, 4
    %v79 = vand.u32 %v77, 15
    %v80 = vsub.s32 0, %v79
    %v81 = vsel %vm75, %v80, %v79
    %vm82 = vcmp.lt.s32.totalorder %v54, 0
    %v83 = vsub.s32 0, %v54
    %v84 = vsel %vm82, %v83, %v54
    %v85 = vshrl.u32 %v84, 4
    %v86 = vand.u32 %v84, 15
    %v87 = vsub.s32 0, %v86
    %v88 = vsel %vm82, %v87, %v86
    %vm89 = vcmp.lt.s32.totalorder %v55, 0
    %v90 = vsub.s32 0, %v55
    %v91 = vsel %vm89, %v90, %v55
    %v92 = vshrl.u32 %v91, 4
    %v93 = vand.u32 %v91, 15
    %v94 = vsub.s32 0, %v93
    %v95 = vsel %vm89, %v94, %v93
    %vm96 = vcmp.lt.s32.totalorder %v56, 0
    %v97 = vsub.s32 0, %v56
    %v98 = vsel %vm96, %v97, %v56
    %v99 = vshrl.u32 %v98, 4
    %v100 = vand.u32 %v98, 15
    %v101 = vsub.s32 0, %v100
    %v102 = vsel %vm96, %v101, %v100
    %vm103 = vcmp.lt.s32.totalorder %v57, 0
    %v104 = vsub.s32 0, %v57
    %v105 = vsel %vm103, %v104, %v57
    %v106 = vshrl.u32 %v105, 4
    %v107 = vand.u32 %v105, 15
    %v108 = vsub.s32 0, %v107
    %v109 = vsel %vm103, %v108, %v107
    %vm110 = vcmp.lt.s32.totalorder %v58, 0
    %v111 = vsub.s32 0, %v58
    %v112 = vsel %vm110, %v111, %v58
    %v113 = vshrl.u32 %v112, 4
    %v114 = vand.u32 %v112, 15
    %v115 = vsub.s32 0, %v114
    %v116 = vsel %vm110, %v115, %v114
    %vm117 = vcmp.lt.s32.totalorder %v59, 0
    %v118 = vsub.s32 0, %v59
    %v119 = vsel %vm117, %v118, %v59
    %v120 = vshrl.u32 %v119, 4
    %v121 = vand.u32 %v119, 15
    %v122 = vsub.s32 0, %v121
    %v123 = vsel %vm117, %v122, %v121
    %vm124 = vcmp.lt.s32.totalorder %v60, 0
    %v125 = vsub.s32 0, %v60
    %v126 = vsel %vm124, %v125, %v60
    %v127 = vshrl.u32 %v126, 4
    %v128 = vand.u32 %v126, 15
    %v129 = vsub.s32 0, %v128
    %v130 = vsel %vm124, %v129, %v128
    %vm131 = vcmp.lt.s32.totalorder %v61, 0
    %v132 = vsub.s32 0, %v61
    %v133 = vsel %vm131, %v132, %v61
    %v134 = vshrl.u32 %v133, 4
    %v135 = vand.u32 %v133, 15
    %v136 = vsub.s32 0, %v135
    %v137 = vsel %vm131, %v136, %v135
    %vm138 = vcmp.lt.s32.totalorder %v62, 0
    %v139 = vsub.s32 0, %v62
    %v140 = vsel %vm138, %v139, %v62
    %v141 = vshrl.u32 %v140, 4
    %v142 = vand.u32 %v140, 15
    %v143 = vsub.s32 0, %v142
    %v144 = vsel %vm138, %v143, %v142
    %vm145 = vcmp.lt.s32.totalorder %v63, 0
    %v146 = vsub.s32 0, %v63
    %v147 = vsel %vm145, %v146, %v63
    %v148 = vshrl.u32 %v147, 4
    %v149 = vand.u32 %v147, 15
    %v150 = vsub.s32 0, %v149
    %v151 = vsel %vm145, %v150, %v149
    %vm152 = vcmp.lt.s32.totalorder %v64, 0
    %v153 = vsub.s32 0, %v64
    %v154 = vsel %vm152, %v153, %v64
    %v155 = vshrl.u32 %v154, 4
    %v156 = vand.u32 %v154, 15
    %v157 = vsub.s32 0, %v156
    %v158 = vsel %vm152, %v157, %v156
    %vm159 = vcmp.lt.s32.totalorder %v65, 0
    %v160 = vsub.s32 0, %v65
    %v161 = vsel %vm159, %v160, %v65
    %v162 = vshrl.u32 %v161, 4
    %v163 = vand.u32 %v161, 15
    %v164 = vsub.s32 0, %v163
    %v165 = vsel %vm159, %v164, %v163
    %vm166 = vcmp.lt.s32.totalorder %v66, 0
    %v167 = vsub.s32 0, %v66
    %v168 = vsel %vm166, %v167, %v66
    %v169 = vshrl.u32 %v168, 4
    %v170 = vand.u32 %v168, 15
    %v171 = vsub.s32 0, %v170
    %v172 = vsel %vm166, %v171, %v170
    %vm173 = vcmp.lt.s32.totalorder %v67, 0
    %v174 = vsub.s32 0, %v67
    %v175 = vsel %vm173, %v174, %v67
    %v176 = vshrl.u32 %v175, 4
    %v177 = vand.u32 %v175, 15
    %v178 = vsub.s32 0, %v177
    %v179 = vsel %vm173, %v178, %v177
    %vm180 = vcmp.ne.s32.totalorder %v74, 0
    %vm181 = vcmp.ne.s32.totalorder %v81, 0
    %vm182 = vcmp.ne.s32.totalorder %v88, 0
    %vm183 = vcmp.ne.s32.totalorder %v95, 0
    %vm184 = vcmp.ne.s32.totalorder %v102, 0
    %vm185 = vcmp.ne.s32.totalorder %v109, 0
    %vm186 = vcmp.ne.s32.totalorder %v116, 0
    %vm187 = vcmp.ne.s32.totalorder %v123, 0
    %vm188 = vcmp.ne.s32.totalorder %v130, 0
    %vm189 = vcmp.ne.s32.totalorder %v137, 0
    %vm190 = vcmp.ne.s32.totalorder %v144, 0
    %vm191 = vcmp.ne.s32.totalorder %v151, 0
    %vm192 = vcmp.ne.s32.totalorder %v158, 0
    %vm193 = vcmp.ne.s32.totalorder %v165, 0
    %vm194 = vcmp.ne.s32.totalorder %v172, 0
    %vm195 = vcmp.ne.s32.totalorder %v179, 0
    %vm196 = vcmp.lt.s32.totalorder %v74, 0
    %vm197 = vcmp.lt.s32.totalorder %v81, 0
    %vm198 = vcmp.lt.s32.totalorder %v88, 0
    %vm199 = vcmp.lt.s32.totalorder %v95, 0
    %vm200 = vcmp.lt.s32.totalorder %v102, 0
    %vm201 = vcmp.lt.s32.totalorder %v109, 0
    %vm202 = vcmp.lt.s32.totalorder %v116, 0
    %vm203 = vcmp.lt.s32.totalorder %v123, 0
    %vm204 = vcmp.lt.s32.totalorder %v130, 0
    %vm205 = vcmp.lt.s32.totalorder %v137, 0
    %vm206 = vcmp.lt.s32.totalorder %v144, 0
    %vm207 = vcmp.lt.s32.totalorder %v151, 0
    %vm208 = vcmp.lt.s32.totalorder %v158, 0
    %vm209 = vcmp.lt.s32.totalorder %v165, 0
    %vm210 = vcmp.lt.s32.totalorder %v172, 0
    %vm211 = vcmp.lt.s32.totalorder %v179, 0
    %vm212 = vmand %vm196, %vm180
    %vm213 = vmand %vm197, %vm181
    %vm214 = vmand %vm198, %vm182
    %vm215 = vmand %vm199, %vm183
    %vm216 = vmand %vm200, %vm184
    %vm217 = vmand %vm201, %vm185
    %vm218 = vmand %vm202, %vm186
    %vm219 = vmand %vm203, %vm187
    %vm220 = vmand %vm204, %vm188
    %vm221 = vmand %vm205, %vm189
    %vm222 = vmand %vm206, %vm190
    %vm223 = vmand %vm207, %vm191
    %vm224 = vmand %vm208, %vm192
    %vm225 = vmand %vm209, %vm193
    %vm226 = vmand %vm210, %vm194
    %vm227 = vmand %vm211, %vm195
    %v228 = vadd.s32 %v74, 16
    %v229 = vadd.s32 %v81, 16
    %v230 = vadd.s32 %v88, 16
    %v231 = vadd.s32 %v95, 16
    %v232 = vadd.s32 %v102, 16
    %v233 = vadd.s32 %v109, 16
    %v234 = vadd.s32 %v116, 16
    %v235 = vadd.s32 %v123, 16
    %v236 = vadd.s32 %v130, 16
    %v237 = vadd.s32 %v137, 16
    %v238 = vadd.s32 %v144, 16
    %v239 = vadd.s32 %v151, 16
    %v240 = vadd.s32 %v158, 16
    %v241 = vadd.s32 %v165, 16
    %v242 = vadd.s32 %v172, 16
    %v243 = vadd.s32 %v179, 16
    %v244 = vsel %vm212, %v228, %v74
    %v245 = vsel %vm213, %v229, %v81
    %v246 = vsel %vm214, %v230, %v88
    %v247 = vsel %vm215, %v231, %v95
    %v248 = vsel %vm216, %v232, %v102
    %v249 = vsel %vm217, %v233, %v109
    %v250 = vsel %vm218, %v234, %v116
    %v251 = vsel %vm219, %v235, %v123
    %v252 = vsel %vm220, %v236, %v130
    %v253 = vsel %vm221, %v237, %v137
    %v254 = vsel %vm222, %v238, %v144
    %v255 = vsel %vm223, %v239, %v151
    %v256 = vsel %vm224, %v240, %v158
    %v257 = vsel %vm225, %v241, %v165
    %v258 = vsel %vm226, %v242, %v172
    %v259 = vsel %vm227, %v243, %v179
    %v260 = vld [vmem:[%s0] sm:$0xff]
    %v261 = vld [vmem:[%s0 + $0x8] sm:$0xff]
    %v262 = vld [vmem:[%s0 + $0x10] sm:$0xff]
    %v263 = vld [vmem:[%s0 + $0x18] sm:$0xff]
    %v264 = vld [vmem:[%s0 + $0x20] sm:$0xff]
    %v265 = vld [vmem:[%s0 + $0x28] sm:$0xff]
    %v266 = vld [vmem:[%s0 + $0x30] sm:$0xff]
    %v267 = vld [vmem:[%s0 + $0x38] sm:$0xff]
    %v268 = vld [vmem:[%s0 + $0x40] sm:$0xff]
    %v269 = vld [vmem:[%s0 + $0x48] sm:$0xff]
    %v270 = vld [vmem:[%s0 + $0x50] sm:$0xff]
    %v271 = vld [vmem:[%s0 + $0x58] sm:$0xff]
    %v272 = vld [vmem:[%s0 + $0x60] sm:$0xff]
    %v273 = vld [vmem:[%s0 + $0x68] sm:$0xff]
    %v274 = vld [vmem:[%s0 + $0x70] sm:$0xff]
    %v275 = vld [vmem:[%s0 + $0x78] sm:$0xff]
    %vm276 = vcmask 31744
    %277 = vst.msk [vmem:[#allocation2] sm:$0xff] %vm276, %v260
    %278 = vst.msk [vmem:[#allocation2 + $0x8] sm:$0xff] %vm276, %v261
    %279 = vst.msk [vmem:[#allocation2 + $0x10] sm:$0xff] %vm276, %v262
    %280 = vst.msk [vmem:[#allocation2 + $0x18] sm:$0xff] %vm276, %v263
    %281 = vst.msk [vmem:[#allocation2 + $0x20] sm:$0xff] %vm276, %v264
    %282 = vst.msk [vmem:[#allocation2 + $0x28] sm:$0xff] %vm276, %v265
    %283 = vst.msk [vmem:[#allocation2 + $0x30] sm:$0xff] %vm276, %v266
    %284 = vst.msk [vmem:[#allocation2 + $0x38] sm:$0xff] %vm276, %v267
    %285 = vst.msk [vmem:[#allocation2 + $0x40] sm:$0xff] %vm276, %v268
    %286 = vst.msk [vmem:[#allocation2 + $0x48] sm:$0xff] %vm276, %v269
    %287 = vst.msk [vmem:[#allocation2 + $0x50] sm:$0xff] %vm276, %v270
    %288 = vst.msk [vmem:[#allocation2 + $0x58] sm:$0xff] %vm276, %v271
    %289 = vst.msk [vmem:[#allocation2 + $0x60] sm:$0xff] %vm276, %v272
    %290 = vst.msk [vmem:[#allocation2 + $0x68] sm:$0xff] %vm276, %v273
    %291 = vst.msk [vmem:[#allocation2 + $0x70] sm:$0xff] %vm276, %v274
    %292 = vst.msk [vmem:[#allocation2 + $0x78] sm:$0xff] %vm276, %v275
    %v293 = vld [vmem:[#allocation2] sm:$0xff]
    %v294 = vld [vmem:[#allocation2 + $0x8] sm:$0xff]
    %v295 = vld [vmem:[#allocation2 + $0x10] sm:$0xff]
    %v296 = vld [vmem:[#allocation2 + $0x18] sm:$0xff]
    %v297 = vld [vmem:[#allocation2 + $0x20] sm:$0xff]
    %v298 = vld [vmem:[#allocation2 + $0x28] sm:$0xff]
    %v299 = vld [vmem:[#allocation2 + $0x30] sm:$0xff]
    %v300 = vld [vmem:[#allocation2 + $0x38] sm:$0xff]
    %v301 = vld [vmem:[#allocation2 + $0x40] sm:$0xff]
    %v302 = vld [vmem:[#allocation2 + $0x48] sm:$0xff]
    %v303 = vld [vmem:[#allocation2 + $0x50] sm:$0xff]
    %v304 = vld [vmem:[#allocation2 + $0x58] sm:$0xff]
    %v305 = vld [vmem:[#allocation2 + $0x60] sm:$0xff]
    %v306 = vld [vmem:[#allocation2 + $0x68] sm:$0xff]
    %v307 = vld [vmem:[#allocation2 + $0x70] sm:$0xff]
    %v308 = vld [vmem:[#allocation2 + $0x78] sm:$0xff]
    %v309 = vpack.c.bf16 %v294, %v293
    %v310 = vpack.c.bf16 %v296, %v295
    %v311 = vpack.c.bf16 %v298, %v297
    %v312 = vpack.c.bf16 %v300, %v299
    %v313 = vpack.c.bf16 %v302, %v301
    %v314 = vpack.c.bf16 %v304, %v303
    %v315 = vpack.c.bf16 %v306, %v305
    %v316 = vpack.c.bf16 %v308, %v307
    %317 = vst.msk [vmem:[#allocation3] sm:$0xff] %vm276, %v309
    %318 = vst.msk [vmem:[#allocation3 + $0x8] sm:$0xff] %vm276, %v310
    %319 = vst.msk [vmem:[#allocation3 + $0x10] sm:$0xff] %vm276, %v311
    %320 = vst.msk [vmem:[#allocation3 + $0x18] sm:$0xff] %vm276, %v312
    %321 = vst.msk [vmem:[#allocation3 + $0x20] sm:$0xff] %vm276, %v313
    %322 = vst.msk [vmem:[#allocation3 + $0x28] sm:$0xff] %vm276, %v314
    %323 = vst.msk [vmem:[#allocation3 + $0x30] sm:$0xff] %vm276, %v315
    %324 = vst.msk [vmem:[#allocation3 + $0x38] sm:$0xff] %vm276, %v316
    %v325 = vld [vmem:[#allocation2 + $0x1] sm:$0xff]
    %v326 = vld [vmem:[#allocation2 + $0x9] sm:$0xff]
    %v327 = vld [vmem:[#allocation2 + $0x11] sm:$0xff]
    %v328 = vld [vmem:[#allocation2 + $0x19] sm:$0xff]
    %v329 = vld [vmem:[#allocation2 + $0x21] sm:$0xff]
    %v330 = vld [vmem:[#allocation2 + $0x29] sm:$0xff]
    %v331 = vld [vmem:[#allocation2 + $0x31] sm:$0xff]
    %v332 = vld [vmem:[#allocation2 + $0x39] sm:$0xff]
    %v333 = vld [vmem:[#allocation2 + $0x41] sm:$0xff]
    %v334 = vld [vmem:[#allocation2 + $0x49] sm:$0xff]
    %v335 = vld [vmem:[#allocation2 + $0x51] sm:$0xff]
    %v336 = vld [vmem:[#allocation2 + $0x59] sm:$0xff]
    %v337 = vld [vmem:[#allocation2 + $0x61] sm:$0xff]
    %v338 = vld [vmem:[#allocation2 + $0x69] sm:$0xff]
    %v339 = vld [vmem:[#allocation2 + $0x71] sm:$0xff]
    %v340 = vld [vmem:[#allocation2 + $0x79] sm:$0xff]
    %v341 = vpack.c.bf16 %v326, %v325
    %v342 = vpack.c.bf16 %v328, %v327
    %v343 = vpack.c.bf16 %v330, %v329
    %v344 = vpack.c.bf16 %v332, %v331
    %v345 = vpack.c.bf16 %v334, %v333
    %v346 = vpack.c.bf16 %v336, %v335
    %v347 = vpack.c.bf16 %v338, %v337
    %v348 = vpack.c.bf16 %v340, %v339
    %357 = vrot.lane.b32.xlu0 %v341, 4
    %v358 = vpop.permute.xlu0 %357
    %359 = vrot.lane.b32.xlu0 %v342, 4
    %v360 = vpop.permute.xlu0 %359
    %361 = vrot.lane.b32.xlu0 %v343, 4
    %v362 = vpop.permute.xlu0 %361
    %363 = vrot.lane.b32.xlu0 %v344, 4
    %v364 = vpop.permute.xlu0 %363
    %365 = vrot.lane.b32.xlu0 %v345, 4
    %v366 = vpop.permute.xlu0 %365
    %367 = vrot.lane.b32.xlu0 %v346, 4
    %v368 = vpop.permute.xlu0 %367
    %369 = vrot.lane.b32.xlu0 %v347, 4
    %v370 = vpop.permute.xlu0 %369
    %371 = vrot.lane.b32.xlu0 %v348, 4
    %v372 = vpop.permute.xlu0 %371
    %vm381 = vcmask 64544
    %382 = vst.msk [vmem:[#allocation3] sm:$0xff] %vm381, %v358
    %383 = vst.msk [vmem:[#allocation3 + $0x8] sm:$0xff] %vm381, %v360
    %384 = vst.msk [vmem:[#allocation3 + $0x10] sm:$0xff] %vm381, %v362
    %385 = vst.msk [vmem:[#allocation3 + $0x18] sm:$0xff] %vm381, %v364
    %386 = vst.msk [vmem:[#allocation3 + $0x20] sm:$0xff] %vm381, %v366
    %387 = vst.msk [vmem:[#allocation3 + $0x28] sm:$0xff] %vm381, %v368
    %388 = vst.msk [vmem:[#allocation3 + $0x30] sm:$0xff] %vm381, %v370
    %389 = vst.msk [vmem:[#allocation3 + $0x38] sm:$0xff] %vm381, %v372
    %v390 = vld [vmem:[#allocation2 + $0x2] sm:$0xff]
    %v391 = vld [vmem:[#allocation2 + $0xa] sm:$0xff]
    %v392 = vld [vmem:[#allocation2 + $0x12] sm:$0xff]
    %v393 = vld [vmem:[#allocation2 + $0x1a] sm:$0xff]
    %v394 = vld [vmem:[#allocation2 + $0x22] sm:$0xff]
    %v395 = vld [vmem:[#allocation2 + $0x2a] sm:$0xff]
    %v396 = vld [vmem:[#allocation2 + $0x32] sm:$0xff]
    %v397 = vld [vmem:[#allocation2 + $0x3a] sm:$0xff]
    %v398 = vld [vmem:[#allocation2 + $0x42] sm:$0xff]
    %v399 = vld [vmem:[#allocation2 + $0x4a] sm:$0xff]
    %v400 = vld [vmem:[#allocation2 + $0x52] sm:$0xff]
    %v401 = vld [vmem:[#allocation2 + $0x5a] sm:$0xff]
    %v402 = vld [vmem:[#allocation2 + $0x62] sm:$0xff]
    %v403 = vld [vmem:[#allocation2 + $0x6a] sm:$0xff]
    %v404 = vld [vmem:[#allocation2 + $0x72] sm:$0xff]
    %v405 = vld [vmem:[#allocation2 + $0x7a] sm:$0xff]
    %v406 = vpack.c.bf16 %v391, %v390
    %v407 = vpack.c.bf16 %v393, %v392
    %v408 = vpack.c.bf16 %v395, %v394
    %v409 = vpack.c.bf16 %v397, %v396
    %v410 = vpack.c.bf16 %v399, %v398
    %v411 = vpack.c.bf16 %v401, %v400
    %v412 = vpack.c.bf16 %v403, %v402
    %v413 = vpack.c.bf16 %v405, %v404
    %422 = vrot.lane.b32.xlu0 %v406, 8
    %v423 = vpop.permute.xlu0 %422
    %424 = vrot.lane.b32.xlu0 %v407, 8
    %v425 = vpop.permute.xlu0 %424
    %426 = vrot.lane.b32.xlu0 %v408, 8
    %v427 = vpop.permute.xlu0 %426
    %428 = vrot.lane.b32.xlu0 %v409, 8
    %v429 = vpop.permute.xlu0 %428
    %430 = vrot.lane.b32.xlu0 %v410, 8
    %v431 = vpop.permute.xlu0 %430
    %432 = vrot.lane.b32.xlu0 %v411, 8
    %v433 = vpop.permute.xlu0 %432
    %434 = vrot.lane.b32.xlu0 %v412, 8
    %v435 = vpop.permute.xlu0 %434
    %436 = vrot.lane.b32.xlu0 %v413, 8
    %v437 = vpop.permute.xlu0 %436
    %vm446 = vcmask 97344
    %447 = vst.msk [vmem:[#allocation3] sm:$0xff] %vm446, %v423
    %448 = vst.msk [vmem:[#allocation3 + $0x8] sm:$0xff] %vm446, %v425
    %449 = vst.msk [vmem:[#allocation3 + $0x10] sm:$0xff] %vm446, %v427
    %450 = vst.msk [vmem:[#allocation3 + $0x18] sm:$0xff] %vm446, %v429
    %451 = vst.msk [vmem:[#allocation3 + $0x20] sm:$0xff] %vm446, %v431
    %452 = vst.msk [vmem:[#allocation3 + $0x28] sm:$0xff] %vm446, %v433
    %453 = vst.msk [vmem:[#allocation3 + $0x30] sm:$0xff] %vm446, %v435
    %454 = vst.msk [vmem:[#allocation3 + $0x38] sm:$0xff] %vm446, %v437
    %v455 = vld [vmem:[#allocation2 + $0x3] sm:$0xff]
    %v456 = vld [vmem:[#allocation2 + $0xb] sm:$0xff]
    %v457 = vld [vmem:[#allocation2 + $0x13] sm:$0xff]
    %v458 = vld [vmem:[#allocation2 + $0x1b] sm:$0xff]
    %v459 = vld [vmem:[#allocation2 + $0x23] sm:$0xff]
    %v460 = vld [vmem:[#allocation2 + $0x2b] sm:$0xff]
    %v461 = vld [vmem:[#allocation2 + $0x33] sm:$0xff]
    %v462 = vld [vmem:[#allocation2 + $0x3b] sm:$0xff]
    %v463 = vld [vmem:[#allocation2 + $0x43] sm:$0xff]
    %v464 = vld [vmem:[#allocation2 + $0x4b] sm:$0xff]
    %v465 = vld [vmem:[#allocation2 + $0x53] sm:$0xff]
    %v466 = vld [vmem:[#allocation2 + $0x5b] sm:$0xff]
    %v467 = vld [vmem:[#allocation2 + $0x63] sm:$0xff]
    %v468 = vld [vmem:[#allocation2 + $0x6b] sm:$0xff]
    %v469 = vld [vmem:[#allocation2 + $0x73] sm:$0xff]
    %v470 = vld [vmem:[#allocation2 + $0x7b] sm:$0xff]
    %v471 = vpack.c.bf16 %v456, %v455
    %v472 = vpack.c.bf16 %v458, %v457
    %v473 = vpack.c.bf16 %v460, %v459
    %v474 = vpack.c.bf16 %v462, %v461
    %v475 = vpack.c.bf16 %v464, %v463
    %v476 = vpack.c.bf16 %v466, %v465
    %v477 = vpack.c.bf16 %v468, %v467
    %v478 = vpack.c.bf16 %v470, %v469
    %487 = vrot.lane.b32.xlu0 %v471, 12
    %v488 = vpop.permute.xlu0 %487
    %489 = vrot.lane.b32.xlu0 %v472, 12
    %v490 = vpop.permute.xlu0 %489
    %491 = vrot.lane.b32.xlu0 %v473, 12
    %v492 = vpop.permute.xlu0 %491
    %493 = vrot.lane.b32.xlu0 %v474, 12
    %v494 = vpop.permute.xlu0 %493
    %495 = vrot.lane.b32.xlu0 %v475, 12
    %v496 = vpop.permute.xlu0 %495
    %497 = vrot.lane.b32.xlu0 %v476, 12
    %v498 = vpop.permute.xlu0 %497
    %499 = vrot.lane.b32.xlu0 %v477, 12
    %v500 = vpop.permute.xlu0 %499
    %501 = vrot.lane.b32.xlu0 %v478, 12
    %v502 = vpop.permute.xlu0 %501
    %vm511 = vcmask 130144
    %512 = vst.msk [vmem:[#allocation3] sm:$0xff] %vm511, %v488
    %513 = vst.msk [vmem:[#allocation3 + $0x8] sm:$0xff] %vm511, %v490
    %514 = vst.msk [vmem:[#allocation3 + $0x10] sm:$0xff] %vm511, %v492
    %515 = vst.msk [vmem:[#allocation3 + $0x18] sm:$0xff] %vm511, %v494
    %516 = vst.msk [vmem:[#allocation3 + $0x20] sm:$0xff] %vm511, %v496
    %517 = vst.msk [vmem:[#allocation3 + $0x28] sm:$0xff] %vm511, %v498
    %518 = vst.msk [vmem:[#allocation3 + $0x30] sm:$0xff] %vm511, %v500
    %519 = vst.msk [vmem:[#allocation3 + $0x38] sm:$0xff] %vm511, %v502
    %v520 = vld [vmem:[#allocation2 + $0x4] sm:$0xff]
    %v521 = vld [vmem:[#allocation2 + $0xc] sm:$0xff]
    %v522 = vld [vmem:[#allocation2 + $0x14] sm:$0xff]
    %v523 = vld [vmem:[#allocation2 + $0x1c] sm:$0xff]
    %v524 = vld [vmem:[#allocation2 + $0x24] sm:$0xff]
    %v525 = vld [vmem:[#allocation2 + $0x2c] sm:$0xff]
    %v526 = vld [vmem:[#allocation2 + $0x34] sm:$0xff]
    %v527 = vld [vmem:[#allocation2 + $0x3c] sm:$0xff]
    %v528 = vld [vmem:[#allocation2 + $0x44] sm:$0xff]
    %v529 = vld [vmem:[#allocation2 + $0x4c] sm:$0xff]
    %v530 = vld [vmem:[#allocation2 + $0x54] sm:$0xff]
    %v531 = vld [vmem:[#allocation2 + $0x5c] sm:$0xff]
    %v532 = vld [vmem:[#allocation2 + $0x64] sm:$0xff]
    %v533 = vld [vmem:[#allocation2 + $0x6c] sm:$0xff]
    %v534 = vld [vmem:[#allocation2 + $0x74] sm:$0xff]
    %v535 = vld [vmem:[#allocation2 + $0x7c] sm:$0xff]
    %v536 = vpack.c.bf16 %v521, %v520
    %v537 = vpack.c.bf16 %v523, %v522
    %v538 = vpack.c.bf16 %v525, %v524
    %v539 = vpack.c.bf16 %v527, %v526
    %v540 = vpack.c.bf16 %v529, %v528
    %v541 = vpack.c.bf16 %v531, %v530
    %v542 = vpack.c.bf16 %v533, %v532
    %v543 = vpack.c.bf16 %v535, %v534
    %552 = vrot.lane.b32.xlu0 %v536, 16
    %v553 = vpop.permute.xlu0 %552
    %554 = vrot.lane.b32.xlu0 %v537, 16
    %v555 = vpop.permute.xlu0 %554
    %556 = vrot.lane.b32.xlu0 %v538, 16
    %v557 = vpop.permute.xlu0 %556
    %558 = vrot.lane.b32.xlu0 %v539, 16
    %v559 = vpop.permute.xlu0 %558
    %560 = vrot.lane.b32.xlu0 %v540, 16
    %v561 = vpop.permute.xlu0 %560
    %562 = vrot.lane.b32.xlu0 %v541, 16
    %v563 = vpop.permute.xlu0 %562
    %564 = vrot.lane.b32.xlu0 %v542, 16
    %v565 = vpop.permute.xlu0 %564
    %566 = vrot.lane.b32.xlu0 %v543, 16
    %v567 = vpop.permute.xlu0 %566
    %vm576 = vcmask 162944
    %577 = vst.msk [vmem:[#allocation3] sm:$0xff] %vm576, %v553
    %578 = vst.msk [vmem:[#allocation3 + $0x8] sm:$0xff] %vm576, %v555
    %579 = vst.msk [vmem:[#allocation3 + $0x10] sm:$0xff] %vm576, %v557
    %580 = vst.msk [vmem:[#allocation3 + $0x18] sm:$0xff] %vm576, %v559
    %581 = vst.msk [vmem:[#allocation3 + $0x20] sm:$0xff] %vm576, %v561
    %582 = vst.msk [vmem:[#allocation3 + $0x28] sm:$0xff] %vm576, %v563
    %583 = vst.msk [vmem:[#allocation3 + $0x30] sm:$0xff] %vm576, %v565
    %584 = vst.msk [vmem:[#allocation3 + $0x38] sm:$0xff] %vm576, %v567
    %v585 = vld [vmem:[#allocation2 + $0x5] sm:$0xff]
    %v586 = vld [vmem:[#allocation2 + $0xd] sm:$0xff]
    %v587 = vld [vmem:[#allocation2 + $0x15] sm:$0xff]
    %v588 = vld [vmem:[#allocation2 + $0x1d] sm:$0xff]
    %v589 = vld [vmem:[#allocation2 + $0x25] sm:$0xff]
    %v590 = vld [vmem:[#allocation2 + $0x2d] sm:$0xff]
    %v591 = vld [vmem:[#allocation2 + $0x35] sm:$0xff]
    %v592 = vld [vmem:[#allocation2 + $0x3d] sm:$0xff]
    %v593 = vld [vmem:[#allocation2 + $0x45] sm:$0xff]
    %v594 = vld [vmem:[#allocation2 + $0x4d] sm:$0xff]
    %v595 = vld [vmem:[#allocation2 + $0x55] sm:$0xff]
    %v596 = vld [vmem:[#allocation2 + $0x5d] sm:$0xff]
    %v597 = vld [vmem:[#allocation2 + $0x65] sm:$0xff]
    %v598 = vld [vmem:[#allocation2 + $0x6d] sm:$0xff]
    %v599 = vld [vmem:[#allocation2 + $0x75] sm:$0xff]
    %v600 = vld [vmem:[#allocation2 + $0x7d] sm:$0xff]
    %v601 = vpack.c.bf16 %v586, %v585
    %v602 = vpack.c.bf16 %v588, %v587
    %v603 = vpack.c.bf16 %v590, %v589
    %v604 = vpack.c.bf16 %v592, %v591
    %v605 = vpack.c.bf16 %v594, %v593
    %v606 = vpack.c.bf16 %v596, %v595
    %v607 = vpack.c.bf16 %v598, %v597
    %v608 = vpack.c.bf16 %v600, %v599
    %617 = vrot.lane.b32.xlu0 %v601, 20
    %v618 = vpop.permute.xlu0 %617
    %619 = vrot.lane.b32.xlu0 %v602, 20
    %v620 = vpop.permute.xlu0 %619
    %621 = vrot.lane.b32.xlu0 %v603, 20
    %v622 = vpop.permute.xlu0 %621
    %623 = vrot.lane.b32.xlu0 %v604, 20
    %v624 = vpop.permute.xlu0 %623
    %625 = vrot.lane.b32.xlu0 %v605, 20
    %v626 = vpop.permute.xlu0 %625
    %627 = vrot.lane.b32.xlu0 %v606, 20
    %v628 = vpop.permute.xlu0 %627
    %629 = vrot.lane.b32.xlu0 %v607, 20
    %v630 = vpop.permute.xlu0 %629
    %631 = vrot.lane.b32.xlu0 %v608, 20
    %v632 = vpop.permute.xlu0 %631
    %vm641 = vcmask 195744
    %642 = vst.msk [vmem:[#allocation3] sm:$0xff] %vm641, %v618
    %643 = vst.msk [vmem:[#allocation3 + $0x8] sm:$0xff] %vm641, %v620
    %644 = vst.msk [vmem:[#allocation3 + $0x10] sm:$0xff] %vm641, %v622
    %645 = vst.msk [vmem:[#allocation3 + $0x18] sm:$0xff] %vm641, %v624
    %646 = vst.msk [vmem:[#allocation3 + $0x20] sm:$0xff] %vm641, %v626
    %647 = vst.msk [vmem:[#allocation3 + $0x28] sm:$0xff] %vm641, %v628
    %648 = vst.msk [vmem:[#allocation3 + $0x30] sm:$0xff] %vm641, %v630
    %649 = vst.msk [vmem:[#allocation3 + $0x38] sm:$0xff] %vm641, %v632
    %v650 = vld [vmem:[#allocation2 + $0x6] sm:$0xff]
    %v651 = vld [vmem:[#allocation2 + $0xe] sm:$0xff]
    %v652 = vld [vmem:[#allocation2 + $0x16] sm:$0xff]
    %v653 = vld [vmem:[#allocation2 + $0x1e] sm:$0xff]
    %v654 = vld [vmem:[#allocation2 + $0x26] sm:$0xff]
    %v655 = vld [vmem:[#allocation2 + $0x2e] sm:$0xff]
    %v656 = vld [vmem:[#allocation2 + $0x36] sm:$0xff]
    %v657 = vld [vmem:[#allocation2 + $0x3e] sm:$0xff]
    %v658 = vld [vmem:[#allocation2 + $0x46] sm:$0xff]
    %v659 = vld [vmem:[#allocation2 + $0x4e] sm:$0xff]
    %v660 = vld [vmem:[#allocation2 + $0x56] sm:$0xff]
    %v661 = vld [vmem:[#allocation2 + $0x5e] sm:$0xff]
    %v662 = vld [vmem:[#allocation2 + $0x66] sm:$0xff]
    %v663 = vld [vmem:[#allocation2 + $0x6e] sm:$0xff]
    %v664 = vld [vmem:[#allocation2 + $0x76] sm:$0xff]
    %v665 = vld [vmem:[#allocation2 + $0x7e] sm:$0xff]
    %v666 = vpack.c.bf16 %v651, %v650
    %v667 = vpack.c.bf16 %v653, %v652
    %v668 = vpack.c.bf16 %v655, %v654
    %v669 = vpack.c.bf16 %v657, %v656
    %v670 = vpack.c.bf16 %v659, %v658
    %v671 = vpack.c.bf16 %v661, %v660
    %v672 = vpack.c.bf16 %v663, %v662
    %v673 = vpack.c.bf16 %v665, %v664
    %682 = vrot.lane.b32.xlu0 %v666, 24
    %v683 = vpop.permute.xlu0 %682
    %684 = vrot.lane.b32.xlu0 %v667, 24
    %v685 = vpop.permute.xlu0 %684
    %686 = vrot.lane.b32.xlu0 %v668, 24
    %v687 = vpop.permute.xlu0 %686
    %688 = vrot.lane.b32.xlu0 %v669, 24
    %v689 = vpop.permute.xlu0 %688
    %690 = vrot.lane.b32.xlu0 %v670, 24
    %v691 = vpop.permute.xlu0 %690
    %692 = vrot.lane.b32.xlu0 %v671, 24
    %v693 = vpop.permute.xlu0 %692
    %694 = vrot.lane.b32.xlu0 %v672, 24
    %v695 = vpop.permute.xlu0 %694
    %696 = vrot.lane.b32.xlu0 %v673, 24
    %v697 = vpop.permute.xlu0 %696
    %vm706 = vcmask 228544
    %707 = vst.msk [vmem:[#allocation3] sm:$0xff] %vm706, %v683
    %708 = vst.msk [vmem:[#allocation3 + $0x8] sm:$0xff] %vm706, %v685
    %709 = vst.msk [vmem:[#allocation3 + $0x10] sm:$0xff] %vm706, %v687
    %710 = vst.msk [vmem:[#allocation3 + $0x18] sm:$0xff] %vm706, %v689
    %711 = vst.msk [vmem:[#allocation3 + $0x20] sm:$0xff] %vm706, %v691
    %712 = vst.msk [vmem:[#allocation3 + $0x28] sm:$0xff] %vm706, %v693
    %713 = vst.msk [vmem:[#allocation3 + $0x30] sm:$0xff] %vm706, %v695
    %714 = vst.msk [vmem:[#allocation3 + $0x38] sm:$0xff] %vm706, %v697
    %v715 = vld [vmem:[#allocation2 + $0x7] sm:$0xff]
    %v716 = vld [vmem:[#allocation2 + $0xf] sm:$0xff]
    %v717 = vld [vmem:[#allocation2 + $0x17] sm:$0xff]
    %v718 = vld [vmem:[#allocation2 + $0x1f] sm:$0xff]
    %v719 = vld [vmem:[#allocation2 + $0x27] sm:$0xff]
    %v720 = vld [vmem:[#allocation2 + $0x2f] sm:$0xff]
    %v721 = vld [vmem:[#allocation2 + $0x37] sm:$0xff]
    %v722 = vld [vmem:[#allocation2 + $0x3f] sm:$0xff]
    %v723 = vld [vmem:[#allocation2 + $0x47] sm:$0xff]
    %v724 = vld [vmem:[#allocation2 + $0x4f] sm:$0xff]
    %v725 = vld [vmem:[#allocation2 + $0x57] sm:$0xff]
    %v726 = vld [vmem:[#allocation2 + $0x5f] sm:$0xff]
    %v727 = vld [vmem:[#allocation2 + $0x67] sm:$0xff]
    %v728 = vld [vmem:[#allocation2 + $0x6f] sm:$0xff]
    %v729 = vld [vmem:[#allocation2 + $0x77] sm:$0xff]
    %v730 = vld [vmem:[#allocation2 + $0x7f] sm:$0xff]
    %v731 = vpack.c.bf16 %v716, %v715
    %v732 = vpack.c.bf16 %v718, %v717
    %v733 = vpack.c.bf16 %v720, %v719
    %v734 = vpack.c.bf16 %v722, %v721
    %v735 = vpack.c.bf16 %v724, %v723
    %v736 = vpack.c.bf16 %v726, %v725
    %v737 = vpack.c.bf16 %v728, %v727
    %v738 = vpack.c.bf16 %v730, %v729
    %747 = vrot.lane.b32.xlu0 %v731, 28
    %v748 = vpop.permute.xlu0 %747
    %749 = vrot.lane.b32.xlu0 %v732, 28
    %v750 = vpop.permute.xlu0 %749
    %751 = vrot.lane.b32.xlu0 %v733, 28
    %v752 = vpop.permute.xlu0 %751
    %753 = vrot.lane.b32.xlu0 %v734, 28
    %v754 = vpop.permute.xlu0 %753
    %755 = vrot.lane.b32.xlu0 %v735, 28
    %v756 = vpop.permute.xlu0 %755
    %757 = vrot.lane.b32.xlu0 %v736, 28
    %v758 = vpop.permute.xlu0 %757
    %759 = vrot.lane.b32.xlu0 %v737, 28
    %v760 = vpop.permute.xlu0 %759
    %761 = vrot.lane.b32.xlu0 %v738, 28
    %v762 = vpop.permute.xlu0 %761
    %vm771 = vcmask 261344
    %772 = vst.msk [vmem:[#allocation3] sm:$0xff] %vm771, %v748
    %773 = vst.msk [vmem:[#allocation3 + $0x8] sm:$0xff] %vm771, %v750
    %774 = vst.msk [vmem:[#allocation3 + $0x10] sm:$0xff] %vm771, %v752
    %775 = vst.msk [vmem:[#allocation3 + $0x18] sm:$0xff] %vm771, %v754
    %776 = vst.msk [vmem:[#allocation3 + $0x20] sm:$0xff] %vm771, %v756
    %777 = vst.msk [vmem:[#allocation3 + $0x28] sm:$0xff] %vm771, %v758
    %778 = vst.msk [vmem:[#allocation3 + $0x30] sm:$0xff] %vm771, %v760
    %779 = vst.msk [vmem:[#allocation3 + $0x38] sm:$0xff] %vm771, %v762
    %v780 = vld [vmem:[#allocation3] sm:$0xff]
    %v781 = vld [vmem:[#allocation3 + $0x8] sm:$0xff]
    %v782 = vld [vmem:[#allocation3 + $0x10] sm:$0xff]
    %v783 = vld [vmem:[#allocation3 + $0x18] sm:$0xff]
    %v784 = vld [vmem:[#allocation3 + $0x20] sm:$0xff]
    %v785 = vld [vmem:[#allocation3 + $0x28] sm:$0xff]
    %v786 = vld [vmem:[#allocation3 + $0x30] sm:$0xff]
    %v787 = vld [vmem:[#allocation3 + $0x38] sm:$0xff]
    %v788 = vld [vmem:[%s1] sm:$0xf]
    %v789 = vld [vmem:[%s1 + $0x4] sm:$0xf]
    %v790 = vld [vmem:[%s1 + $0x8] sm:$0xf]
    %v791 = vld [vmem:[%s1 + $0xc] sm:$0xf]
    %vm792 = vcmp.lt.s32.totalorder %v244, 9
    %vm793 = vcmp.lt.s32.totalorder %v245, 9
    %vm794 = vcmp.lt.s32.totalorder %v246, 9
    %vm795 = vcmp.lt.s32.totalorder %v247, 9
    %vm796 = vcmp.lt.s32.totalorder %v248, 9
    %vm797 = vcmp.lt.s32.totalorder %v249, 9
    %vm798 = vcmp.lt.s32.totalorder %v250, 9
    %vm799 = vcmp.lt.s32.totalorder %v251, 9
    %vm800 = vcmp.lt.s32.totalorder %v252, 9
    %vm801 = vcmp.lt.s32.totalorder %v253, 9
    %vm802 = vcmp.lt.s32.totalorder %v254, 9
    %vm803 = vcmp.lt.s32.totalorder %v255, 9
    %vm804 = vcmp.lt.s32.totalorder %v256, 9
    %vm805 = vcmp.lt.s32.totalorder %v257, 9
    %vm806 = vcmp.lt.s32.totalorder %v258, 9
    %vm807 = vcmp.lt.s32.totalorder %v259, 9
    %v808 = vld [vmem:[%s4] sm:$0x1]
    %v809 = vlaneseq
    %v810 = vshrl.u32 %v809, 7
    %v811 = vsub.s32 0, %v810
    %v812 = vrot.slane %v808, %v811
    %v817 = vunpack.c.l.b16 %v788
    %v818 = vunpack.c.l.b16 %v789
    %v819 = vunpack.c.l.b16 %v790
    %v820 = vunpack.c.l.b16 %v791
    %v821 = vpack.c.b16 %v818, %v817
    %v822 = vpack.c.b16 %v820, %v819
    %vm825 = vcmask 261120
    %v827 = vsel %vm825, %v780, 0
    %v830 = vsel %vm825, %v781, 0
    %v833 = vsel %vm825, %v782, 0
    %v836 = vsel %vm825, %v783, 0
    %v839 = vsel %vm825, %v784, 0
    %v842 = vsel %vm825, %v785, 0
    %v845 = vsel %vm825, %v786, 0
    %v848 = vsel %vm825, %v787, 0
    %850 = vmatprep.subr.bf16.mxu0 0
    %851 = vmatpush1.bf16.msra.mxu0 %v821
    %852 = vmatprep.subr.bf16.mxu0 0
    %853 = vmatpush1.bf16.msra.mxu0 %v822
    %854 = vmatprep.subr.bf16.mxu0 0
    %855 = vmatpush1.bf16.msra.mxu0 0
    %856 = vmatprep.subr.bf16.mxu0 0
    %857 = vmatpush1.bf16.msra.mxu0 0
    %858 = vmatprep.subr.bf16.mxu0 0
    %859 = vmatpush1.bf16.msra.mxu0 0
    %860 = vmatprep.subr.bf16.mxu0 0
    %861 = vmatpush1.bf16.msra.mxu0 0
    %862 = vmatprep.subr.bf16.mxu0 0
    %863 = vmatpush1.bf16.msra.mxu0 0
    %864 = vmatprep.subr.bf16.mxu0 0
    %865 = vmatpush1.bf16.msra.mxu0 0
    %866 = vmatprep.subr.bf16.mxu0 0
    %867 = vmatpush1.bf16.msra.mxu0 0
    %868 = vmatprep.subr.bf16.mxu0 0
    %869 = vmatpush1.bf16.msra.mxu0 0
    %870 = vmatprep.subr.bf16.mxu0 0
    %871 = vmatpush1.bf16.msra.mxu0 0
    %872 = vmatprep.subr.bf16.mxu0 0
    %873 = vmatpush1.bf16.msra.mxu0 0
    %874 = vmatprep.subr.bf16.mxu0 0
    %875 = vmatpush1.bf16.msra.mxu0 0
    %876 = vmatprep.subr.bf16.mxu0 0
    %877 = vmatpush1.bf16.msra.mxu0 0
    %878 = vmatprep.subr.bf16.mxu0 0
    %879 = vmatpush1.bf16.msra.mxu0 0
    %880 = vmatprep.subr.bf16.mxu0 0
    %881 = vmatpush1.bf16.msra.mxu0 0
    %882 = vmatprep.mubr.bf16.mxu0 0
    %883 = vmatmul.mubr.bf16.gmra.mrb[0].mxu0 %v827
    %v884 = vpop.f32.mrb[0].mxu0
    %v885 = vadd.f32 %v812, %v884
    %v886 = vpop.f32.mrb[0].mxu0
    %v887 = vpop.f32.mrb[0].mxu0
    %v888 = vadd.f32 %v812, %v887
    %v889 = vpop.f32.mrb[0].mxu0
    %890 = vmatprep.mubr.bf16.mxu0 0
    %891 = vmatmul.mubr.bf16.gmra.mrb[0].mxu0 %v830
    %v892 = vpop.f32.mrb[0].mxu0
    %v893 = vadd.f32 %v812, %v892
    %v894 = vpop.f32.mrb[0].mxu0
    %v895 = vpop.f32.mrb[0].mxu0
    %v896 = vadd.f32 %v812, %v895
    %v897 = vpop.f32.mrb[0].mxu0
    %898 = vmatprep.mubr.bf16.mxu0 0
    %899 = vmatmul.mubr.bf16.gmra.mrb[0].mxu0 %v833
    %v900 = vpop.f32.mrb[0].mxu0
    %v901 = vadd.f32 %v812, %v900
    %v902 = vpop.f32.mrb[0].mxu0
    %v903 = vpop.f32.mrb[0].mxu0
    %v904 = vadd.f32 %v812, %v903
    %v905 = vpop.f32.mrb[0].mxu0
    %906 = vmatprep.mubr.bf16.mxu0 0
    %907 = vmatmul.mubr.bf16.gmra.mrb[0].mxu0 %v836
    %v908 = vpop.f32.mrb[0].mxu0
    %v909 = vadd.f32 %v812, %v908
    %v910 = vpop.f32.mrb[0].mxu0
    %v911 = vpop.f32.mrb[0].mxu0
    %v912 = vadd.f32 %v812, %v911
    %v913 = vpop.f32.mrb[0].mxu0
    %914 = vmatprep.mubr.bf16.mxu0 0
    %915 = vmatmul.mubr.bf16.gmra.mrb[0].mxu0 %v839
    %v916 = vpop.f32.mrb[0].mxu0
    %v917 = vadd.f32 %v812, %v916
    %v918 = vpop.f32.mrb[0].mxu0
    %v919 = vpop.f32.mrb[0].mxu0
    %v920 = vadd.f32 %v812, %v919
    %v921 = vpop.f32.mrb[0].mxu0
    %922 = vmatprep.mubr.bf16.mxu0 0
    %923 = vmatmul.mubr.bf16.gmra.mrb[0].mxu0 %v842
    %v924 = vpop.f32.mrb[0].mxu0
    %v925 = vadd.f32 %v812, %v924
    %v926 = vpop.f32.mrb[0].mxu0
    %v927 = vpop.f32.mrb[0].mxu0
    %v928 = vadd.f32 %v812, %v927
    %v929 = vpop.f32.mrb[0].mxu0
    %930 = vmatprep.mubr.bf16.mxu0 0
    %931 = vmatmul.mubr.bf16.gmra.mrb[0].mxu0 %v845
    %v932 = vpop.f32.mrb[0].mxu0
    %v933 = vadd.f32 %v812, %v932
    %v934 = vpop.f32.mrb[0].mxu0
    %v935 = vpop.f32.mrb[0].mxu0
    %v936 = vadd.f32 %v812, %v935
    %v937 = vpop.f32.mrb[0].mxu0
    %938 = vmatprep.mubr.bf16.mxu0 0
    %939 = vmatmul.mubr.bf16.gmra.mrb[0].mxu0 %v848
    %v940 = vpop.f32.mrb[0].mxu0
    %v941 = vadd.f32 %v812, %v940
    %v942 = vpop.f32.mrb[0].mxu0
    %v943 = vpop.f32.mrb[0].mxu0
    %v944 = vadd.f32 %v812, %v943
    %v945 = vpop.f32.mrb[0].mxu0
    %946 = vdwg.mxu0
    %v947 = vmax.f32 %v885, 0.0
    %v948 = vmax.f32 %v888, 0.0
    %v949 = vmax.f32 %v893, 0.0
    %v950 = vmax.f32 %v896, 0.0
    %v951 = vmax.f32 %v901, 0.0
    %v952 = vmax.f32 %v904, 0.0
    %v953 = vmax.f32 %v909, 0.0
    %v954 = vmax.f32 %v912, 0.0
    %v955 = vmax.f32 %v917, 0.0
    %v956 = vmax.f32 %v920, 0.0
    %v957 = vmax.f32 %v925, 0.0
    %v958 = vmax.f32 %v928, 0.0
    %v959 = vmax.f32 %v933, 0.0
    %v960 = vmax.f32 %v936, 0.0
    %v961 = vmax.f32 %v941, 0.0
    %v962 = vmax.f32 %v944, 0.0
    %v963 = vsel %vm792, 1, 0
    %v964 = vsel %vm793, 1, 0
    %v965 = vsel %vm794, 1, 0
    %v966 = vsel %vm795, 1, 0
    %v967 = vsel %vm796, 1, 0
    %v968 = vsel %vm797, 1, 0
    %v969 = vsel %vm798, 1, 0
    %v970 = vsel %vm799, 1, 0
    %v971 = vsel %vm800, 1, 0
    %v972 = vsel %vm801, 1, 0
    %v973 = vsel %vm802, 1, 0
    %v974 = vsel %vm803, 1, 0
    %v975 = vsel %vm804, 1, 0
    %v976 = vsel %vm805, 1, 0
    %v977 = vsel %vm806, 1, 0
    %v978 = vsel %vm807, 1, 0
    %vm979 = vcmp.eq.s32.totalorder %v963, 1
    %vm980 = vcmp.eq.s32.totalorder %v964, 1
    %vm981 = vcmp.eq.s32.totalorder %v965, 1
    %vm982 = vcmp.eq.s32.totalorder %v966, 1
    %vm983 = vcmp.eq.s32.totalorder %v967, 1
    %vm984 = vcmp.eq.s32.totalorder %v968, 1
    %vm985 = vcmp.eq.s32.totalorder %v969, 1
    %vm986 = vcmp.eq.s32.totalorder %v970, 1
    %vm987 = vcmp.eq.s32.totalorder %v971, 1
    %vm988 = vcmp.eq.s32.totalorder %v972, 1
    %vm989 = vcmp.eq.s32.totalorder %v973, 1
    %vm990 = vcmp.eq.s32.totalorder %v974, 1
    %vm991 = vcmp.eq.s32.totalorder %v975, 1
    %vm992 = vcmp.eq.s32.totalorder %v976, 1
    %vm993 = vcmp.eq.s32.totalorder %v977, 1
    %vm994 = vcmp.eq.s32.totalorder %v978, 1
    %v995 = vsel %vm979, %v947, 0.0
    %v996 = vsel %vm980, %v948, 0.0
    %v997 = vsel %vm981, %v949, 0.0
    %v998 = vsel %vm982, %v950, 0.0
    %v999 = vsel %vm983, %v951, 0.0
    %v1000 = vsel %vm984, %v952, 0.0
    %v1001 = vsel %vm985, %v953, 0.0
    %v1002 = vsel %vm986, %v954, 0.0
    %v1003 = vsel %vm987, %v955, 0.0
    %v1004 = vsel %vm988, %v956, 0.0
    %v1005 = vsel %vm989, %v957, 0.0
    %v1006 = vsel %vm990, %v958, 0.0
    %v1007 = vsel %vm991, %v959, 0.0
    %v1008 = vsel %vm992, %v960, 0.0
    %v1009 = vsel %vm993, %v961, 0.0
    %v1010 = vsel %vm994, %v962, 0.0
    %1011 = vst [vmem:[#allocation2] sm:$0xff] %v995
    %1012 = vst [vmem:[#allocation2 + $0x8] sm:$0xff] %v996
    %1013 = vst [vmem:[#allocation2 + $0x10] sm:$0xff] %v997
    %1014 = vst [vmem:[#allocation2 + $0x18] sm:$0xff] %v998
    %1015 = vst [vmem:[#allocation2 + $0x20] sm:$0xff] %v999
    %1016 = vst [vmem:[#allocation2 + $0x28] sm:$0xff] %v1000
    %1017 = vst [vmem:[#allocation2 + $0x30] sm:$0xff] %v1001
    %1018 = vst [vmem:[#allocation2 + $0x38] sm:$0xff] %v1002
    %1019 = vst [vmem:[#allocation2 + $0x40] sm:$0xff] %v1003
    %1020 = vst [vmem:[#allocation2 + $0x48] sm:$0xff] %v1004
    %1021 = vst [vmem:[#allocation2 + $0x50] sm:$0xff] %v1005
    %1022 = vst [vmem:[#allocation2 + $0x58] sm:$0xff] %v1006
    %1023 = vst [vmem:[#allocation2 + $0x60] sm:$0xff] %v1007
    %1024 = vst [vmem:[#allocation2 + $0x68] sm:$0xff] %v1008
    %1025 = vst [vmem:[#allocation2 + $0x70] sm:$0xff] %v1009
    %1026 = vst [vmem:[#allocation2 + $0x78] sm:$0xff] %v1010
    %v1027 = vld [vmem:[%s4 + $0x1] sm:$0x1]
    %v1028 = vld [vmem:[#allocation2] sm:$0xff]
    %v1029 = vld [vmem:[#allocation2 + $0x8] sm:$0xff]
    %v1030 = vld [vmem:[#allocation2 + $0x10] sm:$0xff]
    %v1031 = vld [vmem:[#allocation2 + $0x18] sm:$0xff]
    %v1032 = vld [vmem:[#allocation2 + $0x20] sm:$0xff]
    %v1033 = vld [vmem:[#allocation2 + $0x28] sm:$0xff]
    %v1034 = vld [vmem:[#allocation2 + $0x30] sm:$0xff]
    %v1035 = vld [vmem:[#allocation2 + $0x38] sm:$0xff]
    %v1036 = vld [vmem:[#allocation2 + $0x40] sm:$0xff]
    %v1037 = vld [vmem:[#allocation2 + $0x48] sm:$0xff]
    %v1038 = vld [vmem:[#allocation2 + $0x50] sm:$0xff]
    %v1039 = vld [vmem:[#allocation2 + $0x58] sm:$0xff]
    %v1040 = vld [vmem:[#allocation2 + $0x60] sm:$0xff]
    %v1041 = vld [vmem:[#allocation2 + $0x68] sm:$0xff]
    %v1042 = vld [vmem:[#allocation2 + $0x70] sm:$0xff]
    %v1043 = vld [vmem:[#allocation2 + $0x78] sm:$0xff]
    %v1044 = vpack.c.bf16 %v1029, %v1028
    %v1045 = vpack.c.bf16 %v1031, %v1030
    %v1046 = vpack.c.bf16 %v1033, %v1032
    %v1047 = vpack.c.bf16 %v1035, %v1034
    %v1048 = vpack.c.bf16 %v1037, %v1036
    %v1049 = vpack.c.bf16 %v1039, %v1038
    %v1050 = vpack.c.bf16 %v1041, %v1040
    %v1051 = vpack.c.bf16 %v1043, %v1042
    %v1052 = vld [vmem:[#allocation4] sm:$0xf]
    %v1053 = vld [vmem:[#allocation4 + $0x4] sm:$0xf]
    %v1054 = vld [vmem:[#allocation4 + $0x8] sm:$0xf]
    %v1055 = vld [vmem:[#allocation4 + $0xc] sm:$0xf]
    %v1056 = vld [vmem:[#allocation4 + $0x10] sm:$0xf]
    %v1057 = vld [vmem:[#allocation4 + $0x14] sm:$0xf]
    %v1058 = vld [vmem:[#allocation4 + $0x18] sm:$0xf]
    %v1059 = vld [vmem:[#allocation4 + $0x1c] sm:$0xf]
    %v1060 = vld [vmem:[#allocation4 + $0x20] sm:$0xf]
    %v1061 = vld [vmem:[#allocation4 + $0x24] sm:$0xf]
    %v1062 = vld [vmem:[#allocation4 + $0x28] sm:$0xf]
    %v1063 = vld [vmem:[#allocation4 + $0x2c] sm:$0xf]
    %v1064 = vld [vmem:[#allocation4 + $0x30] sm:$0xf]
    %v1065 = vld [vmem:[#allocation4 + $0x34] sm:$0xf]
    %v1066 = vld [vmem:[#allocation4 + $0x38] sm:$0xf]
    %v1067 = vld [vmem:[#allocation4 + $0x3c] sm:$0xf]
    %v1068 = vld [vmem:[#allocation2 + $0x1] sm:$0xff]
    %v1069 = vld [vmem:[#allocation2 + $0x9] sm:$0xff]
    %v1070 = vld [vmem:[#allocation2 + $0x11] sm:$0xff]
    %v1071 = vld [vmem:[#allocation2 + $0x19] sm:$0xff]
    %v1072 = vld [vmem:[#allocation2 + $0x21] sm:$0xff]
    %v1073 = vld [vmem:[#allocation2 + $0x29] sm:$0xff]
    %v1074 = vld [vmem:[#allocation2 + $0x31] sm:$0xff]
    %v1075 = vld [vmem:[#allocation2 + $0x39] sm:$0xff]
    %v1076 = vld [vmem:[#allocation2 + $0x41] sm:$0xff]
    %v1077 = vld [vmem:[#allocation2 + $0x49] sm:$0xff]
    %v1078 = vld [vmem:[#allocation2 + $0x51] sm:$0xff]
    %v1079 = vld [vmem:[#allocation2 + $0x59] sm:$0xff]
    %v1080 = vld [vmem:[#allocation2 + $0x61] sm:$0xff]
    %v1081 = vld [vmem:[#allocation2 + $0x69] sm:$0xff]
    %v1082 = vld [vmem:[#allocation2 + $0x71] sm:$0xff]
    %v1083 = vld [vmem:[#allocation2 + $0x79] sm:$0xff]
    %v1084 = vpack.c.bf16 %v1069, %v1068
    %v1085 = vpack.c.bf16 %v1071, %v1070
    %v1086 = vpack.c.bf16 %v1073, %v1072
    %v1087 = vpack.c.bf16 %v1075, %v1074
    %v1088 = vpack.c.bf16 %v1077, %v1076
    %v1089 = vpack.c.bf16 %v1079, %v1078
    %v1090 = vpack.c.bf16 %v1081, %v1080
    %v1091 = vpack.c.bf16 %v1083, %v1082
    %s1092 = scalar_lea.vmem [#allocation4], 64
    %v1093 = vld [vmem:[%s1092] sm:$0xf]
    %v1094 = vld [vmem:[%s1092 + $0x4] sm:$0xf]
    %v1095 = vld [vmem:[%s1092 + $0x8] sm:$0xf]
    %v1096 = vld [vmem:[%s1092 + $0xc] sm:$0xf]
    %v1097 = vld [vmem:[%s1092 + $0x10] sm:$0xf]
    %v1098 = vld [vmem:[%s1092 + $0x14] sm:$0xf]
    %v1099 = vld [vmem:[%s1092 + $0x18] sm:$0xf]
    %v1100 = vld [vmem:[%s1092 + $0x1c] sm:$0xf]
    %v1101 = vld [vmem:[%s1092 + $0x20] sm:$0xf]
    %v1102 = vld [vmem:[%s1092 + $0x24] sm:$0xf]
    %v1103 = vld [vmem:[%s1092 + $0x28] sm:$0xf]
    %v1104 = vld [vmem:[%s1092 + $0x2c] sm:$0xf]
    %v1105 = vld [vmem:[%s1092 + $0x30] sm:$0xf]
    %v1106 = vld [vmem:[%s1092 + $0x34] sm:$0xf]
    %v1107 = vld [vmem:[%s1092 + $0x38] sm:$0xf]
    %v1108 = vld [vmem:[%s1092 + $0x3c] sm:$0xf]
    %v1125 = vunpack.c.l.b16 %v1093
    %v1126 = vunpack.c.l.b16 %v1094
    %v1127 = vunpack.c.l.b16 %v1095
    %v1128 = vunpack.c.l.b16 %v1096
    %v1129 = vunpack.c.l.b16 %v1097
    %v1130 = vunpack.c.l.b16 %v1098
    %v1131 = vunpack.c.l.b16 %v1099
    %v1132 = vunpack.c.l.b16 %v1100
    %v1133 = vunpack.c.l.b16 %v1101
    %v1134 = vunpack.c.l.b16 %v1102
    %v1135 = vunpack.c.l.b16 %v1103
    %v1136 = vunpack.c.l.b16 %v1104
    %v1137 = vunpack.c.l.b16 %v1105
    %v1138 = vunpack.c.l.b16 %v1106
    %v1139 = vunpack.c.l.b16 %v1107
    %v1140 = vunpack.c.l.b16 %v1108
    %v1141 = vpack.c.b16 %v1126, %v1125
    %v1142 = vpack.c.b16 %v1128, %v1127
    %v1143 = vpack.c.b16 %v1130, %v1129
    %v1144 = vpack.c.b16 %v1132, %v1131
    %v1145 = vpack.c.b16 %v1134, %v1133
    %v1146 = vpack.c.b16 %v1136, %v1135
    %v1147 = vpack.c.b16 %v1138, %v1137
    %v1148 = vpack.c.b16 %v1140, %v1139
    %1157 = vmatprep.subr.bf16.mxu0 0
    %1158 = vmatpush1.bf16.msra.mxu0 %v1141
    %1159 = vmatprep.subr.bf16.mxu0 0
    %1160 = vmatpush1.bf16.msra.mxu0 %v1142
    %1161 = vmatprep.subr.bf16.mxu0 0
    %1162 = vmatpush1.bf16.msra.mxu0 %v1143
    %1163 = vmatprep.subr.bf16.mxu0 0
    %1164 = vmatpush1.bf16.msra.mxu0 %v1144
    %1165 = vmatprep.subr.bf16.mxu0 0
    %1166 = vmatpush1.bf16.msra.mxu0 %v1145
    %1167 = vmatprep.subr.bf16.mxu0 0
    %1168 = vmatpush1.bf16.msra.mxu0 %v1146
    %1169 = vmatprep.subr.bf16.mxu0 0
    %1170 = vmatpush1.bf16.msra.mxu0 %v1147
    %1171 = vmatprep.subr.bf16.mxu0 0
    %1172 = vmatpush1.bf16.msra.mxu0 %v1148
    %1173 = vmatprep.subr.bf16.mxu0 0
    %1174 = vmatpush1.bf16.msra.mxu0 0
    %1175 = vmatprep.subr.bf16.mxu0 0
    %1176 = vmatpush1.bf16.msra.mxu0 0
    %1177 = vmatprep.subr.bf16.mxu0 0
    %1178 = vmatpush1.bf16.msra.mxu0 0
    %1179 = vmatprep.subr.bf16.mxu0 0
    %1180 = vmatpush1.bf16.msra.mxu0 0
    %1181 = vmatprep.subr.bf16.mxu0 0
    %1182 = vmatpush1.bf16.msra.mxu0 0
    %1183 = vmatprep.subr.bf16.mxu0 0
    %1184 = vmatpush1.bf16.msra.mxu0 0
    %1185 = vmatprep.subr.bf16.mxu0 0
    %1186 = vmatpush1.bf16.msra.mxu0 0
    %1187 = vmatprep.subr.bf16.mxu0 0
    %1188 = vmatpush1.bf16.msra.mxu0 0
    %1189 = vmatprep.mubr.bf16.mxu0 0
    %1190 = vmatmul.mubr.bf16.gmra.mrb[0].mxu0 %v1084
    %v1191 = vpop.f32.mrb[0].mxu0
    %v1192 = vadd.f32 0.0, %v1191
    %v1193 = vpop.f32.mrb[0].mxu0
    %v1194 = vpop.f32.mrb[0].mxu0
    %v1195 = vadd.f32 0.0, %v1194
    %v1196 = vpop.f32.mrb[0].mxu0
    %1197 = vmatprep.mubr.bf16.mxu0 0
    %1198 = vmatmul.mubr.bf16.gmra.mrb[0].mxu0 %v1085
    %v1199 = vpop.f32.mrb[0].mxu0
    %v1200 = vadd.f32 0.0, %v1199
    %v1201 = vpop.f32.mrb[0].mxu0
    %v1202 = vpop.f32.mrb[0].mxu0
    %v1203 = vadd.f32 0.0, %v1202
    %v1204 = vpop.f32.mrb[0].mxu0
    %1205 = vmatprep.mubr.bf16.mxu0 0
    %1206 = vmatmul.mubr.bf16.gmra.mrb[0].mxu0 %v1086
    %v1207 = vpop.f32.mrb[0].mxu0
    %v1208 = vadd.f32 0.0, %v1207
    %v1209 = vpop.f32.mrb[0].mxu0
    %v1210 = vpop.f32.mrb[0].mxu0
    %v1211 = vadd.f32 0.0, %v1210
    %v1212 = vpop.f32.mrb[0].mxu0
    %1213 = vmatprep.mubr.bf16.mxu0 0
    %1214 = vmatmul.mubr.bf16.gmra.mrb[0].mxu0 %v1087
    %v1215 = vpop.f32.mrb[0].mxu0
    %v1216 = vadd.f32 0.0, %v1215
    %v1217 = vpop.f32.mrb[0].mxu0
    %v1218 = vpop.f32.mrb[0].mxu0
    %v1219 = vadd.f32 0.0, %v1218
    %v1220 = vpop.f32.mrb[0].mxu0
    %1221 = vmatprep.mubr.bf16.mxu0 0
    %1222 = vmatmul.mubr.bf16.gmra.mrb[0].mxu0 %v1088
    %v1223 = vpop.f32.mrb[0].mxu0
    %v1224 = vadd.f32 0.0, %v1223
    %v1225 = vpop.f32.mrb[0].mxu0
    %v1226 = vpop.f32.mrb[0].mxu0
    %v1227 = vadd.f32 0.0, %v1226
    %v1228 = vpop.f32.mrb[0].mxu0
    %1229 = vmatprep.mubr.bf16.mxu0 0
    %1230 = vmatmul.mubr.bf16.gmra.mrb[0].mxu0 %v1089
    %v1231 = vpop.f32.mrb[0].mxu0
    %v1232 = vadd.f32 0.0, %v1231
    %v1233 = vpop.f32.mrb[0].mxu0
    %v1234 = vpop.f32.mrb[0].mxu0
    %v1235 = vadd.f32 0.0, %v1234
    %v1236 = vpop.f32.mrb[0].mxu0
    %1237 = vmatprep.mubr.bf16.mxu0 0
    %1238 = vmatmul.mubr.bf16.gmra.mrb[0].mxu0 %v1090
    %v1239 = vpop.f32.mrb[0].mxu0
    %v1240 = vadd.f32 0.0, %v1239
    %v1241 = vpop.f32.mrb[0].mxu0
    %v1242 = vpop.f32.mrb[0].mxu0
    %v1243 = vadd.f32 0.0, %v1242
    %v1244 = vpop.f32.mrb[0].mxu0
    %1245 = vmatprep.mubr.bf16.mxu0 0
    %1246 = vmatmul.mubr.bf16.gmra.mrb[0].mxu0 %v1091
    %v1247 = vpop.f32.mrb[0].mxu0
    %v1248 = vadd.f32 0.0, %v1247
    %v1249 = vpop.f32.mrb[0].mxu0
    %v1250 = vpop.f32.mrb[0].mxu0
    %v1251 = vadd.f32 0.0, %v1250
    %v1252 = vpop.f32.mrb[0].mxu0
    %1253 = vdwg.mxu0
    %v1270 = vunpack.c.l.b16 %v1052
    %v1271 = vunpack.c.l.b16 %v1053
    %v1272 = vunpack.c.l.b16 %v1054
    %v1273 = vunpack.c.l.b16 %v1055
    %v1274 = vunpack.c.l.b16 %v1056
    %v1275 = vunpack.c.l.b16 %v1057
    %v1276 = vunpack.c.l.b16 %v1058
    %v1277 = vunpack.c.l.b16 %v1059
    %v1278 = vunpack.c.l.b16 %v1060
    %v1279 = vunpack.c.l.b16 %v1061
    %v1280 = vunpack.c.l.b16 %v1062
    %v1281 = vunpack.c.l.b16 %v1063
    %v1282 = vunpack.c.l.b16 %v1064
    %v1283 = vunpack.c.l.b16 %v1065
    %v1284 = vunpack.c.l.b16 %v1066
    %v1285 = vunpack.c.l.b16 %v1067
    %v1286 = vpack.c.b16 %v1271, %v1270
    %v1287 = vpack.c.b16 %v1273, %v1272
    %v1288 = vpack.c.b16 %v1275, %v1274
    %v1289 = vpack.c.b16 %v1277, %v1276
    %v1290 = vpack.c.b16 %v1279, %v1278
    %v1291 = vpack.c.b16 %v1281, %v1280
    %v1292 = vpack.c.b16 %v1283, %v1282
    %v1293 = vpack.c.b16 %v1285, %v1284
    %1302 = vmatprep.subr.bf16.mxu0 0
    %1303 = vmatpush1.bf16.msra.mxu0 %v1286
    %1304 = vmatprep.subr.bf16.mxu0 0
    %1305 = vmatpush1.bf16.msra.mxu0 %v1287
    %1306 = vmatprep.subr.bf16.mxu0 0
    %1307 = vmatpush1.bf16.msra.mxu0 %v1288
    %1308 = vmatprep.subr.bf16.mxu0 0
    %1309 = vmatpush1.bf16.msra.mxu0 %v1289
    %1310 = vmatprep.subr.bf16.mxu0 0
    %1311 = vmatpush1.bf16.msra.mxu0 %v1290
    %1312 = vmatprep.subr.bf16.mxu0 0
    %1313 = vmatpush1.bf16.msra.mxu0 %v1291
    %1314 = vmatprep.subr.bf16.mxu0 0
    %1315 = vmatpush1.bf16.msra.mxu0 %v1292
    %1316 = vmatprep.subr.bf16.mxu0 0
    %1317 = vmatpush1.bf16.msra.mxu0 %v1293
    %1318 = vmatprep.subr.bf16.mxu0 0
    %1319 = vmatpush1.bf16.msra.mxu0 0
    %1320 = vmatprep.subr.bf16.mxu0 0
    %1321 = vmatpush1.bf16.msra.mxu0 0
    %1322 = vmatprep.subr.bf16.mxu0 0
    %1323 = vmatpush1.bf16.msra.mxu0 0
    %1324 = vmatprep.subr.bf16.mxu0 0
    %1325 = vmatpush1.bf16.msra.mxu0 0
    %1326 = vmatprep.subr.bf16.mxu0 0
    %1327 = vmatpush1.bf16.msra.mxu0 0
    %1328 = vmatprep.subr.bf16.mxu0 0
    %1329 = vmatpush1.bf16.msra.mxu0 0
    %1330 = vmatprep.subr.bf16.mxu0 0
    %1331 = vmatpush1.bf16.msra.mxu0 0
    %1332 = vmatprep.subr.bf16.mxu0 0
    %1333 = vmatpush1.bf16.msra.mxu0 0
    %1334 = vmatprep.mubr.bf16.mxu0 0
    %1335 = vmatmul.mubr.bf16.gmra.mrb[0].mxu0 %v1044
    %v1336 = vpop.f32.mrb[0].mxu0
    %v1337 = vadd.f32 %v1192, %v1336
    %v1338 = vpop.f32.mrb[0].mxu0
    %v1339 = vpop.f32.mrb[0].mxu0
    %v1340 = vadd.f32 %v1195, %v1339
    %v1341 = vpop.f32.mrb[0].mxu0
    %1342 = vmatprep.mubr.bf16.mxu0 0
    %1343 = vmatmul.mubr.bf16.gmra.mrb[0].mxu0 %v1045
    %v1344 = vpop.f32.mrb[0].mxu0
    %v1345 = vadd.f32 %v1200, %v1344
    %v1346 = vpop.f32.mrb[0].mxu0
    %v1347 = vpop.f32.mrb[0].mxu0
    %v1348 = vadd.f32 %v1203, %v1347
    %v1349 = vpop.f32.mrb[0].mxu0
    %1350 = vmatprep.mubr.bf16.mxu0 0
    %1351 = vmatmul.mubr.bf16.gmra.mrb[0].mxu0 %v1046
    %v1352 = vpop.f32.mrb[0].mxu0
    %v1353 = vadd.f32 %v1208, %v1352
    %v1354 = vpop.f32.mrb[0].mxu0
    %v1355 = vpop.f32.mrb[0].mxu0
    %v1356 = vadd.f32 %v1211, %v1355
    %v1357 = vpop.f32.mrb[0].mxu0
    %1358 = vmatprep.mubr.bf16.mxu0 0
    %1359 = vmatmul.mubr.bf16.gmra.mrb[0].mxu0 %v1047
    %v1360 = vpop.f32.mrb[0].mxu0
    %v1361 = vadd.f32 %v1216, %v1360
    %v1362 = vpop.f32.mrb[0].mxu0
    %v1363 = vpop.f32.mrb[0].mxu0
    %v1364 = vadd.f32 %v1219, %v1363
    %v1365 = vpop.f32.mrb[0].mxu0
    %1366 = vmatprep.mubr.bf16.mxu0 0
    %1367 = vmatmul.mubr.bf16.gmra.mrb[0].mxu0 %v1048
    %v1368 = vpop.f32.mrb[0].mxu0
    %v1369 = vadd.f32 %v1224, %v1368
    %v1370 = vpop.f32.mrb[0].mxu0
    %v1371 = vpop.f32.mrb[0].mxu0
    %v1372 = vadd.f32 %v1227, %v1371
    %v1373 = vpop.f32.mrb[0].mxu0
    %1374 = vmatprep.mubr.bf16.mxu0 0
    %1375 = vmatmul.mubr.bf16.gmra.mrb[0].mxu0 %v1049
    %v1376 = vpop.f32.mrb[0].mxu0
    %v1377 = vadd.f32 %v1232, %v1376
    %v1378 = vpop.f32.mrb[0].mxu0
    %v1379 = vpop.f32.mrb[0].mxu0
    %v1380 = vadd.f32 %v1235, %v1379
    %v1381 = vpop.f32.mrb[0].mxu0
    %1382 = vmatprep.mubr.bf16.mxu0 0
    %1383 = vmatmul.mubr.bf16.gmra.mrb[0].mxu0 %v1050
    %v1384 = vpop.f32.mrb[0].mxu0
    %v1385 = vadd.f32 %v1240, %v1384
    %v1386 = vpop.f32.mrb[0].mxu0
    %v1387 = vpop.f32.mrb[0].mxu0
    %v1388 = vadd.f32 %v1243, %v1387
    %v1389 = vpop.f32.mrb[0].mxu0
    %1390 = vmatprep.mubr.bf16.mxu0 0
    %1391 = vmatmul.mubr.bf16.gmra.mrb[0].mxu0 %v1051
    %v1392 = vpop.f32.mrb[0].mxu0
    %v1393 = vadd.f32 %v1248, %v1392
    %v1394 = vpop.f32.mrb[0].mxu0
    %v1395 = vpop.f32.mrb[0].mxu0
    %v1396 = vadd.f32 %v1251, %v1395
    %v1397 = vpop.f32.mrb[0].mxu0
    %1398 = vdwg.mxu0
    %v1399 = vld [vmem:[#allocation2 + $0x2] sm:$0xff]
    %v1400 = vld [vmem:[#allocation2 + $0xa] sm:$0xff]
    %v1401 = vld [vmem:[#allocation2 + $0x12] sm:$0xff]
    %v1402 = vld [vmem:[#allocation2 + $0x1a] sm:$0xff]
    %v1403 = vld [vmem:[#allocation2 + $0x22] sm:$0xff]
    %v1404 = vld [vmem:[#allocation2 + $0x2a] sm:$0xff]
    %v1405 = vld [vmem:[#allocation2 + $0x32] sm:$0xff]
    %v1406 = vld [vmem:[#allocation2 + $0x3a] sm:$0xff]
    %v1407 = vld [vmem:[#allocation2 + $0x42] sm:$0xff]
    %v1408 = vld [vmem:[#allocation2 + $0x4a] sm:$0xff]
    %v1409 = vld [vmem:[#allocation2 + $0x52] sm:$0xff]
    %v1410 = vld [vmem:[#allocation2 + $0x5a] sm:$0xff]
    %v1411 = vld [vmem:[#allocation2 + $0x62] sm:$0xff]
    %v1412 = vld [vmem:[#allocation2 + $0x6a] sm:$0xff]
    %v1413 = vld [vmem:[#allocation2 + $0x72] sm:$0xff]
    %v1414 = vld [vmem:[#allocation2 + $0x7a] sm:$0xff]
    %v1415 = vpack.c.bf16 %v1400, %v1399
    %v1416 = vpack.c.bf16 %v1402, %v1401
    %v1417 = vpack.c.bf16 %v1404, %v1403
    %v1418 = vpack.c.bf16 %v1406, %v1405
    %v1419 = vpack.c.bf16 %v1408, %v1407
    %v1420 = vpack.c.bf16 %v1410, %v1409
    %v1421 = vpack.c.bf16 %v1412, %v1411
    %v1422 = vpack.c.bf16 %v1414, %v1413
    %s1423 = scalar_lea.vmem [#allocation4], 128
    %v1424 = vld [vmem:[%s1423] sm:$0xf]
    %v1425 = vld [vmem:[%s1423 + $0x4] sm:$0xf]
    %v1426 = vld [vmem:[%s1423 + $0x8] sm:$0xf]
    %v1427 = vld [vmem:[%s1423 + $0xc] sm:$0xf]
    %v1428 = vld [vmem:[%s1423 + $0x10] sm:$0xf]
    %v1429 = vld [vmem:[%s1423 + $0x14] sm:$0xf]
    %v1430 = vld [vmem:[%s1423 + $0x18] sm:$0xf]
    %v1431 = vld [vmem:[%s1423 + $0x1c] sm:$0xf]
    %v1432 = vld [vmem:[%s1423 + $0x20] sm:$0xf]
    %v1433 = vld [vmem:[%s1423 + $0x24] sm:$0xf]
    %v1434 = vld [vmem:[%s1423 + $0x28] sm:$0xf]
    %v1435 = vld [vmem:[%s1423 + $0x2c] sm:$0xf]
    %v1436 = vld [vmem:[%s1423 + $0x30] sm:$0xf]
    %v1437 = vld [vmem:[%s1423 + $0x34] sm:$0xf]
    %v1438 = vld [vmem:[%s1423 + $0x38] sm:$0xf]
    %v1439 = vld [vmem:[%s1423 + $0x3c] sm:$0xf]
    %v1456 = vunpack.c.l.b16 %v1424
    %v1457 = vunpack.c.l.b16 %v1425
    %v1458 = vunpack.c.l.b16 %v1426
    %v1459 = vunpack.c.l.b16 %v1427
    %v1460 = vunpack.c.l.b16 %v1428
    %v1461 = vunpack.c.l.b16 %v1429
    %v1462 = vunpack.c.l.b16 %v1430
    %v1463 = vunpack.c.l.b16 %v1431
    %v1464 = vunpack.c.l.b16 %v1432
    %v1465 = vunpack.c.l.b16 %v1433
    %v1466 = vunpack.c.l.b16 %v1434
    %v1467 = vunpack.c.l.b16 %v1435
    %v1468 = vunpack.c.l.b16 %v1436
    %v1469 = vunpack.c.l.b16 %v1437
    %v1470 = vunpack.c.l.b16 %v1438
    %v1471 = vunpack.c.l.b16 %v1439
    %v1472 = vpack.c.b16 %v1457, %v1456
    %v1473 = vpack.c.b16 %v1459, %v1458
    %v1474 = vpack.c.b16 %v1461, %v1460
    %v1475 = vpack.c.b16 %v1463, %v1462
    %v1476 = vpack.c.b16 %v1465, %v1464
    %v1477 = vpack.c.b16 %v1467, %v1466
    %v1478 = vpack.c.b16 %v1469, %v1468
    %v1479 = vpack.c.b16 %v1471, %v1470
    %1488 = vmatprep.subr.bf16.mxu0 0
    %1489 = vmatpush1.bf16.msra.mxu0 %v1472
    %1490 = vmatprep.subr.bf16.mxu0 0
    %1491 = vmatpush1.bf16.msra.mxu0 %v1473
    %1492 = vmatprep.subr.bf16.mxu0 0
    %1493 = vmatpush1.bf16.msra.mxu0 %v1474
    %1494 = vmatprep.subr.bf16.mxu0 0
    %1495 = vmatpush1.bf16.msra.mxu0 %v1475
    %1496 = vmatprep.subr.bf16.mxu0 0
    %1497 = vmatpush1.bf16.msra.mxu0 %v1476
    %1498 = vmatprep.subr.bf16.mxu0 0
    %1499 = vmatpush1.bf16.msra.mxu0 %v1477
    %1500 = vmatprep.subr.bf16.mxu0 0
    %1501 = vmatpush1.bf16.msra.mxu0 %v1478
    %1502 = vmatprep.subr.bf16.mxu0 0
    %1503 = vmatpush1.bf16.msra.mxu0 %v1479
    %1504 = vmatprep.subr.bf16.mxu0 0
    %1505 = vmatpush1.bf16.msra.mxu0 0
    %1506 = vmatprep.subr.bf16.mxu0 0
    %1507 = vmatpush1.bf16.msra.mxu0 0
    %1508 = vmatprep.subr.bf16.mxu0 0
    %1509 = vmatpush1.bf16.msra.mxu0 0
    %1510 = vmatprep.subr.bf16.mxu0 0
    %1511 = vmatpush1.bf16.msra.mxu0 0
    %1512 = vmatprep.subr.bf16.mxu0 0
    %1513 = vmatpush1.bf16.msra.mxu0 0
    %1514 = vmatprep.subr.bf16.mxu0 0
    %1515 = vmatpush1.bf16.msra.mxu0 0
    %1516 = vmatprep.subr.bf16.mxu0 0
    %1517 = vmatpush1.bf16.msra.mxu0 0
    %1518 = vmatprep.subr.bf16.mxu0 0
    %1519 = vmatpush1.bf16.msra.mxu0 0
    %1520 = vmatprep.mubr.bf16.mxu0 0
    %1521 = vmatmul.mubr.bf16.gmra.mrb[0].mxu0 %v1415
    %v1522 = vpop.f32.mrb[0].mxu0
    %v1523 = vadd.f32 0.0, %v1522
    %v1524 = vpop.f32.mrb[0].mxu0
    %v1525 = vpop.f32.mrb[0].mxu0
    %v1526 = vadd.f32 0.0, %v1525
    %v1527 = vpop.f32.mrb[0].mxu0
    %1528 = vmatprep.mubr.bf16.mxu0 0
    %1529 = vmatmul.mubr.bf16.gmra.mrb[0].mxu0 %v1416
    %v1530 = vpop.f32.mrb[0].mxu0
    %v1531 = vadd.f32 0.0, %v1530
    %v1532 = vpop.f32.mrb[0].mxu0
    %v1533 = vpop.f32.mrb[0].mxu0
    %v1534 = vadd.f32 0.0, %v1533
    %v1535 = vpop.f32.mrb[0].mxu0
    %1536 = vmatprep.mubr.bf16.mxu0 0
    %1537 = vmatmul.mubr.bf16.gmra.mrb[0].mxu0 %v1417
    %v1538 = vpop.f32.mrb[0].mxu0
    %v1539 = vadd.f32 0.0, %v1538
    %v1540 = vpop.f32.mrb[0].mxu0
    %v1541 = vpop.f32.mrb[0].mxu0
    %v1542 = vadd.f32 0.0, %v1541
    %v1543 = vpop.f32.mrb[0].mxu0
    %1544 = vmatprep.mubr.bf16.mxu0 0
    %1545 = vmatmul.mubr.bf16.gmra.mrb[0].mxu0 %v1418
    %v1546 = vpop.f32.mrb[0].mxu0
    %v1547 = vadd.f32 0.0, %v1546
    %v1548 = vpop.f32.mrb[0].mxu0
    %v1549 = vpop.f32.mrb[0].mxu0
    %v1550 = vadd.f32 0.0, %v1549
    %v1551 = vpop.f32.mrb[0].mxu0
    %1552 = vmatprep.mubr.bf16.mxu0 0
    %1553 = vmatmul.mubr.bf16.gmra.mrb[0].mxu0 %v1419
    %v1554 = vpop.f32.mrb[0].mxu0
    %v1555 = vadd.f32 0.0, %v1554
    %v1556 = vpop.f32.mrb[0].mxu0
    %v1557 = vpop.f32.mrb[0].mxu0
    %v1558 = vadd.f32 0.0, %v1557
    %v1559 = vpop.f32.mrb[0].mxu0
    %1560 = vmatprep.mubr.bf16.mxu0 0
    %1561 = vmatmul.mubr.bf16.gmra.mrb[0].mxu0 %v1420
    %v1562 = vpop.f32.mrb[0].mxu0
    %v1563 = vadd.f32 0.0, %v1562
    %v1564 = vpop.f32.mrb[0].mxu0
    %v1565 = vpop.f32.mrb[0].mxu0
    %v1566 = vadd.f32 0.0, %v1565
    %v1567 = vpop.f32.mrb[0].mxu0
    %1568 = vmatprep.mubr.bf16.mxu0 0
    %1569 = vmatmul.mubr.bf16.gmra.mrb[0].mxu0 %v1421
    %v1570 = vpop.f32.mrb[0].mxu0
    %v1571 = vadd.f32 0.0, %v1570
    %v1572 = vpop.f32.mrb[0].mxu0
    %v1573 = vpop.f32.mrb[0].mxu0
    %v1574 = vadd.f32 0.0, %v1573
    %v1575 = vpop.f32.mrb[0].mxu0
    %1576 = vmatprep.mubr.bf16.mxu0 0
    %1577 = vmatmul.mubr.bf16.gmra.mrb[0].mxu0 %v1422
    %v1578 = vpop.f32.mrb[0].mxu0
    %v1579 = vadd.f32 0.0, %v1578
    %v1580 = vpop.f32.mrb[0].mxu0
    %v1581 = vpop.f32.mrb[0].mxu0
    %v1582 = vadd.f32 0.0, %v1581
    %v1583 = vpop.f32.mrb[0].mxu0
    %1584 = vdwg.mxu0
    %v1585 = vadd.f32 %v1337, %v1523
    %v1586 = vadd.f32 %v1340, %v1526
    %v1587 = vadd.f32 %v1345, %v1531
    %v1588 = vadd.f32 %v1348, %v1534
    %v1589 = vadd.f32 %v1353, %v1539
    %v1590 = vadd.f32 %v1356, %v1542
    %v1591 = vadd.f32 %v1361, %v1547
    %v1592 = vadd.f32 %v1364, %v1550
    %v1593 = vadd.f32 %v1369, %v1555
    %v1594 = vadd.f32 %v1372, %v1558
    %v1595 = vadd.f32 %v1377, %v1563
    %v1596 = vadd.f32 %v1380, %v1566
    %v1597 = vadd.f32 %v1385, %v1571
    %v1598 = vadd.f32 %v1388, %v1574
    %v1599 = vadd.f32 %v1393, %v1579
    %v1600 = vadd.f32 %v1396, %v1582
    %v1601 = vld [vmem:[#allocation2 + $0x3] sm:$0xff]
    %v1602 = vld [vmem:[#allocation2 + $0xb] sm:$0xff]
    %v1603 = vld [vmem:[#allocation2 + $0x13] sm:$0xff]
    %v1604 = vld [vmem:[#allocation2 + $0x1b] sm:$0xff]
    %v1605 = vld [vmem:[#allocation2 + $0x23] sm:$0xff]
    %v1606 = vld [vmem:[#allocation2 + $0x2b] sm:$0xff]
    %v1607 = vld [vmem:[#allocation2 + $0x33] sm:$0xff]
    %v1608 = vld [vmem:[#allocation2 + $0x3b] sm:$0xff]
    %v1609 = vld [vmem:[#allocation2 + $0x43] sm:$0xff]
    %v1610 = vld [vmem:[#allocation2 + $0x4b] sm:$0xff]
    %v1611 = vld [vmem:[#allocation2 + $0x53] sm:$0xff]
    %v1612 = vld [vmem:[#allocation2 + $0x5b] sm:$0xff]
    %v1613 = vld [vmem:[#allocation2 + $0x63] sm:$0xff]
    %v1614 = vld [vmem:[#allocation2 + $0x6b] sm:$0xff]
    %v1615 = vld [vmem:[#allocation2 + $0x73] sm:$0xff]
    %v1616 = vld [vmem:[#allocation2 + $0x7b] sm:$0xff]
    %v1617 = vpack.c.bf16 %v1602, %v1601
    %v1618 = vpack.c.bf16 %v1604, %v1603
    %v1619 = vpack.c.bf16 %v1606, %v1605
    %v1620 = vpack.c.bf16 %v1608, %v1607
    %v1621 = vpack.c.bf16 %v1610, %v1609
    %v1622 = vpack.c.bf16 %v1612, %v1611
    %v1623 = vpack.c.bf16 %v1614, %v1613
    %v1624 = vpack.c.bf16 %v1616, %v1615
    %s1625 = scalar_lea.vmem [#allocation4], 192
    %v1626 = vld [vmem:[%s1625] sm:$0xf]
    %v1627 = vld [vmem:[%s1625 + $0x4] sm:$0xf]
    %v1628 = vld [vmem:[%s1625 + $0x8] sm:$0xf]
    %v1629 = vld [vmem:[%s1625 + $0xc] sm:$0xf]
    %v1630 = vld [vmem:[%s1625 + $0x10] sm:$0xf]
    %v1631 = vld [vmem:[%s1625 + $0x14] sm:$0xf]
    %v1632 = vld [vmem:[%s1625 + $0x18] sm:$0xf]
    %v1633 = vld [vmem:[%s1625 + $0x1c] sm:$0xf]
    %v1634 = vld [vmem:[%s1625 + $0x20] sm:$0xf]
    %v1635 = vld [vmem:[%s1625 + $0x24] sm:$0xf]
    %v1636 = vld [vmem:[%s1625 + $0x28] sm:$0xf]
    %v1637 = vld [vmem:[%s1625 + $0x2c] sm:$0xf]
    %v1638 = vld [vmem:[%s1625 + $0x30] sm:$0xf]
    %v1639 = vld [vmem:[%s1625 + $0x34] sm:$0xf]
    %v1640 = vld [vmem:[%s1625 + $0x38] sm:$0xf]
    %v1641 = vld [vmem:[%s1625 + $0x3c] sm:$0xf]
    %v1658 = vunpack.c.l.b16 %v1626
    %v1659 = vunpack.c.l.b16 %v1627
    %v1660 = vunpack.c.l.b16 %v1628
    %v1661 = vunpack.c.l.b16 %v1629
    %v1662 = vunpack.c.l.b16 %v1630
    %v1663 = vunpack.c.l.b16 %v1631
    %v1664 = vunpack.c.l.b16 %v1632
    %v1665 = vunpack.c.l.b16 %v1633
    %v1666 = vunpack.c.l.b16 %v1634
    %v1667 = vunpack.c.l.b16 %v1635
    %v1668 = vunpack.c.l.b16 %v1636
    %v1669 = vunpack.c.l.b16 %v1637
    %v1670 = vunpack.c.l.b16 %v1638
    %v1671 = vunpack.c.l.b16 %v1639
    %v1672 = vunpack.c.l.b16 %v1640
    %v1673 = vunpack.c.l.b16 %v1641
    %v1674 = vpack.c.b16 %v1659, %v1658
    %v1675 = vpack.c.b16 %v1661, %v1660
    %v1676 = vpack.c.b16 %v1663, %v1662
    %v1677 = vpack.c.b16 %v1665, %v1664
    %v1678 = vpack.c.b16 %v1667, %v1666
    %v1679 = vpack.c.b16 %v1669, %v1668
    %v1680 = vpack.c.b16 %v1671, %v1670
    %v1681 = vpack.c.b16 %v1673, %v1672
    %1690 = vmatprep.subr.bf16.mxu0 0
    %1691 = vmatpush1.bf16.msra.mxu0 %v1674
    %1692 = vmatprep.subr.bf16.mxu0 0
    %1693 = vmatpush1.bf16.msra.mxu0 %v1675
    %1694 = vmatprep.subr.bf16.mxu0 0
    %1695 = vmatpush1.bf16.msra.mxu0 %v1676
    %1696 = vmatprep.subr.bf16.mxu0 0
    %1697 = vmatpush1.bf16.msra.mxu0 %v1677
    %1698 = vmatprep.subr.bf16.mxu0 0
    %1699 = vmatpush1.bf16.msra.mxu0 %v1678
    %1700 = vmatprep.subr.bf16.mxu0 0
    %1701 = vmatpush1.bf16.msra.mxu0 %v1679
    %1702 = vmatprep.subr.bf16.mxu0 0
    %1703 = vmatpush1.bf16.msra.mxu0 %v1680
    %1704 = vmatprep.subr.bf16.mxu0 0
    %1705 = vmatpush1.bf16.msra.mxu0 %v1681
    %1706 = vmatprep.subr.bf16.mxu0 0
    %1707 = vmatpush1.bf16.msra.mxu0 0
    %1708 = vmatprep.subr.bf16.mxu0 0
    %1709 = vmatpush1.bf16.msra.mxu0 0
    %1710 = vmatprep.subr.bf16.mxu0 0
    %1711 = vmatpush1.bf16.msra.mxu0 0
    %1712 = vmatprep.subr.bf16.mxu0 0
    %1713 = vmatpush1.bf16.msra.mxu0 0
    %1714 = vmatprep.subr.bf16.mxu0 0
    %1715 = vmatpush1.bf16.msra.mxu0 0
    %1716 = vmatprep.subr.bf16.mxu0 0
    %1717 = vmatpush1.bf16.msra.mxu0 0
    %1718 = vmatprep.subr.bf16.mxu0 0
    %1719 = vmatpush1.bf16.msra.mxu0 0
    %1720 = vmatprep.subr.bf16.mxu0 0
    %1721 = vmatpush1.bf16.msra.mxu0 0
    %1722 = vmatprep.mubr.bf16.mxu0 0
    %1723 = vmatmul.mubr.bf16.gmra.mrb[0].mxu0 %v1617
    %v1724 = vpop.f32.mrb[0].mxu0
    %v1725 = vadd.f32 0.0, %v1724
    %v1726 = vpop.f32.mrb[0].mxu0
    %v1727 = vpop.f32.mrb[0].mxu0
    %v1728 = vadd.f32 0.0, %v1727
    %v1729 = vpop.f32.mrb[0].mxu0
    %1730 = vmatprep.mubr.bf16.mxu0 0
    %1731 = vmatmul.mubr.bf16.gmra.mrb[0].mxu0 %v1618
    %v1732 = vpop.f32.mrb[0].mxu0
    %v1733 = vadd.f32 0.0, %v1732
    %v1734 = vpop.f32.mrb[0].mxu0
    %v1735 = vpop.f32.mrb[0].mxu0
    %v1736 = vadd.f32 0.0, %v1735
    %v1737 = vpop.f32.mrb[0].mxu0
    %1738 = vmatprep.mubr.bf16.mxu0 0
    %1739 = vmatmul.mubr.bf16.gmra.mrb[0].mxu0 %v1619
    %v1740 = vpop.f32.mrb[0].mxu0
    %v1741 = vadd.f32 0.0, %v1740
    %v1742 = vpop.f32.mrb[0].mxu0
    %v1743 = vpop.f32.mrb[0].mxu0
    %v1744 = vadd.f32 0.0, %v1743
    %v1745 = vpop.f32.mrb[0].mxu0
    %1746 = vmatprep.mubr.bf16.mxu0 0
    %1747 = vmatmul.mubr.bf16.gmra.mrb[0].mxu0 %v1620
    %v1748 = vpop.f32.mrb[0].mxu0
    %v1749 = vadd.f32 0.0, %v1748
    %v1750 = vpop.f32.mrb[0].mxu0
    %v1751 = vpop.f32.mrb[0].mxu0
    %v1752 = vadd.f32 0.0, %v1751
    %v1753 = vpop.f32.mrb[0].mxu0
    %1754 = vmatprep.mubr.bf16.mxu0 0
    %1755 = vmatmul.mubr.bf16.gmra.mrb[0].mxu0 %v1621
    %v1756 = vpop.f32.mrb[0].mxu0
    %v1757 = vadd.f32 0.0, %v1756
    %v1758 = vpop.f32.mrb[0].mxu0
    %v1759 = vpop.f32.mrb[0].mxu0
    %v1760 = vadd.f32 0.0, %v1759
    %v1761 = vpop.f32.mrb[0].mxu0
    %1762 = vmatprep.mubr.bf16.mxu0 0
    %1763 = vmatmul.mubr.bf16.gmra.mrb[0].mxu0 %v1622
    %v1764 = vpop.f32.mrb[0].mxu0
    %v1765 = vadd.f32 0.0, %v1764
    %v1766 = vpop.f32.mrb[0].mxu0
    %v1767 = vpop.f32.mrb[0].mxu0
    %v1768 = vadd.f32 0.0, %v1767
    %v1769 = vpop.f32.mrb[0].mxu0
    %1770 = vmatprep.mubr.bf16.mxu0 0
    %1771 = vmatmul.mubr.bf16.gmra.mrb[0].mxu0 %v1623
    %v1772 = vpop.f32.mrb[0].mxu0
    %v1773 = vadd.f32 0.0, %v1772
    %v1774 = vpop.f32.mrb[0].mxu0
    %v1775 = vpop.f32.mrb[0].mxu0
    %v1776 = vadd.f32 0.0, %v1775
    %v1777 = vpop.f32.mrb[0].mxu0
    %1778 = vmatprep.mubr.bf16.mxu0 0
    %1779 = vmatmul.mubr.bf16.gmra.mrb[0].mxu0 %v1624
    %v1780 = vpop.f32.mrb[0].mxu0
    %v1781 = vadd.f32 0.0, %v1780
    %v1782 = vpop.f32.mrb[0].mxu0
    %v1783 = vpop.f32.mrb[0].mxu0
    %v1784 = vadd.f32 0.0, %v1783
    %v1785 = vpop.f32.mrb[0].mxu0
    %1786 = vdwg.mxu0
    %v1787 = vadd.f32 %v1585, %v1725
    %v1788 = vadd.f32 %v1586, %v1728
    %v1789 = vadd.f32 %v1587, %v1733
    %v1790 = vadd.f32 %v1588, %v1736
    %v1791 = vadd.f32 %v1589, %v1741
    %v1792 = vadd.f32 %v1590, %v1744
    %v1793 = vadd.f32 %v1591, %v1749
    %v1794 = vadd.f32 %v1592, %v1752
    %v1795 = vadd.f32 %v1593, %v1757
    %v1796 = vadd.f32 %v1594, %v1760
    %v1797 = vadd.f32 %v1595, %v1765
    %v1798 = vadd.f32 %v1596, %v1768
    %v1799 = vadd.f32 %v1597, %v1773
    %v1800 = vadd.f32 %v1598, %v1776
    %v1801 = vadd.f32 %v1599, %v1781
    %v1802 = vadd.f32 %v1600, %v1784
    %v1803 = vld [vmem:[#allocation2 + $0x4] sm:$0xff]
    %v1804 = vld [vmem:[#allocation2 + $0xc] sm:$0xff]
    %v1805 = vld [vmem:[#allocation2 + $0x14] sm:$0xff]
    %v1806 = vld [vmem:[#allocation2 + $0x1c] sm:$0xff]
    %v1807 = vld [vmem:[#allocation2 + $0x24] sm:$0xff]
    %v1808 = vld [vmem:[#allocation2 + $0x2c] sm:$0xff]
    %v1809 = vld [vmem:[#allocation2 + $0x34] sm:$0xff]
    %v1810 = vld [vmem:[#allocation2 + $0x3c] sm:$0xff]
    %v1811 = vld [vmem:[#allocation2 + $0x44] sm:$0xff]
    %v1812 = vld [vmem:[#allocation2 + $0x4c] sm:$0xff]
    %v1813 = vld [vmem:[#allocation2 + $0x54] sm:$0xff]
    %v1814 = vld [vmem:[#allocation2 + $0x5c] sm:$0xff]
    %v1815 = vld [vmem:[#allocation2 + $0x64] sm:$0xff]
    %v1816 = vld [vmem:[#allocation2 + $0x6c] sm:$0xff]
    %v1817 = vld [vmem:[#allocation2 + $0x74] sm:$0xff]
    %v1818 = vld [vmem:[#allocation2 + $0x7c] sm:$0xff]
    %v1819 = vpack.c.bf16 %v1804, %v1803
    %v1820 = vpack.c.bf16 %v1806, %v1805
    %v1821 = vpack.c.bf16 %v1808, %v1807
    %v1822 = vpack.c.bf16 %v1810, %v1809
    %v1823 = vpack.c.bf16 %v1812, %v1811
    %v1824 = vpack.c.bf16 %v1814, %v1813
    %v1825 = vpack.c.bf16 %v1816, %v1815
    %v1826 = vpack.c.bf16 %v1818, %v1817
    %s1827 = scalar_lea.vmem [#allocation4], 256
    %v1828 = vld [vmem:[%s1827] sm:$0xf]
    %v1829 = vld [vmem:[%s1827 + $0x4] sm:$0xf]
    %v1830 = vld [vmem:[%s1827 + $0x8] sm:$0xf]
    %v1831 = vld [vmem:[%s1827 + $0xc] sm:$0xf]
    %v1832 = vld [vmem:[%s1827 + $0x10] sm:$0xf]
    %v1833 = vld [vmem:[%s1827 + $0x14] sm:$0xf]
    %v1834 = vld [vmem:[%s1827 + $0x18] sm:$0xf]
    %v1835 = vld [vmem:[%s1827 + $0x1c] sm:$0xf]
    %v1836 = vld [vmem:[%s1827 + $0x20] sm:$0xf]
    %v1837 = vld [vmem:[%s1827 + $0x24] sm:$0xf]
    %v1838 = vld [vmem:[%s1827 + $0x28] sm:$0xf]
    %v1839 = vld [vmem:[%s1827 + $0x2c] sm:$0xf]
    %v1840 = vld [vmem:[%s1827 + $0x30] sm:$0xf]
    %v1841 = vld [vmem:[%s1827 + $0x34] sm:$0xf]
    %v1842 = vld [vmem:[%s1827 + $0x38] sm:$0xf]
    %v1843 = vld [vmem:[%s1827 + $0x3c] sm:$0xf]
    %v1860 = vunpack.c.l.b16 %v1828
    %v1861 = vunpack.c.l.b16 %v1829
    %v1862 = vunpack.c.l.b16 %v1830
    %v1863 = vunpack.c.l.b16 %v1831
    %v1864 = vunpack.c.l.b16 %v1832
    %v1865 = vunpack.c.l.b16 %v1833
    %v1866 = vunpack.c.l.b16 %v1834
    %v1867 = vunpack.c.l.b16 %v1835
    %v1868 = vunpack.c.l.b16 %v1836
    %v1869 = vunpack.c.l.b16 %v1837
    %v1870 = vunpack.c.l.b16 %v1838
    %v1871 = vunpack.c.l.b16 %v1839
    %v1872 = vunpack.c.l.b16 %v1840
    %v1873 = vunpack.c.l.b16 %v1841
    %v1874 = vunpack.c.l.b16 %v1842
    %v1875 = vunpack.c.l.b16 %v1843
    %v1876 = vpack.c.b16 %v1861, %v1860
    %v1877 = vpack.c.b16 %v1863, %v1862
    %v1878 = vpack.c.b16 %v1865, %v1864
    %v1879 = vpack.c.b16 %v1867, %v1866
    %v1880 = vpack.c.b16 %v1869, %v1868
    %v1881 = vpack.c.b16 %v1871, %v1870
    %v1882 = vpack.c.b16 %v1873, %v1872
    %v1883 = vpack.c.b16 %v1875, %v1874
    %1892 = vmatprep.subr.bf16.mxu0 0
    %1893 = vmatpush1.bf16.msra.mxu0 %v1876
    %1894 = vmatprep.subr.bf16.mxu0 0
    %1895 = vmatpush1.bf16.msra.mxu0 %v1877
    %1896 = vmatprep.subr.bf16.mxu0 0
    %1897 = vmatpush1.bf16.msra.mxu0 %v1878
    %1898 = vmatprep.subr.bf16.mxu0 0
    %1899 = vmatpush1.bf16.msra.mxu0 %v1879
    %1900 = vmatprep.subr.bf16.mxu0 0
    %1901 = vmatpush1.bf16.msra.mxu0 %v1880
    %1902 = vmatprep.subr.bf16.mxu0 0
    %1903 = vmatpush1.bf16.msra.mxu0 %v1881
    %1904 = vmatprep.subr.bf16.mxu0 0
    %1905 = vmatpush1.bf16.msra.mxu0 %v1882
    %1906 = vmatprep.subr.bf16.mxu0 0
    %1907 = vmatpush1.bf16.msra.mxu0 %v1883
    %1908 = vmatprep.subr.bf16.mxu0 0
    %1909 = vmatpush1.bf16.msra.mxu0 0
    %1910 = vmatprep.subr.bf16.mxu0 0
    %1911 = vmatpush1.bf16.msra.mxu0 0
    %1912 = vmatprep.subr.bf16.mxu0 0
    %1913 = vmatpush1.bf16.msra.mxu0 0
    %1914 = vmatprep.subr.bf16.mxu0 0
    %1915 = vmatpush1.bf16.msra.mxu0 0
    %1916 = vmatprep.subr.bf16.mxu0 0
    %1917 = vmatpush1.bf16.msra.mxu0 0
    %1918 = vmatprep.subr.bf16.mxu0 0
    %1919 = vmatpush1.bf16.msra.mxu0 0
    %1920 = vmatprep.subr.bf16.mxu0 0
    %1921 = vmatpush1.bf16.msra.mxu0 0
    %1922 = vmatprep.subr.bf16.mxu0 0
    %1923 = vmatpush1.bf16.msra.mxu0 0
    %1924 = vmatprep.mubr.bf16.mxu0 0
    %1925 = vmatmul.mubr.bf16.gmra.mrb[0].mxu0 %v1819
    %v1926 = vpop.f32.mrb[0].mxu0
    %v1927 = vadd.f32 0.0, %v1926
    %v1928 = vpop.f32.mrb[0].mxu0
    %v1929 = vpop.f32.mrb[0].mxu0
    %v1930 = vadd.f32 0.0, %v1929
    %v1931 = vpop.f32.mrb[0].mxu0
    %1932 = vmatprep.mubr.bf16.mxu0 0
    %1933 = vmatmul.mubr.bf16.gmra.mrb[0].mxu0 %v1820
    %v1934 = vpop.f32.mrb[0].mxu0
    %v1935 = vadd.f32 0.0, %v1934
    %v1936 = vpop.f32.mrb[0].mxu0
    %v1937 = vpop.f32.mrb[0].mxu0
    %v1938 = vadd.f32 0.0, %v1937
    %v1939 = vpop.f32.mrb[0].mxu0
    %1940 = vmatprep.mubr.bf16.mxu0 0
    %1941 = vmatmul.mubr.bf16.gmra.mrb[0].mxu0 %v1821
    %v1942 = vpop.f32.mrb[0].mxu0
    %v1943 = vadd.f32 0.0, %v1942
    %v1944 = vpop.f32.mrb[0].mxu0
    %v1945 = vpop.f32.mrb[0].mxu0
    %v1946 = vadd.f32 0.0, %v1945
    %v1947 = vpop.f32.mrb[0].mxu0
    %1948 = vmatprep.mubr.bf16.mxu0 0
    %1949 = vmatmul.mubr.bf16.gmra.mrb[0].mxu0 %v1822
    %v1950 = vpop.f32.mrb[0].mxu0
    %v1951 = vadd.f32 0.0, %v1950
    %v1952 = vpop.f32.mrb[0].mxu0
    %v1953 = vpop.f32.mrb[0].mxu0
    %v1954 = vadd.f32 0.0, %v1953
    %v1955 = vpop.f32.mrb[0].mxu0
    %1956 = vmatprep.mubr.bf16.mxu0 0
    %1957 = vmatmul.mubr.bf16.gmra.mrb[0].mxu0 %v1823
    %v1958 = vpop.f32.mrb[0].mxu0
    %v1959 = vadd.f32 0.0, %v1958
    %v1960 = vpop.f32.mrb[0].mxu0
    %v1961 = vpop.f32.mrb[0].mxu0
    %v1962 = vadd.f32 0.0, %v1961
    %v1963 = vpop.f32.mrb[0].mxu0
    %1964 = vmatprep.mubr.bf16.mxu0 0
    %1965 = vmatmul.mubr.bf16.gmra.mrb[0].mxu0 %v1824
    %v1966 = vpop.f32.mrb[0].mxu0
    %v1967 = vadd.f32 0.0, %v1966
    %v1968 = vpop.f32.mrb[0].mxu0
    %v1969 = vpop.f32.mrb[0].mxu0
    %v1970 = vadd.f32 0.0, %v1969
    %v1971 = vpop.f32.mrb[0].mxu0
    %1972 = vmatprep.mubr.bf16.mxu0 0
    %1973 = vmatmul.mubr.bf16.gmra.mrb[0].mxu0 %v1825
    %v1974 = vpop.f32.mrb[0].mxu0
    %v1975 = vadd.f32 0.0, %v1974
    %v1976 = vpop.f32.mrb[0].mxu0
    %v1977 = vpop.f32.mrb[0].mxu0
    %v1978 = vadd.f32 0.0, %v1977
    %v1979 = vpop.f32.mrb[0].mxu0
    %1980 = vmatprep.mubr.bf16.mxu0 0
    %1981 = vmatmul.mubr.bf16.gmra.mrb[0].mxu0 %v1826
    %v1982 = vpop.f32.mrb[0].mxu0
    %v1983 = vadd.f32 0.0, %v1982
    %v1984 = vpop.f32.mrb[0].mxu0
    %v1985 = vpop.f32.mrb[0].mxu0
    %v1986 = vadd.f32 0.0, %v1985
    %v1987 = vpop.f32.mrb[0].mxu0
    %1988 = vdwg.mxu0
    %v1989 = vadd.f32 %v1787, %v1927
    %v1990 = vadd.f32 %v1788, %v1930
    %v1991 = vadd.f32 %v1789, %v1935
    %v1992 = vadd.f32 %v1790, %v1938
    %v1993 = vadd.f32 %v1791, %v1943
    %v1994 = vadd.f32 %v1792, %v1946
    %v1995 = vadd.f32 %v1793, %v1951
    %v1996 = vadd.f32 %v1794, %v1954
    %v1997 = vadd.f32 %v1795, %v1959
    %v1998 = vadd.f32 %v1796, %v1962
    %v1999 = vadd.f32 %v1797, %v1967
    %v2000 = vadd.f32 %v1798, %v1970
    %v2001 = vadd.f32 %v1799, %v1975
    %v2002 = vadd.f32 %v1800, %v1978
    %v2003 = vadd.f32 %v1801, %v1983
    %v2004 = vadd.f32 %v1802, %v1986
    %v2005 = vlaneseq
    %v2006 = vshrl.u32 %v2005, 7
    %v2007 = vsub.s32 0, %v2006
    %v2008 = vrot.slane %v1027, %v2007
    %v2009 = vadd.f32 %v1989, %v2008
    %v2010 = vadd.f32 %v1990, %v2008
    %v2011 = vadd.f32 %v1991, %v2008
    %v2012 = vadd.f32 %v1992, %v2008
    %v2013 = vadd.f32 %v1993, %v2008
    %v2014 = vadd.f32 %v1994, %v2008
    %v2015 = vadd.f32 %v1995, %v2008
    %v2016 = vadd.f32 %v1996, %v2008
    %v2017 = vadd.f32 %v1997, %v2008
    %v2018 = vadd.f32 %v1998, %v2008
    %v2019 = vadd.f32 %v1999, %v2008
    %v2020 = vadd.f32 %v2000, %v2008
    %v2021 = vadd.f32 %v2001, %v2008
    %v2022 = vadd.f32 %v2002, %v2008
    %v2023 = vadd.f32 %v2003, %v2008
    %v2024 = vadd.f32 %v2004, %v2008
    %v2025 = vmax.f32 %v2009, 0.0
    %v2026 = vmax.f32 %v2010, 0.0
    %v2027 = vmax.f32 %v2011, 0.0
    %v2028 = vmax.f32 %v2012, 0.0
    %v2029 = vmax.f32 %v2013, 0.0
    %v2030 = vmax.f32 %v2014, 0.0
    %v2031 = vmax.f32 %v2015, 0.0
    %v2032 = vmax.f32 %v2016, 0.0
    %v2033 = vmax.f32 %v2017, 0.0
    %v2034 = vmax.f32 %v2018, 0.0
    %v2035 = vmax.f32 %v2019, 0.0
    %v2036 = vmax.f32 %v2020, 0.0
    %v2037 = vmax.f32 %v2021, 0.0
    %v2038 = vmax.f32 %v2022, 0.0
    %v2039 = vmax.f32 %v2023, 0.0
    %v2040 = vmax.f32 %v2024, 0.0
    %vm2041 = vcmp.lt.s32.totalorder %v244, 12
    %vm2042 = vcmp.lt.s32.totalorder %v245, 12
    %vm2043 = vcmp.lt.s32.totalorder %v246, 12
    %vm2044 = vcmp.lt.s32.totalorder %v247, 12
    %vm2045 = vcmp.lt.s32.totalorder %v248, 12
    %vm2046 = vcmp.lt.s32.totalorder %v249, 12
    %vm2047 = vcmp.lt.s32.totalorder %v250, 12
    %vm2048 = vcmp.lt.s32.totalorder %v251, 12
    %vm2049 = vcmp.lt.s32.totalorder %v252, 12
    %vm2050 = vcmp.lt.s32.totalorder %v253, 12
    %vm2051 = vcmp.lt.s32.totalorder %v254, 12
    %vm2052 = vcmp.lt.s32.totalorder %v255, 12
    %vm2053 = vcmp.lt.s32.totalorder %v256, 12
    %vm2054 = vcmp.lt.s32.totalorder %v257, 12
    %vm2055 = vcmp.lt.s32.totalorder %v258, 12
    %vm2056 = vcmp.lt.s32.totalorder %v259, 12
    %v2057 = vsel %vm2041, 1, 0
    %v2058 = vsel %vm2042, 1, 0
    %v2059 = vsel %vm2043, 1, 0
    %v2060 = vsel %vm2044, 1, 0
    %v2061 = vsel %vm2045, 1, 0
    %v2062 = vsel %vm2046, 1, 0
    %v2063 = vsel %vm2047, 1, 0
    %v2064 = vsel %vm2048, 1, 0
    %v2065 = vsel %vm2049, 1, 0
    %v2066 = vsel %vm2050, 1, 0
    %v2067 = vsel %vm2051, 1, 0
    %v2068 = vsel %vm2052, 1, 0
    %v2069 = vsel %vm2053, 1, 0
    %v2070 = vsel %vm2054, 1, 0
    %v2071 = vsel %vm2055, 1, 0
    %v2072 = vsel %vm2056, 1, 0
    %vm2073 = vcmp.eq.s32.totalorder %v2057, 1
    %vm2074 = vcmp.eq.s32.totalorder %v2058, 1
    %vm2075 = vcmp.eq.s32.totalorder %v2059, 1
    %vm2076 = vcmp.eq.s32.totalorder %v2060, 1
    %vm2077 = vcmp.eq.s32.totalorder %v2061, 1
    %vm2078 = vcmp.eq.s32.totalorder %v2062, 1
    %vm2079 = vcmp.eq.s32.totalorder %v2063, 1
    %vm2080 = vcmp.eq.s32.totalorder %v2064, 1
    %vm2081 = vcmp.eq.s32.totalorder %v2065, 1
    %vm2082 = vcmp.eq.s32.totalorder %v2066, 1
    %vm2083 = vcmp.eq.s32.totalorder %v2067, 1
    %vm2084 = vcmp.eq.s32.totalorder %v2068, 1
    %vm2085 = vcmp.eq.s32.totalorder %v2069, 1
    %vm2086 = vcmp.eq.s32.totalorder %v2070, 1
    %vm2087 = vcmp.eq.s32.totalorder %v2071, 1
    %vm2088 = vcmp.eq.s32.totalorder %v2072, 1
    %v2089 = vsel %vm2073, %v2025, 0.0
    %v2090 = vsel %vm2074, %v2026, 0.0
    %v2091 = vsel %vm2075, %v2027, 0.0
    %v2092 = vsel %vm2076, %v2028, 0.0
    %v2093 = vsel %vm2077, %v2029, 0.0
    %v2094 = vsel %vm2078, %v2030, 0.0
    %v2095 = vsel %vm2079, %v2031, 0.0
    %v2096 = vsel %vm2080, %v2032, 0.0
    %v2097 = vsel %vm2081, %v2033, 0.0
    %v2098 = vsel %vm2082, %v2034, 0.0
    %v2099 = vsel %vm2083, %v2035, 0.0
    %v2100 = vsel %vm2084, %v2036, 0.0
    %v2101 = vsel %vm2085, %v2037, 0.0
    %v2102 = vsel %vm2086, %v2038, 0.0
    %v2103 = vsel %vm2087, %v2039, 0.0
    %v2104 = vsel %vm2088, %v2040, 0.0
    %2105 = vst [vmem:[#allocation2] sm:$0xff] %v2089
    %2106 = vst [vmem:[#allocation2 + $0x8] sm:$0xff] %v2090
    %2107 = vst [vmem:[#allocation2 + $0x10] sm:$0xff] %v2091
    %2108 = vst [vmem:[#allocation2 + $0x18] sm:$0xff] %v2092
    %2109 = vst [vmem:[#allocation2 + $0x20] sm:$0xff] %v2093
    %2110 = vst [vmem:[#allocation2 + $0x28] sm:$0xff] %v2094
    %2111 = vst [vmem:[#allocation2 + $0x30] sm:$0xff] %v2095
    %2112 = vst [vmem:[#allocation2 + $0x38] sm:$0xff] %v2096
    %2113 = vst [vmem:[#allocation2 + $0x40] sm:$0xff] %v2097
    %2114 = vst [vmem:[#allocation2 + $0x48] sm:$0xff] %v2098
    %2115 = vst [vmem:[#allocation2 + $0x50] sm:$0xff] %v2099
    %2116 = vst [vmem:[#allocation2 + $0x58] sm:$0xff] %v2100
    %2117 = vst [vmem:[#allocation2 + $0x60] sm:$0xff] %v2101
    %2118 = vst [vmem:[#allocation2 + $0x68] sm:$0xff] %v2102
    %2119 = vst [vmem:[#allocation2 + $0x70] sm:$0xff] %v2103
    %2120 = vst [vmem:[#allocation2 + $0x78] sm:$0xff] %v2104
    %v2121 = vld [vmem:[%s4 + $0x2] sm:$0x1]
    %v2122 = vld [vmem:[#allocation2] sm:$0xff]
    %v2123 = vld [vmem:[#allocation2 + $0x8] sm:$0xff]
    %v2124 = vld [vmem:[#allocation2 + $0x10] sm:$0xff]
    %v2125 = vld [vmem:[#allocation2 + $0x18] sm:$0xff]
    %v2126 = vld [vmem:[#allocation2 + $0x20] sm:$0xff]
    %v2127 = vld [vmem:[#allocation2 + $0x28] sm:$0xff]
    %v2128 = vld [vmem:[#allocation2 + $0x30] sm:$0xff]
    %v2129 = vld [vmem:[#allocation2 + $0x38] sm:$0xff]
    %v2130 = vld [vmem:[#allocation2 + $0x40] sm:$0xff]
    %v2131 = vld [vmem:[#allocation2 + $0x48] sm:$0xff]
    %v2132 = vld [vmem:[#allocation2 + $0x50] sm:$0xff]
    %v2133 = vld [vmem:[#allocation2 + $0x58] sm:$0xff]
    %v2134 = vld [vmem:[#allocation2 + $0x60] sm:$0xff]
    %v2135 = vld [vmem:[#allocation2 + $0x68] sm:$0xff]
    %v2136 = vld [vmem:[#allocation2 + $0x70] sm:$0xff]
    %v2137 = vld [vmem:[#allocation2 + $0x78] sm:$0xff]
    %v2138 = vpack.c.bf16 %v2123, %v2122
    %v2139 = vpack.c.bf16 %v2125, %v2124
    %v2140 = vpack.c.bf16 %v2127, %v2126
    %v2141 = vpack.c.bf16 %v2129, %v2128
    %v2142 = vpack.c.bf16 %v2131, %v2130
    %v2143 = vpack.c.bf16 %v2133, %v2132
    %v2144 = vpack.c.bf16 %v2135, %v2134
    %v2145 = vpack.c.bf16 %v2137, %v2136
    %v2146 = vld [vmem:[#allocation7] sm:$0xf]
    %v2147 = vld [vmem:[#allocation7 + $0x4] sm:$0xf]
    %v2148 = vld [vmem:[#allocation7 + $0x8] sm:$0xf]
    %v2149 = vld [vmem:[#allocation7 + $0xc] sm:$0xf]
    %v2150 = vld [vmem:[#allocation7 + $0x10] sm:$0xf]
    %v2151 = vld [vmem:[#allocation7 + $0x14] sm:$0xf]
    %v2152 = vld [vmem:[#allocation7 + $0x18] sm:$0xf]
    %v2153 = vld [vmem:[#allocation7 + $0x1c] sm:$0xf]
    %v2154 = vld [vmem:[#allocation7 + $0x20] sm:$0xf]
    %v2155 = vld [vmem:[#allocation7 + $0x24] sm:$0xf]
    %v2156 = vld [vmem:[#allocation7 + $0x28] sm:$0xf]
    %v2157 = vld [vmem:[#allocation7 + $0x2c] sm:$0xf]
    %v2158 = vld [vmem:[#allocation7 + $0x30] sm:$0xf]
    %v2159 = vld [vmem:[#allocation7 + $0x34] sm:$0xf]
    %v2160 = vld [vmem:[#allocation7 + $0x38] sm:$0xf]
    %v2161 = vld [vmem:[#allocation7 + $0x3c] sm:$0xf]
    %v2162 = vld [vmem:[#allocation2 + $0x1] sm:$0xff]
    %v2163 = vld [vmem:[#allocation2 + $0x9] sm:$0xff]
    %v2164 = vld [vmem:[#allocation2 + $0x11] sm:$0xff]
    %v2165 = vld [vmem:[#allocation2 + $0x19] sm:$0xff]
    %v2166 = vld [vmem:[#allocation2 + $0x21] sm:$0xff]
    %v2167 = vld [vmem:[#allocation2 + $0x29] sm:$0xff]
    %v2168 = vld [vmem:[#allocation2 + $0x31] sm:$0xff]
    %v2169 = vld [vmem:[#allocation2 + $0x39] sm:$0xff]
    %v2170 = vld [vmem:[#allocation2 + $0x41] sm:$0xff]
    %v2171 = vld [vmem:[#allocation2 + $0x49] sm:$0xff]
    %v2172 = vld [vmem:[#allocation2 + $0x51] sm:$0xff]
    %v2173 = vld [vmem:[#allocation2 + $0x59] sm:$0xff]
    %v2174 = vld [vmem:[#allocation2 + $0x61] sm:$0xff]
    %v2175 = vld [vmem:[#allocation2 + $0x69] sm:$0xff]
    %v2176 = vld [vmem:[#allocation2 + $0x71] sm:$0xff]
    %v2177 = vld [vmem:[#allocation2 + $0x79] sm:$0xff]
    %v2178 = vpack.c.bf16 %v2163, %v2162
    %v2179 = vpack.c.bf16 %v2165, %v2164
    %v2180 = vpack.c.bf16 %v2167, %v2166
    %v2181 = vpack.c.bf16 %v2169, %v2168
    %v2182 = vpack.c.bf16 %v2171, %v2170
    %v2183 = vpack.c.bf16 %v2173, %v2172
    %v2184 = vpack.c.bf16 %v2175, %v2174
    %v2185 = vpack.c.bf16 %v2177, %v2176
    %s2186 = scalar_lea.vmem [#allocation7], 64
    %v2187 = vld [vmem:[%s2186] sm:$0xf]
    %v2188 = vld [vmem:[%s2186 + $0x4] sm:$0xf]
    %v2189 = vld [vmem:[%s2186 + $0x8] sm:$0xf]
    %v2190 = vld [vmem:[%s2186 + $0xc] sm:$0xf]
    %v2191 = vld [vmem:[%s2186 + $0x10] sm:$0xf]
    %v2192 = vld [vmem:[%s2186 + $0x14] sm:$0xf]
    %v2193 = vld [vmem:[%s2186 + $0x18] sm:$0xf]
    %v2194 = vld [vmem:[%s2186 + $0x1c] sm:$0xf]
    %v2195 = vld [vmem:[%s2186 + $0x20] sm:$0xf]
    %v2196 = vld [vmem:[%s2186 + $0x24] sm:$0xf]
    %v2197 = vld [vmem:[%s2186 + $0x28] sm:$0xf]
    %v2198 = vld [vmem:[%s2186 + $0x2c] sm:$0xf]
    %v2199 = vld [vmem:[%s2186 + $0x30] sm:$0xf]
    %v2200 = vld [vmem:[%s2186 + $0x34] sm:$0xf]
    %v2201 = vld [vmem:[%s2186 + $0x38] sm:$0xf]
    %v2202 = vld [vmem:[%s2186 + $0x3c] sm:$0xf]
    %v2219 = vunpack.c.l.b16 %v2187
    %v2220 = vunpack.c.l.b16 %v2188
    %v2221 = vunpack.c.l.b16 %v2189
    %v2222 = vunpack.c.l.b16 %v2190
    %v2223 = vunpack.c.l.b16 %v2191
    %v2224 = vunpack.c.l.b16 %v2192
    %v2225 = vunpack.c.l.b16 %v2193
    %v2226 = vunpack.c.l.b16 %v2194
    %v2227 = vunpack.c.l.b16 %v2195
    %v2228 = vunpack.c.l.b16 %v2196
    %v2229 = vunpack.c.l.b16 %v2197
    %v2230 = vunpack.c.l.b16 %v2198
    %v2231 = vunpack.c.l.b16 %v2199
    %v2232 = vunpack.c.l.b16 %v2200
    %v2233 = vunpack.c.l.b16 %v2201
    %v2234 = vunpack.c.l.b16 %v2202
    %v2235 = vpack.c.b16 %v2220, %v2219
    %v2236 = vpack.c.b16 %v2222, %v2221
    %v2237 = vpack.c.b16 %v2224, %v2223
    %v2238 = vpack.c.b16 %v2226, %v2225
    %v2239 = vpack.c.b16 %v2228, %v2227
    %v2240 = vpack.c.b16 %v2230, %v2229
    %v2241 = vpack.c.b16 %v2232, %v2231
    %v2242 = vpack.c.b16 %v2234, %v2233
    %2251 = vmatprep.subr.bf16.mxu0 0
    %2252 = vmatpush1.bf16.msra.mxu0 %v2235
    %2253 = vmatprep.subr.bf16.mxu0 0
    %2254 = vmatpush1.bf16.msra.mxu0 %v2236
    %2255 = vmatprep.subr.bf16.mxu0 0
    %2256 = vmatpush1.bf16.msra.mxu0 %v2237
    %2257 = vmatprep.subr.bf16.mxu0 0
    %2258 = vmatpush1.bf16.msra.mxu0 %v2238
    %2259 = vmatprep.subr.bf16.mxu0 0
    %2260 = vmatpush1.bf16.msra.mxu0 %v2239
    %2261 = vmatprep.subr.bf16.mxu0 0
    %2262 = vmatpush1.bf16.msra.mxu0 %v2240
    %2263 = vmatprep.subr.bf16.mxu0 0
    %2264 = vmatpush1.bf16.msra.mxu0 %v2241
    %2265 = vmatprep.subr.bf16.mxu0 0
    %2266 = vmatpush1.bf16.msra.mxu0 %v2242
    %2267 = vmatprep.subr.bf16.mxu0 0
    %2268 = vmatpush1.bf16.msra.mxu0 0
    %2269 = vmatprep.subr.bf16.mxu0 0
    %2270 = vmatpush1.bf16.msra.mxu0 0
    %2271 = vmatprep.subr.bf16.mxu0 0
    %2272 = vmatpush1.bf16.msra.mxu0 0
    %2273 = vmatprep.subr.bf16.mxu0 0
    %2274 = vmatpush1.bf16.msra.mxu0 0
    %2275 = vmatprep.subr.bf16.mxu0 0
    %2276 = vmatpush1.bf16.msra.mxu0 0
    %2277 = vmatprep.subr.bf16.mxu0 0
    %2278 = vmatpush1.bf16.msra.mxu0 0
    %2279 = vmatprep.subr.bf16.mxu0 0
    %2280 = vmatpush1.bf16.msra.mxu0 0
    %2281 = vmatprep.subr.bf16.mxu0 0
    %2282 = vmatpush1.bf16.msra.mxu0 0
    %2283 = vmatprep.mubr.bf16.mxu0 0
    %2284 = vmatmul.mubr.bf16.gmra.mrb[0].mxu0 %v2178
    %v2285 = vpop.f32.mrb[0].mxu0
    %v2286 = vadd.f32 0.0, %v2285
    %v2287 = vpop.f32.mrb[0].mxu0
    %v2288 = vpop.f32.mrb[0].mxu0
    %v2289 = vadd.f32 0.0, %v2288
    %v2290 = vpop.f32.mrb[0].mxu0
    %2291 = vmatprep.mubr.bf16.mxu0 0
    %2292 = vmatmul.mubr.bf16.gmra.mrb[0].mxu0 %v2179
    %v2293 = vpop.f32.mrb[0].mxu0
    %v2294 = vadd.f32 0.0, %v2293
    %v2295 = vpop.f32.mrb[0].mxu0
    %v2296 = vpop.f32.mrb[0].mxu0
    %v2297 = vadd.f32 0.0, %v2296
    %v2298 = vpop.f32.mrb[0].mxu0
    %2299 = vmatprep.mubr.bf16.mxu0 0
    %2300 = vmatmul.mubr.bf16.gmra.mrb[0].mxu0 %v2180
    %v2301 = vpop.f32.mrb[0].mxu0
    %v2302 = vadd.f32 0.0, %v2301
    %v2303 = vpop.f32.mrb[0].mxu0
    %v2304 = vpop.f32.mrb[0].mxu0
    %v2305 = vadd.f32 0.0, %v2304
    %v2306 = vpop.f32.mrb[0].mxu0
    %2307 = vmatprep.mubr.bf16.mxu0 0
    %2308 = vmatmul.mubr.bf16.gmra.mrb[0].mxu0 %v2181
    %v2309 = vpop.f32.mrb[0].mxu0
    %v2310 = vadd.f32 0.0, %v2309
    %v2311 = vpop.f32.mrb[0].mxu0
    %v2312 = vpop.f32.mrb[0].mxu0
    %v2313 = vadd.f32 0.0, %v2312
    %v2314 = vpop.f32.mrb[0].mxu0
    %2315 = vmatprep.mubr.bf16.mxu0 0
    %2316 = vmatmul.mubr.bf16.gmra.mrb[0].mxu0 %v2182
    %v2317 = vpop.f32.mrb[0].mxu0
    %v2318 = vadd.f32 0.0, %v2317
    %v2319 = vpop.f32.mrb[0].mxu0
    %v2320 = vpop.f32.mrb[0].mxu0
    %v2321 = vadd.f32 0.0, %v2320
    %v2322 = vpop.f32.mrb[0].mxu0
    %2323 = vmatprep.mubr.bf16.mxu0 0
    %2324 = vmatmul.mubr.bf16.gmra.mrb[0].mxu0 %v2183
    %v2325 = vpop.f32.mrb[0].mxu0
    %v2326 = vadd.f32 0.0, %v2325
    %v2327 = vpop.f32.mrb[0].mxu0
    %v2328 = vpop.f32.mrb[0].mxu0
    %v2329 = vadd.f32 0.0, %v2328
    %v2330 = vpop.f32.mrb[0].mxu0
    %2331 = vmatprep.mubr.bf16.mxu0 0
    %2332 = vmatmul.mubr.bf16.gmra.mrb[0].mxu0 %v2184
    %v2333 = vpop.f32.mrb[0].mxu0
    %v2334 = vadd.f32 0.0, %v2333
    %v2335 = vpop.f32.mrb[0].mxu0
    %v2336 = vpop.f32.mrb[0].mxu0
    %v2337 = vadd.f32 0.0, %v2336
    %v2338 = vpop.f32.mrb[0].mxu0
    %2339 = vmatprep.mubr.bf16.mxu0 0
    %2340 = vmatmul.mubr.bf16.gmra.mrb[0].mxu0 %v2185
    %v2341 = vpop.f32.mrb[0].mxu0
    %v2342 = vadd.f32 0.0, %v2341
    %v2343 = vpop.f32.mrb[0].mxu0
    %v2344 = vpop.f32.mrb[0].mxu0
    %v2345 = vadd.f32 0.0, %v2344
    %v2346 = vpop.f32.mrb[0].mxu0
    %2347 = vdwg.mxu0
    %v2364 = vunpack.c.l.b16 %v2146
    %v2365 = vunpack.c.l.b16 %v2147
    %v2366 = vunpack.c.l.b16 %v2148
    %v2367 = vunpack.c.l.b16 %v2149
    %v2368 = vunpack.c.l.b16 %v2150
    %v2369 = vunpack.c.l.b16 %v2151
    %v2370 = vunpack.c.l.b16 %v2152
    %v2371 = vunpack.c.l.b16 %v2153
    %v2372 = vunpack.c.l.b16 %v2154
    %v2373 = vunpack.c.l.b16 %v2155
    %v2374 = vunpack.c.l.b16 %v2156
    %v2375 = vunpack.c.l.b16 %v2157
    %v2376 = vunpack.c.l.b16 %v2158
    %v2377 = vunpack.c.l.b16 %v2159
    %v2378 = vunpack.c.l.b16 %v2160
    %v2379 = vunpack.c.l.b16 %v2161
    %v2380 = vpack.c.b16 %v2365, %v2364
    %v2381 = vpack.c.b16 %v2367, %v2366
    %v2382 = vpack.c.b16 %v2369, %v2368
    %v2383 = vpack.c.b16 %v2371, %v2370
    %v2384 = vpack.c.b16 %v2373, %v2372
    %v2385 = vpack.c.b16 %v2375, %v2374
    %v2386 = vpack.c.b16 %v2377, %v2376
    %v2387 = vpack.c.b16 %v2379, %v2378
    %2396 = vmatprep.subr.bf16.mxu0 0
    %2397 = vmatpush1.bf16.msra.mxu0 %v2380
    %2398 = vmatprep.subr.bf16.mxu0 0
    %2399 = vmatpush1.bf16.msra.mxu0 %v2381
    %2400 = vmatprep.subr.bf16.mxu0 0
    %2401 = vmatpush1.bf16.msra.mxu0 %v2382
    %2402 = vmatprep.subr.bf16.mxu0 0
    %2403 = vmatpush1.bf16.msra.mxu0 %v2383
    %2404 = vmatprep.subr.bf16.mxu0 0
    %2405 = vmatpush1.bf16.msra.mxu0 %v2384
    %2406 = vmatprep.subr.bf16.mxu0 0
    %2407 = vmatpush1.bf16.msra.mxu0 %v2385
    %2408 = vmatprep.subr.bf16.mxu0 0
    %2409 = vmatpush1.bf16.msra.mxu0 %v2386
    %2410 = vmatprep.subr.bf16.mxu0 0
    %2411 = vmatpush1.bf16.msra.mxu0 %v2387
    %2412 = vmatprep.subr.bf16.mxu0 0
    %2413 = vmatpush1.bf16.msra.mxu0 0
    %2414 = vmatprep.subr.bf16.mxu0 0
    %2415 = vmatpush1.bf16.msra.mxu0 0
    %2416 = vmatprep.subr.bf16.mxu0 0
    %2417 = vmatpush1.bf16.msra.mxu0 0
    %2418 = vmatprep.subr.bf16.mxu0 0
    %2419 = vmatpush1.bf16.msra.mxu0 0
    %2420 = vmatprep.subr.bf16.mxu0 0
    %2421 = vmatpush1.bf16.msra.mxu0 0
    %2422 = vmatprep.subr.bf16.mxu0 0
    %2423 = vmatpush1.bf16.msra.mxu0 0
    %2424 = vmatprep.subr.bf16.mxu0 0
    %2425 = vmatpush1.bf16.msra.mxu0 0
    %2426 = vmatprep.subr.bf16.mxu0 0
    %2427 = vmatpush1.bf16.msra.mxu0 0
    %2428 = vmatprep.mubr.bf16.mxu0 0
    %2429 = vmatmul.mubr.bf16.gmra.mrb[0].mxu0 %v2138
    %v2430 = vpop.f32.mrb[0].mxu0
    %v2431 = vadd.f32 %v2286, %v2430
    %v2432 = vpop.f32.mrb[0].mxu0
    %v2433 = vpop.f32.mrb[0].mxu0
    %v2434 = vadd.f32 %v2289, %v2433
    %v2435 = vpop.f32.mrb[0].mxu0
    %2436 = vmatprep.mubr.bf16.mxu0 0
    %2437 = vmatmul.mubr.bf16.gmra.mrb[0].mxu0 %v2139
    %v2438 = vpop.f32.mrb[0].mxu0
    %v2439 = vadd.f32 %v2294, %v2438
    %v2440 = vpop.f32.mrb[0].mxu0
    %v2441 = vpop.f32.mrb[0].mxu0
    %v2442 = vadd.f32 %v2297, %v2441
    %v2443 = vpop.f32.mrb[0].mxu0
    %2444 = vmatprep.mubr.bf16.mxu0 0
    %2445 = vmatmul.mubr.bf16.gmra.mrb[0].mxu0 %v2140
    %v2446 = vpop.f32.mrb[0].mxu0
    %v2447 = vadd.f32 %v2302, %v2446
    %v2448 = vpop.f32.mrb[0].mxu0
    %v2449 = vpop.f32.mrb[0].mxu0
    %v2450 = vadd.f32 %v2305, %v2449
    %v2451 = vpop.f32.mrb[0].mxu0
    %2452 = vmatprep.mubr.bf16.mxu0 0
    %2453 = vmatmul.mubr.bf16.gmra.mrb[0].mxu0 %v2141
    %v2454 = vpop.f32.mrb[0].mxu0
    %v2455 = vadd.f32 %v2310, %v2454
    %v2456 = vpop.f32.mrb[0].mxu0
    %v2457 = vpop.f32.mrb[0].mxu0
    %v2458 = vadd.f32 %v2313, %v2457
    %v2459 = vpop.f32.mrb[0].mxu0
    %2460 = vmatprep.mubr.bf16.mxu0 0
    %2461 = vmatmul.mubr.bf16.gmra.mrb[0].mxu0 %v2142
    %v2462 = vpop.f32.mrb[0].mxu0
    %v2463 = vadd.f32 %v2318, %v2462
    %v2464 = vpop.f32.mrb[0].mxu0
    %v2465 = vpop.f32.mrb[0].mxu0
    %v2466 = vadd.f32 %v2321, %v2465
    %v2467 = vpop.f32.mrb[0].mxu0
    %2468 = vmatprep.mubr.bf16.mxu0 0
    %2469 = vmatmul.mubr.bf16.gmra.mrb[0].mxu0 %v2143
    %v2470 = vpop.f32.mrb[0].mxu0
    %v2471 = vadd.f32 %v2326, %v2470
    %v2472 = vpop.f32.mrb[0].mxu0
    %v2473 = vpop.f32.mrb[0].mxu0
    %v2474 = vadd.f32 %v2329, %v2473
    %v2475 = vpop.f32.mrb[0].mxu0
    %2476 = vmatprep.mubr.bf16.mxu0 0
    %2477 = vmatmul.mubr.bf16.gmra.mrb[0].mxu0 %v2144
    %v2478 = vpop.f32.mrb[0].mxu0
    %v2479 = vadd.f32 %v2334, %v2478
    %v2480 = vpop.f32.mrb[0].mxu0
    %v2481 = vpop.f32.mrb[0].mxu0
    %v2482 = vadd.f32 %v2337, %v2481
    %v2483 = vpop.f32.mrb[0].mxu0
    %2484 = vmatprep.mubr.bf16.mxu0 0
    %2485 = vmatmul.mubr.bf16.gmra.mrb[0].mxu0 %v2145
    %v2486 = vpop.f32.mrb[0].mxu0
    %v2487 = vadd.f32 %v2342, %v2486
    %v2488 = vpop.f32.mrb[0].mxu0
    %v2489 = vpop.f32.mrb[0].mxu0
    %v2490 = vadd.f32 %v2345, %v2489
    %v2491 = vpop.f32.mrb[0].mxu0
    %2492 = vdwg.mxu0
    %v2493 = vld [vmem:[#allocation2 + $0x2] sm:$0xff]
    %v2494 = vld [vmem:[#allocation2 + $0xa] sm:$0xff]
    %v2495 = vld [vmem:[#allocation2 + $0x12] sm:$0xff]
    %v2496 = vld [vmem:[#allocation2 + $0x1a] sm:$0xff]
    %v2497 = vld [vmem:[#allocation2 + $0x22] sm:$0xff]
    %v2498 = vld [vmem:[#allocation2 + $0x2a] sm:$0xff]
    %v2499 = vld [vmem:[#allocation2 + $0x32] sm:$0xff]
    %v2500 = vld [vmem:[#allocation2 + $0x3a] sm:$0xff]
    %v2501 = vld [vmem:[#allocation2 + $0x42] sm:$0xff]
    %v2502 = vld [vmem:[#allocation2 + $0x4a] sm:$0xff]
    %v2503 = vld [vmem:[#allocation2 + $0x52] sm:$0xff]
    %v2504 = vld [vmem:[#allocation2 + $0x5a] sm:$0xff]
    %v2505 = vld [vmem:[#allocation2 + $0x62] sm:$0xff]
    %v2506 = vld [vmem:[#allocation2 + $0x6a] sm:$0xff]
    %v2507 = vld [vmem:[#allocation2 + $0x72] sm:$0xff]
    %v2508 = vld [vmem:[#allocation2 + $0x7a] sm:$0xff]
    %v2509 = vpack.c.bf16 %v2494, %v2493
    %v2510 = vpack.c.bf16 %v2496, %v2495
    %v2511 = vpack.c.bf16 %v2498, %v2497
    %v2512 = vpack.c.bf16 %v2500, %v2499
    %v2513 = vpack.c.bf16 %v2502, %v2501
    %v2514 = vpack.c.bf16 %v2504, %v2503
    %v2515 = vpack.c.bf16 %v2506, %v2505
    %v2516 = vpack.c.bf16 %v2508, %v2507
    %s2517 = scalar_lea.vmem [#allocation7], 128
    %v2518 = vld [vmem:[%s2517] sm:$0xf]
    %v2519 = vld [vmem:[%s2517 + $0x4] sm:$0xf]
    %v2520 = vld [vmem:[%s2517 + $0x8] sm:$0xf]
    %v2521 = vld [vmem:[%s2517 + $0xc] sm:$0xf]
    %v2522 = vld [vmem:[%s2517 + $0x10] sm:$0xf]
    %v2523 = vld [vmem:[%s2517 + $0x14] sm:$0xf]
    %v2524 = vld [vmem:[%s2517 + $0x18] sm:$0xf]
    %v2525 = vld [vmem:[%s2517 + $0x1c] sm:$0xf]
    %v2526 = vld [vmem:[%s2517 + $0x20] sm:$0xf]
    %v2527 = vld [vmem:[%s2517 + $0x24] sm:$0xf]
    %v2528 = vld [vmem:[%s2517 + $0x28] sm:$0xf]
    %v2529 = vld [vmem:[%s2517 + $0x2c] sm:$0xf]
    %v2530 = vld [vmem:[%s2517 + $0x30] sm:$0xf]
    %v2531 = vld [vmem:[%s2517 + $0x34] sm:$0xf]
    %v2532 = vld [vmem:[%s2517 + $0x38] sm:$0xf]
    %v2533 = vld [vmem:[%s2517 + $0x3c] sm:$0xf]
    %v2550 = vunpack.c.l.b16 %v2518
    %v2551 = vunpack.c.l.b16 %v2519
    %v2552 = vunpack.c.l.b16 %v2520
    %v2553 = vunpack.c.l.b16 %v2521
    %v2554 = vunpack.c.l.b16 %v2522
    %v2555 = vunpack.c.l.b16 %v2523
    %v2556 = vunpack.c.l.b16 %v2524
    %v2557 = vunpack.c.l.b16 %v2525
    %v2558 = vunpack.c.l.b16 %v2526
    %v2559 = vunpack.c.l.b16 %v2527
    %v2560 = vunpack.c.l.b16 %v2528
    %v2561 = vunpack.c.l.b16 %v2529
    %v2562 = vunpack.c.l.b16 %v2530
    %v2563 = vunpack.c.l.b16 %v2531
    %v2564 = vunpack.c.l.b16 %v2532
    %v2565 = vunpack.c.l.b16 %v2533
    %v2566 = vpack.c.b16 %v2551, %v2550
    %v2567 = vpack.c.b16 %v2553, %v2552
    %v2568 = vpack.c.b16 %v2555, %v2554
    %v2569 = vpack.c.b16 %v2557, %v2556
    %v2570 = vpack.c.b16 %v2559, %v2558
    %v2571 = vpack.c.b16 %v2561, %v2560
    %v2572 = vpack.c.b16 %v2563, %v2562
    %v2573 = vpack.c.b16 %v2565, %v2564
    %2582 = vmatprep.subr.bf16.mxu0 0
    %2583 = vmatpush1.bf16.msra.mxu0 %v2566
    %2584 = vmatprep.subr.bf16.mxu0 0
    %2585 = vmatpush1.bf16.msra.mxu0 %v2567
    %2586 = vmatprep.subr.bf16.mxu0 0
    %2587 = vmatpush1.bf16.msra.mxu0 %v2568
    %2588 = vmatprep.subr.bf16.mxu0 0
    %2589 = vmatpush1.bf16.msra.mxu0 %v2569
    %2590 = vmatprep.subr.bf16.mxu0 0
    %2591 = vmatpush1.bf16.msra.mxu0 %v2570
    %2592 = vmatprep.subr.bf16.mxu0 0
    %2593 = vmatpush1.bf16.msra.mxu0 %v2571
    %2594 = vmatprep.subr.bf16.mxu0 0
    %2595 = vmatpush1.bf16.msra.mxu0 %v2572
    %2596 = vmatprep.subr.bf16.mxu0 0
    %2597 = vmatpush1.bf16.msra.mxu0 %v2573
    %2598 = vmatprep.subr.bf16.mxu0 0
    %2599 = vmatpush1.bf16.msra.mxu0 0
    %2600 = vmatprep.subr.bf16.mxu0 0
    %2601 = vmatpush1.bf16.msra.mxu0 0
    %2602 = vmatprep.subr.bf16.mxu0 0
    %2603 = vmatpush1.bf16.msra.mxu0 0
    %2604 = vmatprep.subr.bf16.mxu0 0
    %2605 = vmatpush1.bf16.msra.mxu0 0
    %2606 = vmatprep.subr.bf16.mxu0 0
    %2607 = vmatpush1.bf16.msra.mxu0 0
    %2608 = vmatprep.subr.bf16.mxu0 0
    %2609 = vmatpush1.bf16.msra.mxu0 0
    %2610 = vmatprep.subr.bf16.mxu0 0
    %2611 = vmatpush1.bf16.msra.mxu0 0
    %2612 = vmatprep.subr.bf16.mxu0 0
    %2613 = vmatpush1.bf16.msra.mxu0 0
    %2614 = vmatprep.mubr.bf16.mxu0 0
    %2615 = vmatmul.mubr.bf16.gmra.mrb[0].mxu0 %v2509
    %v2616 = vpop.f32.mrb[0].mxu0
    %v2617 = vadd.f32 0.0, %v2616
    %v2618 = vpop.f32.mrb[0].mxu0
    %v2619 = vpop.f32.mrb[0].mxu0
    %v2620 = vadd.f32 0.0, %v2619
    %v2621 = vpop.f32.mrb[0].mxu0
    %2622 = vmatprep.mubr.bf16.mxu0 0
    %2623 = vmatmul.mubr.bf16.gmra.mrb[0].mxu0 %v2510
    %v2624 = vpop.f32.mrb[0].mxu0
    %v2625 = vadd.f32 0.0, %v2624
    %v2626 = vpop.f32.mrb[0].mxu0
    %v2627 = vpop.f32.mrb[0].mxu0
    %v2628 = vadd.f32 0.0, %v2627
    %v2629 = vpop.f32.mrb[0].mxu0
    %2630 = vmatprep.mubr.bf16.mxu0 0
    %2631 = vmatmul.mubr.bf16.gmra.mrb[0].mxu0 %v2511
    %v2632 = vpop.f32.mrb[0].mxu0
    %v2633 = vadd.f32 0.0, %v2632
    %v2634 = vpop.f32.mrb[0].mxu0
    %v2635 = vpop.f32.mrb[0].mxu0
    %v2636 = vadd.f32 0.0, %v2635
    %v2637 = vpop.f32.mrb[0].mxu0
    %2638 = vmatprep.mubr.bf16.mxu0 0
    %2639 = vmatmul.mubr.bf16.gmra.mrb[0].mxu0 %v2512
    %v2640 = vpop.f32.mrb[0].mxu0
    %v2641 = vadd.f32 0.0, %v2640
    %v2642 = vpop.f32.mrb[0].mxu0
    %v2643 = vpop.f32.mrb[0].mxu0
    %v2644 = vadd.f32 0.0, %v2643
    %v2645 = vpop.f32.mrb[0].mxu0
    %2646 = vmatprep.mubr.bf16.mxu0 0
    %2647 = vmatmul.mubr.bf16.gmra.mrb[0].mxu0 %v2513
    %v2648 = vpop.f32.mrb[0].mxu0
    %v2649 = vadd.f32 0.0, %v2648
    %v2650 = vpop.f32.mrb[0].mxu0
    %v2651 = vpop.f32.mrb[0].mxu0
    %v2652 = vadd.f32 0.0, %v2651
    %v2653 = vpop.f32.mrb[0].mxu0
    %2654 = vmatprep.mubr.bf16.mxu0 0
    %2655 = vmatmul.mubr.bf16.gmra.mrb[0].mxu0 %v2514
    %v2656 = vpop.f32.mrb[0].mxu0
    %v2657 = vadd.f32 0.0, %v2656
    %v2658 = vpop.f32.mrb[0].mxu0
    %v2659 = vpop.f32.mrb[0].mxu0
    %v2660 = vadd.f32 0.0, %v2659
    %v2661 = vpop.f32.mrb[0].mxu0
    %2662 = vmatprep.mubr.bf16.mxu0 0
    %2663 = vmatmul.mubr.bf16.gmra.mrb[0].mxu0 %v2515
    %v2664 = vpop.f32.mrb[0].mxu0
    %v2665 = vadd.f32 0.0, %v2664
    %v2666 = vpop.f32.mrb[0].mxu0
    %v2667 = vpop.f32.mrb[0].mxu0
    %v2668 = vadd.f32 0.0, %v2667
    %v2669 = vpop.f32.mrb[0].mxu0
    %2670 = vmatprep.mubr.bf16.mxu0 0
    %2671 = vmatmul.mubr.bf16.gmra.mrb[0].mxu0 %v2516
    %v2672 = vpop.f32.mrb[0].mxu0
    %v2673 = vadd.f32 0.0, %v2672
    %v2674 = vpop.f32.mrb[0].mxu0
    %v2675 = vpop.f32.mrb[0].mxu0
    %v2676 = vadd.f32 0.0, %v2675
    %v2677 = vpop.f32.mrb[0].mxu0
    %2678 = vdwg.mxu0
    %v2679 = vadd.f32 %v2431, %v2617
    %v2680 = vadd.f32 %v2434, %v2620
    %v2681 = vadd.f32 %v2439, %v2625
    %v2682 = vadd.f32 %v2442, %v2628
    %v2683 = vadd.f32 %v2447, %v2633
    %v2684 = vadd.f32 %v2450, %v2636
    %v2685 = vadd.f32 %v2455, %v2641
    %v2686 = vadd.f32 %v2458, %v2644
    %v2687 = vadd.f32 %v2463, %v2649
    %v2688 = vadd.f32 %v2466, %v2652
    %v2689 = vadd.f32 %v2471, %v2657
    %v2690 = vadd.f32 %v2474, %v2660
    %v2691 = vadd.f32 %v2479, %v2665
    %v2692 = vadd.f32 %v2482, %v2668
    %v2693 = vadd.f32 %v2487, %v2673
    %v2694 = vadd.f32 %v2490, %v2676
    %v2695 = vlaneseq
    %v2696 = vshrl.u32 %v2695, 7
    %v2697 = vsub.s32 0, %v2696
    %v2698 = vrot.slane %v2121, %v2697
    %v2699 = vadd.f32 %v2679, %v2698
    %v2700 = vadd.f32 %v2680, %v2698
    %v2701 = vadd.f32 %v2681, %v2698
    %v2702 = vadd.f32 %v2682, %v2698
    %v2703 = vadd.f32 %v2683, %v2698
    %v2704 = vadd.f32 %v2684, %v2698
    %v2705 = vadd.f32 %v2685, %v2698
    %v2706 = vadd.f32 %v2686, %v2698
    %v2707 = vadd.f32 %v2687, %v2698
    %v2708 = vadd.f32 %v2688, %v2698
    %v2709 = vadd.f32 %v2689, %v2698
    %v2710 = vadd.f32 %v2690, %v2698
    %v2711 = vadd.f32 %v2691, %v2698
    %v2712 = vadd.f32 %v2692, %v2698
    %v2713 = vadd.f32 %v2693, %v2698
    %v2714 = vadd.f32 %v2694, %v2698
    %v2715 = vmax.f32 %v2699, 0.0
    %v2716 = vmax.f32 %v2700, 0.0
    %v2717 = vmax.f32 %v2701, 0.0
    %v2718 = vmax.f32 %v2702, 0.0
    %v2719 = vmax.f32 %v2703, 0.0
    %v2720 = vmax.f32 %v2704, 0.0
    %v2721 = vmax.f32 %v2705, 0.0
    %v2722 = vmax.f32 %v2706, 0.0
    %v2723 = vmax.f32 %v2707, 0.0
    %v2724 = vmax.f32 %v2708, 0.0
    %v2725 = vmax.f32 %v2709, 0.0
    %v2726 = vmax.f32 %v2710, 0.0
    %v2727 = vmax.f32 %v2711, 0.0
    %v2728 = vmax.f32 %v2712, 0.0
    %v2729 = vmax.f32 %v2713, 0.0
    %v2730 = vmax.f32 %v2714, 0.0
    %vm2731 = vcmp.lt.s32.totalorder %v244, 14
    %vm2732 = vcmp.lt.s32.totalorder %v245, 14
    %vm2733 = vcmp.lt.s32.totalorder %v246, 14
    %vm2734 = vcmp.lt.s32.totalorder %v247, 14
    %vm2735 = vcmp.lt.s32.totalorder %v248, 14
    %vm2736 = vcmp.lt.s32.totalorder %v249, 14
    %vm2737 = vcmp.lt.s32.totalorder %v250, 14
    %vm2738 = vcmp.lt.s32.totalorder %v251, 14
    %vm2739 = vcmp.lt.s32.totalorder %v252, 14
    %vm2740 = vcmp.lt.s32.totalorder %v253, 14
    %vm2741 = vcmp.lt.s32.totalorder %v254, 14
    %vm2742 = vcmp.lt.s32.totalorder %v255, 14
    %vm2743 = vcmp.lt.s32.totalorder %v256, 14
    %vm2744 = vcmp.lt.s32.totalorder %v257, 14
    %vm2745 = vcmp.lt.s32.totalorder %v258, 14
    %vm2746 = vcmp.lt.s32.totalorder %v259, 14
    %v2747 = vsel %vm2731, 1, 0
    %v2748 = vsel %vm2732, 1, 0
    %v2749 = vsel %vm2733, 1, 0
    %v2750 = vsel %vm2734, 1, 0
    %v2751 = vsel %vm2735, 1, 0
    %v2752 = vsel %vm2736, 1, 0
    %v2753 = vsel %vm2737, 1, 0
    %v2754 = vsel %vm2738, 1, 0
    %v2755 = vsel %vm2739, 1, 0
    %v2756 = vsel %vm2740, 1, 0
    %v2757 = vsel %vm2741, 1, 0
    %v2758 = vsel %vm2742, 1, 0
    %v2759 = vsel %vm2743, 1, 0
    %v2760 = vsel %vm2744, 1, 0
    %v2761 = vsel %vm2745, 1, 0
    %v2762 = vsel %vm2746, 1, 0
    %vm2763 = vcmp.eq.s32.totalorder %v2747, 1
    %vm2764 = vcmp.eq.s32.totalorder %v2748, 1
    %vm2765 = vcmp.eq.s32.totalorder %v2749, 1
    %vm2766 = vcmp.eq.s32.totalorder %v2750, 1
    %vm2767 = vcmp.eq.s32.totalorder %v2751, 1
    %vm2768 = vcmp.eq.s32.totalorder %v2752, 1
    %vm2769 = vcmp.eq.s32.totalorder %v2753, 1
    %vm2770 = vcmp.eq.s32.totalorder %v2754, 1
    %vm2771 = vcmp.eq.s32.totalorder %v2755, 1
    %vm2772 = vcmp.eq.s32.totalorder %v2756, 1
    %vm2773 = vcmp.eq.s32.totalorder %v2757, 1
    %vm2774 = vcmp.eq.s32.totalorder %v2758, 1
    %vm2775 = vcmp.eq.s32.totalorder %v2759, 1
    %vm2776 = vcmp.eq.s32.totalorder %v2760, 1
    %vm2777 = vcmp.eq.s32.totalorder %v2761, 1
    %vm2778 = vcmp.eq.s32.totalorder %v2762, 1
    %v2779 = vsel %vm2763, %v2715, 0.0
    %v2780 = vsel %vm2764, %v2716, 0.0
    %v2781 = vsel %vm2765, %v2717, 0.0
    %v2782 = vsel %vm2766, %v2718, 0.0
    %v2783 = vsel %vm2767, %v2719, 0.0
    %v2784 = vsel %vm2768, %v2720, 0.0
    %v2785 = vsel %vm2769, %v2721, 0.0
    %v2786 = vsel %vm2770, %v2722, 0.0
    %v2787 = vsel %vm2771, %v2723, 0.0
    %v2788 = vsel %vm2772, %v2724, 0.0
    %v2789 = vsel %vm2773, %v2725, 0.0
    %v2790 = vsel %vm2774, %v2726, 0.0
    %v2791 = vsel %vm2775, %v2727, 0.0
    %v2792 = vsel %vm2776, %v2728, 0.0
    %v2793 = vsel %vm2777, %v2729, 0.0
    %v2794 = vsel %vm2778, %v2730, 0.0
    %v2795 = vld [vmem:[%s4 + $0x3] sm:$0x1]
    %v2796 = vlaneseq
    %v2797 = vshrl.u32 %v2796, 7
    %v2798 = vsub.s32 0, %v2797
    %v2799 = vrot.slane %v2795, %v2798
    %v2800 = vmul.f32 %v2779, %v2799
    %v2801 = vmul.f32 %v2780, %v2799
    %v2802 = vmul.f32 %v2781, %v2799
    %v2803 = vmul.f32 %v2782, %v2799
    %v2804 = vmul.f32 %v2783, %v2799
    %v2805 = vmul.f32 %v2784, %v2799
    %v2806 = vmul.f32 %v2785, %v2799
    %v2807 = vmul.f32 %v2786, %v2799
    %v2808 = vmul.f32 %v2787, %v2799
    %v2809 = vmul.f32 %v2788, %v2799
    %v2810 = vmul.f32 %v2789, %v2799
    %v2811 = vmul.f32 %v2790, %v2799
    %v2812 = vmul.f32 %v2791, %v2799
    %v2813 = vmul.f32 %v2792, %v2799
    %v2814 = vmul.f32 %v2793, %v2799
    %v2815 = vmul.f32 %v2794, %v2799
    %v2816 = vld [vmem:[%s4 + $0x4] sm:$0x1]
    %v2817 = vlaneseq
    %v2818 = vshrl.u32 %v2817, 7
    %v2819 = vsub.s32 0, %v2818
    %v2820 = vrot.slane %v2816, %v2819
    %v2821 = vadd.f32 %v2800, %v2820
    %v2822 = vadd.f32 %v2801, %v2820
    %v2823 = vadd.f32 %v2802, %v2820
    %v2824 = vadd.f32 %v2803, %v2820
    %v2825 = vadd.f32 %v2804, %v2820
    %v2826 = vadd.f32 %v2805, %v2820
    %v2827 = vadd.f32 %v2806, %v2820
    %v2828 = vadd.f32 %v2807, %v2820
    %v2829 = vadd.f32 %v2808, %v2820
    %v2830 = vadd.f32 %v2809, %v2820
    %v2831 = vadd.f32 %v2810, %v2820
    %v2832 = vadd.f32 %v2811, %v2820
    %v2833 = vadd.f32 %v2812, %v2820
    %v2834 = vadd.f32 %v2813, %v2820
    %v2835 = vadd.f32 %v2814, %v2820
    %v2836 = vadd.f32 %v2815, %v2820
    %v2837 = vmax.f32 %v2821, 0.0
    %v2838 = vmax.f32 %v2822, 0.0
    %v2839 = vmax.f32 %v2823, 0.0
    %v2840 = vmax.f32 %v2824, 0.0
    %v2841 = vmax.f32 %v2825, 0.0
    %v2842 = vmax.f32 %v2826, 0.0
    %v2843 = vmax.f32 %v2827, 0.0
    %v2844 = vmax.f32 %v2828, 0.0
    %v2845 = vmax.f32 %v2829, 0.0
    %v2846 = vmax.f32 %v2830, 0.0
    %v2847 = vmax.f32 %v2831, 0.0
    %v2848 = vmax.f32 %v2832, 0.0
    %v2849 = vmax.f32 %v2833, 0.0
    %v2850 = vmax.f32 %v2834, 0.0
    %v2851 = vmax.f32 %v2835, 0.0
    %v2852 = vmax.f32 %v2836, 0.0
    %2853 = vst [vmem:[#allocation9] sm:$0xff] %v2837
    %2854 = vst [vmem:[#allocation9 + $0x8] sm:$0xff] %v2838
    %2855 = vst [vmem:[#allocation9 + $0x10] sm:$0xff] %v2839
    %2856 = vst [vmem:[#allocation9 + $0x18] sm:$0xff] %v2840
    %2857 = vst [vmem:[#allocation9 + $0x20] sm:$0xff] %v2841
    %2858 = vst [vmem:[#allocation9 + $0x28] sm:$0xff] %v2842
    %2859 = vst [vmem:[#allocation9 + $0x30] sm:$0xff] %v2843
    %2860 = vst [vmem:[#allocation9 + $0x38] sm:$0xff] %v2844
    %2861 = vst [vmem:[#allocation9 + $0x40] sm:$0xff] %v2845
    %2862 = vst [vmem:[#allocation9 + $0x48] sm:$0xff] %v2846
    %2863 = vst [vmem:[#allocation9 + $0x50] sm:$0xff] %v2847
    %2864 = vst [vmem:[#allocation9 + $0x58] sm:$0xff] %v2848
    %2865 = vst [vmem:[#allocation9 + $0x60] sm:$0xff] %v2849
    %2866 = vst [vmem:[#allocation9 + $0x68] sm:$0xff] %v2850
    %2867 = vst [vmem:[#allocation9 + $0x70] sm:$0xff] %v2851
    %2868 = vst [vmem:[#allocation9 + $0x78] sm:$0xff] %v2852
    // Predicated region
    $region30: #{tpu_custom_call.1} parent=1 // pred_check
      _
    $region31: #{tpu_custom_call.1} parent=1 // pred_check_branch
      %2870 = sbr.rel (0) target = $region33
    $region32: #{tpu_custom_call.1} parent=1 // pred_region
      %s2872 = ssub.s32 2048, 2048
      %2873 = vsyncadd [#allocation6], %s2872
      %s2874 = sshll.u32 [#allocation9], 4
      %s2875 = int_to_ptr.vmem [resolvable:$true] %s2874
      %2880 = dma.vmem_to_hbm [thread:$0]  %s2875, 2048, %s5, [#allocation6], 128, 128, 8
    $region33: #{tpu_custom_call.1} parent=1 // pred_fallthru
      _
    // Predicated region
    $region34: #{tpu_custom_call.1} parent=1 // pred_check
      _
    $region35: #{tpu_custom_call.1} parent=1 // pred_check_branch
      %2882 = sbr.rel (0) target = $region37
    $region36: #{tpu_custom_call.1} parent=1 // pred_region
      %2883 = dma.done [#allocation6], 2048
    $region37: #{tpu_custom_call.1} parent=1 // pred_fallthru
      _
    %2884 = vsyncpa [#allocation5], 1
    %2885 = vsyncpa [#allocation8], 1
    %2886 = vsyncpa [#allocation6], 1

</llo_original>
